<compile_context>
chip_gen: v6e
topology: v6e:2x2x1
jax: 0.10.0
libtpu: 0.0.40
codegen_flags: <defaults>
</compile_context>

<pallas_src>
import functools

import jax
import jax.numpy as jnp
from jax import lax
from jax.experimental import pallas as pl
from jax.experimental.pallas import tpu as pltpu

EPS = 1e-5          # nn.LayerNorm default eps
LANE = 128          # lane width; all feature dims padded to a multiple of this


# --------------------------------- kernel ------------------------------------

def vit_kernel(patches_ref, base_ref, pw_ref,
               vecs_ref, b1_ref, wqkv_ref, wo_ref, w1_ref, w2_ref,
               hln_ref, hw_ref, hb_ref,
               o_ref, *, depth, heads, dh, d_valid, n_valid, np_pad, bt):
    f32, bf16 = jnp.float32, jnp.bfloat16
    d_pad = pw_ref.shape[1]          # padded model dim (Dp)
    qk_pad = wo_ref.shape[1]         # padded packed-heads width (QKp)
    m_rows = bt * np_pad             # flat row count fed to every matmul

    # ---- constant masks (trace-time) ----------------------------------------
    lane = lax.broadcasted_iota(jnp.int32, (1, d_pad), 1)
    feat_mask = (lane < d_valid).astype(f32)                 # valid model lanes
    inv_d = 1.0 / d_valid

    qlane = lax.broadcasted_iota(jnp.int32, (1, qk_pad), 1)
    head_masks = [((qlane >= h * dh) & (qlane < (h + 1) * dh)).astype(f32)
                  for h in range(heads)]                     # per-head lanes

    klane = lax.broadcasted_iota(jnp.int32, (1, np_pad), 1)
    key_bias = jnp.where(klane < n_valid, 0.0, -1e30).astype(f32)  # pad keys

    def layernorm(x, g, b):
        # Fully masked LayerNorm over the d_valid real features (robust even if
        # pad lanes were nonzero).  Pad lanes of the output are exactly b_pad=0.
        mean = jnp.sum(x * feat_mask, axis=-1, keepdims=True) * inv_d
        c = (x - mean) * feat_mask
        var = jnp.sum(c * c, axis=-1, keepdims=True) * inv_d
        return c * lax.rsqrt(var + EPS) * g + b

    def gelu(x):
        # PyTorch nn.GELU() (erf) via Abramowitz & Stegun 7.1.26 (|err|<1.5e-7);
        # the divide goes to the EUP via approx reciprocal.
        p = 0.3275911
        a1, a2, a3, a4, a5 = (0.254829592, -0.284496736, 1.421413741,
                              -1.453152027, 1.061405429)
        z = x * 0.7071067811865476
        az = jnp.abs(z)
        t = pl.reciprocal(1.0 + p * az, approx=True)
        poly = ((((a5 * t + a4) * t + a3) * t + a2) * t + a1) * t
        erf_az = 1.0 - poly * jnp.exp(-az * az)
        erf_z = jnp.where(z >= 0.0, erf_az, -erf_az)
        return 0.5 * x * (1.0 + erf_z)

    # ---- patch embedding (+ cls / pos / patch-bias folded into `base`) ------
    p2d = patches_ref[...].reshape(m_rows, patches_ref.shape[2])
    x = jnp.dot(p2d.astype(bf16), pw_ref[...], preferred_element_type=f32)
    if bt == 1:
        x = x + base_ref[0]
    else:
        x = x + jnp.concatenate([base_ref[0]] * bt, axis=0)

    for l in range(depth):
        vl = vecs_ref[l]      # (6, Dp): ln1_g, ln1_b, bo, ln2_g, ln2_b, b2

        # -------------------- attention (PreNorm + residual) -----------------
        xn = layernorm(x, vl[0:1], vl[1:2])
        qkv = jnp.dot(xn.astype(bf16), wqkv_ref[l],
                      preferred_element_type=f32)            # (M, 3*QKp)
        q_all = qkv[:, 0:qk_pad]          # softmax scale already folded in
        k_all = qkv[:, qk_pad:2 * qk_pad]
        v_all = qkv[:, 2 * qk_pad:3 * qk_pad]

        per_img = []
        for b in range(bt):                       # static; attention per image
            r0 = b * np_pad
            qb = q_all[r0:r0 + np_pad]
            kb = k_all[r0:r0 + np_pad].astype(bf16)
            vb = v_all[r0:r0 + np_pad]
            out_b = None
            for h in range(heads):
                qm = (qb * head_masks[h]).astype(bf16)
                dots = lax.dot_general(qm, kb, (((1,), (1,)), ((), ())),
                                       preferred_element_type=f32)  # (Np,Np)
                dots = dots + key_bias            # mask padded key tokens
                mx = jnp.max(dots, axis=-1, keepdims=True)
                pexp = jnp.exp(dots - mx)
                attn = pexp * pl.reciprocal(
                    jnp.sum(pexp, axis=-1, keepdims=True), approx=True)
                vm = (vb * head_masks[h]).astype(bf16)
                oh = jnp.dot(attn.astype(bf16), vm,
                             preferred_element_type=f32)     # (Np, QKp)
                out_b = oh if out_b is None else out_b + oh  # disjoint lanes
            per_img.append(out_b)
        packed = per_img[0] if bt == 1 else jnp.concatenate(per_img, axis=0)
        proj = jnp.dot(packed.astype(bf16), wo_ref[l],
                       preferred_element_type=f32)           # one wo matmul
        x = x + proj + vl[2:3]                               # residual + bo

        # ------------------ feed-forward (PreNorm + residual) ----------------
        xn2 = layernorm(x, vl[3:4], vl[4:5])
        h1 = jnp.dot(xn2.astype(bf16), w1_ref[l],
                     preferred_element_type=f32) + b1_ref[l]
        h1 = gelu(h1)
        x = x + jnp.dot(h1.astype(bf16), w2_ref[l],
                        preferred_element_type=f32) + vl[5:6]

    # ---- final LayerNorm + classification head (cls row per image) ----------
    hg = hln_ref[0:1]
    hbias = hln_ref[1:2]
    for b in range(bt):
        r0 = b * np_pad                       # row r0 is the cls token
        x8 = layernorm(x[r0:r0 + 8], hg, hbias)
        o_ref[b] = jnp.dot(x8.astype(bf16), hw_ref[...],
                           preferred_element_type=f32) + hb_ref[...]


# --------------------------------- wrapper -----------------------------------

def _round_up(x, m=LANE):
    return ((x + m - 1) // m) * m


def _round_up8(x):
    return ((x + 7) // 8) * 8


def to_patches(img, patch):
    # 'b c (h p1) (w p2) -> b (h w) (p1 p2 c)'
    b, c, hh, ww = img.shape
    h, w = hh // patch, ww // patch
    x = img.reshape(b, c, h, patch, w, patch)
    x = x.transpose(0, 2, 4, 3, 5, 1)           # b h w p1 p2 c
    return x.reshape(b, h * w, patch * patch * c)


def prepare_params(params, cfg):
    """Zero-pad / re-layout parameters into kernel-ready, lane-dense arrays."""
    D, H, dh = cfg["dim"], cfg["heads"], cfg["dim_head"]
    inner = H * dh
    mlp, ncls = cfg["mlp_dim"], cfg["num_classes"]
    patch_dim = cfg["channels"] * cfg["patch_size"] ** 2
    num_patches = (cfg["image_size"] // cfg["patch_size"]) ** 2
    N = num_patches + 1
    Np = max(_round_up8(N), 8)
    Dp, Pdp, HIDp, Cp, QKp = (_round_up(D), _round_up(patch_dim),
                              _round_up(mlp), _round_up(ncls), _round_up(inner))
    scale = dh ** -0.5
    bf16 = jnp.bfloat16

    def padr(x, tgt):
        return jnp.pad(x, [(0, t - s) for s, t in zip(x.shape, tgt)])

    def padv(v, width):                 # (1, d) -> (width,)
        return padr(v.reshape(-1), (width,))

    # base row-offsets: row 0 -> cls + pos[0]; rows 1..N-1 -> pos + patch bias;
    # padded token rows stay exactly zero.
    pos = params["pos_emb"][0, :N]                                   # (N, D)
    add0 = jnp.concatenate(
        [params["cls_token"][0],
         jnp.broadcast_to(params["patch_b"], (N - 1, D))], axis=0)
    base = padr((pos + add0)[None], (1, Np, Dp))

    Ls = params["layers"]

    def pack_qkv(wqkv):                 # (D, 3*inner) -> (Dp, 3*QKp), Q scaled
        wq = wqkv[:, :inner] * scale
        wk = wqkv[:, inner:2 * inner]
        wv = wqkv[:, 2 * inner:]
        return jnp.concatenate([padr(w, (Dp, QKp)) for w in (wq, wk, wv)],
                               axis=1)

    vecs = jnp.stack([jnp.stack([padv(l["ln1_g"], Dp), padv(l["ln1_b"], Dp),
                                 padv(l["bo"], Dp),
                                 padv(l["ln2_g"], Dp), padv(l["ln2_b"], Dp),
                                 padv(l["b2"], Dp)]) for l in Ls])   # (L,6,Dp)

    kp = dict(
        base=base,
        patch_w=padr(params["patch_w"], (Pdp, Dp)).astype(bf16),
        vecs=vecs,
        b1=jnp.stack([padr(l["b1"], (1, HIDp)) for l in Ls]),        # (L,1,HIDp)
        wqkv=jnp.stack([pack_qkv(l["wqkv"]) for l in Ls]).astype(bf16),
        wo=jnp.stack([padr(l["wo"], (QKp, Dp)) for l in Ls]).astype(bf16),
        w1=jnp.stack([padr(l["w1"], (Dp, HIDp)) for l in Ls]).astype(bf16),
        w2=jnp.stack([padr(l["w2"], (HIDp, Dp)) for l in Ls]).astype(bf16),
        head_ln=jnp.stack([padv(params["head_ln_g"], Dp),
                           padv(params["head_ln_b"], Dp)]),          # (2, Dp)
        head_w=padr(params["head_w"], (Dp, Cp)).astype(bf16),
        head_b=padr(params["head_b"], (1, Cp)),
    )
    meta = dict(N=N, Np=Np, Dp=Dp, Pdp=Pdp, HIDp=HIDp, Cp=Cp, QKp=QKp)
    return kp, meta


def _choose_bt(B):
    # Batch several images per grid step (fills MXU rows), but keep >= 2 grid
    # steps when possible so both v7x TensorCores stay busy.
    for bt in (8, 4, 2):
        if B % bt == 0 and B // bt >= 2:
            return bt
    return 1


def vit_pallas(patches_ext, kp, cfg, meta, bt=None):
    B, Np, Pdp = patches_ext.shape
    Cp = meta["Cp"]
    if bt is None:
        bt = _choose_bt(B)
    assert B % bt == 0
    grid = (B // bt,)

    kernel = functools.partial(
        vit_kernel, depth=cfg["depth"], heads=cfg["heads"], dh=cfg["dim_head"],
        d_valid=cfg["dim"], n_valid=meta["N"], np_pad=Np, bt=bt)

    args = (patches_ext, kp["base"], kp["patch_w"], kp["vecs"], kp["b1"],
            kp["wqkv"], kp["wo"], kp["w1"], kp["w2"],
            kp["head_ln"], kp["head_w"], kp["head_b"])

    def invariant(shape):               # grid-invariant (weights) block
        n = len(shape)
        return pl.BlockSpec(shape, lambda i, _n=n: (0,) * _n)

    in_specs = ([pl.BlockSpec((bt, Np, Pdp), lambda i: (i, 0, 0))]
                + [invariant(a.shape) for a in args[1:]])

    return pl.pallas_call(
        kernel,
        out_shape=jax.ShapeDtypeStruct((B, 8, Cp), jnp.float32),
        grid=grid,
        in_specs=in_specs,
        out_specs=pl.BlockSpec((bt, 8, Cp), lambda i: (i, 0, 0)),
        compiler_params=pltpu.CompilerParams(
            dimension_semantics=("parallel",)),
    )(*args)


def vit_forward(img, params, cfg, bt=None):
    kp, meta = prepare_params(params, cfg)
    patches = to_patches(img, cfg["patch_size"])      # (B, n_patches, patch_dim)
    B, npat, pdim = patches.shape
    Np, Pdp = meta["Np"], meta["Pdp"]
    # prepend an all-zero row (becomes the cls slot), pad tokens/lanes
    patches_ext = jnp.pad(patches,
                          ((0, 0), (1, Np - 1 - npat), (0, Pdp - pdim)))
    out = vit_pallas(patches_ext, kp, cfg, meta, bt=bt)   # (B, 8, Cp)
    return out[:, 0, :cfg["num_classes"]]


# ------------------------------ params / main ---------------------------------

def init_params(key, cfg):
    dim = cfg["dim"]
    inner = cfg["heads"] * cfg["dim_head"]
    patch_dim = cfg["channels"] * cfg["patch_size"] ** 2
    num_patches = (cfg["image_size"] // cfg["patch_size"]) ** 2
    ks = iter(jax.random.split(key, 64))

    def lin(kk, din, dout):
        return 0.02 * jax.random.normal(kk, (din, dout), jnp.float32)

    params = {
        "patch_w": lin(next(ks), patch_dim, dim),
        "patch_b": jnp.zeros((1, dim), jnp.float32),
        "pos_emb": jax.random.normal(next(ks), (1, num_patches + 1, dim),
                                     jnp.float32),
        "cls_token": jax.random.normal(next(ks), (1, 1, dim), jnp.float32),
        "head_ln_g": jnp.ones((1, dim), jnp.float32),
        "head_ln_b": jnp.zeros((1, dim), jnp.float32),
        "head_w": lin(next(ks), dim, cfg["num_classes"]),
        "head_b": jnp.zeros((1, cfg["num_classes"]), jnp.float32),
        "layers": [],
    }
    for _ in range(cfg["depth"]):
        params["layers"].append({
            "ln1_g": jnp.ones((1, dim), jnp.float32),
            "ln1_b": jnp.zeros((1, dim), jnp.float32),
            "wqkv": lin(next(ks), dim, 3 * inner),     # to_qkv (bias=False)
            "wo": lin(next(ks), inner, dim),
            "bo": jnp.zeros((1, dim), jnp.float32),
            "ln2_g": jnp.ones((1, dim), jnp.float32),
            "ln2_b": jnp.zeros((1, dim), jnp.float32),
            "w1": lin(next(ks), dim, cfg["mlp_dim"]),
            "b1": jnp.zeros((1, cfg["mlp_dim"]), jnp.float32),
            "w2": lin(next(ks), cfg["mlp_dim"], dim),
            "b2": jnp.zeros((1, dim), jnp.float32),
        })
    return params


if __name__ == "__main__":
    cfg = dict(image_size=16, patch_size=4, num_classes=10, dim=32, depth=2,
               heads=4, dim_head=8, mlp_dim=64, channels=4)

    key = jax.random.PRNGKey(0)
    k_img, k_par = jax.random.split(key)
    img = jax.random.normal(k_img, (2, cfg["channels"], cfg["image_size"],
                                    cfg["image_size"]), jnp.float32)
    params = init_params(k_par, cfg)

    fwd = jax.jit(lambda im, par: vit_forward(im, par, cfg))
    logits = fwd(img, params)
    logits = jax.block_until_ready(logits)
    assert logits.shape == (2, cfg["num_classes"])
    assert bool(jnp.all(jnp.isfinite(logits)))
    print("KERNEL_OK")
</pallas_src>

<mosaic_0001>
module attributes {stable_mosaic.version = 11 : i64} {
  func.func @vit_kernel(%arg0: i32, %arg1: memref<1x24x128xf32, #tpu.memory_space<vmem>>, %arg2: memref<1x24x128xf32, #tpu.memory_space<vmem>>, %arg3: memref<128x128xbf16, #tpu.memory_space<vmem>>, %arg4: memref<2x6x128xf32, #tpu.memory_space<vmem>>, %arg5: memref<2x1x128xf32, #tpu.memory_space<vmem>>, %arg6: memref<2x128x384xbf16, #tpu.memory_space<vmem>>, %arg7: memref<2x128x128xbf16, #tpu.memory_space<vmem>>, %arg8: memref<2x128x128xbf16, #tpu.memory_space<vmem>>, %arg9: memref<2x128x128xbf16, #tpu.memory_space<vmem>>, %arg10: memref<2x128xf32, #tpu.memory_space<vmem>>, %arg11: memref<128x128xbf16, #tpu.memory_space<vmem>>, %arg12: memref<1x128xf32, #tpu.memory_space<vmem>>, %arg13: memref<1x8x128xf32, #tpu.memory_space<vmem>>) attributes {dimension_semantics = [#tpu.dimension_semantics<parallel>], iteration_bounds = array<i64: 2>, scalar_prefetch = 0 : i64, scratch_operands = 0 : i64, tpu.core_type = #tpu.core_type<tc>, window_params = [{transform_indices = @transform_0, window_bounds = array<i64: 1, 24, 128>}, {pipeline_mode = #tpu.pipeline_mode<synchronous>, transform_indices = @transform_1, window_bounds = array<i64: 1, 24, 128>}, {pipeline_mode = #tpu.pipeline_mode<synchronous>, transform_indices = @transform_2, window_bounds = array<i64: 128, 128>}, {pipeline_mode = #tpu.pipeline_mode<synchronous>, transform_indices = @transform_3, window_bounds = array<i64: 2, 6, 128>}, {pipeline_mode = #tpu.pipeline_mode<synchronous>, transform_indices = @transform_4, window_bounds = array<i64: 2, 1, 128>}, {pipeline_mode = #tpu.pipeline_mode<synchronous>, transform_indices = @transform_5, window_bounds = array<i64: 2, 128, 384>}, {pipeline_mode = #tpu.pipeline_mode<synchronous>, transform_indices = @transform_6, window_bounds = array<i64: 2, 128, 128>}, {pipeline_mode = #tpu.pipeline_mode<synchronous>, transform_indices = @transform_7, window_bounds = array<i64: 2, 128, 128>}, {pipeline_mode = #tpu.pipeline_mode<synchronous>, transform_indices = @transform_8, window_bounds = array<i64: 2, 128, 128>}, {pipeline_mode = #tpu.pipeline_mode<synchronous>, transform_indices = @transform_9, window_bounds = array<i64: 2, 128>}, {pipeline_mode = #tpu.pipeline_mode<synchronous>, transform_indices = @transform_10, window_bounds = array<i64: 128, 128>}, {pipeline_mode = #tpu.pipeline_mode<synchronous>, transform_indices = @transform_11, window_bounds = array<i64: 1, 128>}, {transform_indices = @transform_12, window_bounds = array<i64: 1, 8, 128>}]} {
    %0 = tpu.iota {dimensions = array<i32: 1>} : vector<1x128xi32>
    %c32_i32 = arith.constant 32 : i32
    %1 = vector.broadcast %c32_i32 : i32 to vector<1x128xi32>
    %2 = arith.cmpi slt, %0, %1 : vector<1x128xi32>
    %3 = arith.extui %2 : vector<1x128xi1> to vector<1x128xi32>
    %4 = arith.sitofp %3 : vector<1x128xi32> to vector<1x128xf32>
    %5 = tpu.iota {dimensions = array<i32: 1>} : vector<1x128xi32>
    %c0_i32 = arith.constant 0 : i32
    %6 = vector.broadcast %c0_i32 : i32 to vector<1x128xi32>
    %7 = arith.cmpi sge, %5, %6 : vector<1x128xi32>
    %c8_i32 = arith.constant 8 : i32
    %8 = vector.broadcast %c8_i32 : i32 to vector<1x128xi32>
    %9 = arith.cmpi slt, %5, %8 : vector<1x128xi32>
    %10 = arith.andi %7, %9 : vector<1x128xi1>
    %11 = arith.extui %10 : vector<1x128xi1> to vector<1x128xi32>
    %12 = arith.sitofp %11 : vector<1x128xi32> to vector<1x128xf32>
    %c8_i32_0 = arith.constant 8 : i32
    %13 = vector.broadcast %c8_i32_0 : i32 to vector<1x128xi32>
    %14 = arith.cmpi sge, %5, %13 : vector<1x128xi32>
    %c16_i32 = arith.constant 16 : i32
    %15 = vector.broadcast %c16_i32 : i32 to vector<1x128xi32>
    %16 = arith.cmpi slt, %5, %15 : vector<1x128xi32>
    %17 = arith.andi %14, %16 : vector<1x128xi1>
    %18 = arith.extui %17 : vector<1x128xi1> to vector<1x128xi32>
    %19 = arith.sitofp %18 : vector<1x128xi32> to vector<1x128xf32>
    %c16_i32_1 = arith.constant 16 : i32
    %20 = vector.broadcast %c16_i32_1 : i32 to vector<1x128xi32>
    %21 = arith.cmpi sge, %5, %20 : vector<1x128xi32>
    %c24_i32 = arith.constant 24 : i32
    %22 = vector.broadcast %c24_i32 : i32 to vector<1x128xi32>
    %23 = arith.cmpi slt, %5, %22 : vector<1x128xi32>
    %24 = arith.andi %21, %23 : vector<1x128xi1>
    %25 = arith.extui %24 : vector<1x128xi1> to vector<1x128xi32>
    %26 = arith.sitofp %25 : vector<1x128xi32> to vector<1x128xf32>
    %c24_i32_2 = arith.constant 24 : i32
    %27 = vector.broadcast %c24_i32_2 : i32 to vector<1x128xi32>
    %28 = arith.cmpi sge, %5, %27 : vector<1x128xi32>
    %c32_i32_3 = arith.constant 32 : i32
    %29 = vector.broadcast %c32_i32_3 : i32 to vector<1x128xi32>
    %30 = arith.cmpi slt, %5, %29 : vector<1x128xi32>
    %31 = arith.andi %28, %30 : vector<1x128xi1>
    %32 = arith.extui %31 : vector<1x128xi1> to vector<1x128xi32>
    %33 = arith.sitofp %32 : vector<1x128xi32> to vector<1x128xf32>
    %34 = tpu.iota {dimensions = array<i32: 1>} : vector<1x24xi32>
    %c17_i32 = arith.constant 17 : i32
    %35 = vector.broadcast %c17_i32 : i32 to vector<1x24xi32>
    %36 = arith.cmpi slt, %34, %35 : vector<1x24xi32>
    %cst = arith.constant 0.000000e+00 : f32
    %cst_4 = arith.constant -1.000000e+30 : f32
    %37 = vector.broadcast %cst : f32 to vector<1x24xf32>
    %38 = vector.broadcast %cst_4 : f32 to vector<1x24xf32>
    %39 = arith.select %36, %37, %38 : vector<1x24xi1>, vector<1x24xf32>
    %c0 = arith.constant 0 : index
    %c0_5 = arith.constant 0 : index
    %c0_6 = arith.constant 0 : index
    %40 = vector.load %arg1[%c0, %c0_5, %c0_6] : memref<1x24x128xf32, #tpu.memory_space<vmem>>, vector<1x24x128xf32>
    %41 = vector.shape_cast %40 : vector<1x24x128xf32> to vector<24x128xf32>
    %42 = arith.truncf %41 : vector<24x128xf32> to vector<24x128xbf16>
    %c0_7 = arith.constant 0 : index
    %c0_8 = arith.constant 0 : index
    %43 = vector.load %arg3[%c0_7, %c0_8] : memref<128x128xbf16, #tpu.memory_space<vmem>>, vector<128x128xbf16>
    %cst_9 = arith.constant dense<0.000000e+00> : vector<24x128xf32>
    %44 = tpu.matmul %42, %43, %cst_9 {dimension_numbers = #tpu.dot_dimension_numbers<[1], [0], [0], [1], [0, 0, 1, 1], [], []>} : vector<24x128xbf16>, vector<128x128xbf16>, vector<24x128xf32> -> vector<24x128xf32>
    %c0_10 = arith.constant 0 : index
    %c0_11 = arith.constant 0 : index
    %c0_12 = arith.constant 0 : index
    %45 = vector.load %arg2[%c0_10, %c0_11, %c0_12] : memref<1x24x128xf32, #tpu.memory_space<vmem>>, vector<1x24x128xf32>
    %46 = vector.shape_cast %45 : vector<1x24x128xf32> to vector<24x128xf32>
    %47 = arith.addf %44, %46 : vector<24x128xf32>
    %c0_13 = arith.constant 0 : index
    %c0_14 = arith.constant 0 : index
    %c0_15 = arith.constant 0 : index
    %48 = vector.load %arg4[%c0_13, %c0_14, %c0_15] : memref<2x6x128xf32, #tpu.memory_space<vmem>>, vector<1x6x128xf32>
    %49 = vector.shape_cast %48 : vector<1x6x128xf32> to vector<6x128xf32>
    %50 = vector.extract_strided_slice %49 {offsets = [0, 0], sizes = [1, 128], strides = [1, 1]} : vector<6x128xf32> to vector<1x128xf32>
    %51 = vector.extract_strided_slice %49 {offsets = [1, 0], sizes = [1, 128], strides = [1, 1]} : vector<6x128xf32> to vector<1x128xf32>
    %52 = vector.broadcast %4 : vector<1x128xf32> to vector<24x128xf32>
    %53 = arith.mulf %47, %52 : vector<24x128xf32>
    %cst_16 = arith.constant dense<0.000000e+00> : vector<24xf32>
    %54 = vector.multi_reduction <add>, %53, %cst_16 [1] : vector<24x128xf32> to vector<24xf32>
    %55 = vector.shape_cast %54 : vector<24xf32> to vector<24x1xf32>
    %cst_17 = arith.constant 3.125000e-02 : f32
    %56 = vector.broadcast %cst_17 : f32 to vector<24x1xf32>
    %57 = arith.mulf %55, %56 : vector<24x1xf32>
    %58 = vector.broadcast %57 : vector<24x1xf32> to vector<24x128xf32>
    %59 = arith.subf %47, %58 : vector<24x128xf32>
    %60 = vector.broadcast %4 : vector<1x128xf32> to vector<24x128xf32>
    %61 = arith.mulf %59, %60 : vector<24x128xf32>
    %62 = arith.mulf %61, %61 : vector<24x128xf32>
    %cst_18 = arith.constant dense<0.000000e+00> : vector<24xf32>
    %63 = vector.multi_reduction <add>, %62, %cst_18 [1] : vector<24x128xf32> to vector<24xf32>
    %64 = vector.shape_cast %63 : vector<24xf32> to vector<24x1xf32>
    %cst_19 = arith.constant 3.125000e-02 : f32
    %65 = vector.broadcast %cst_19 : f32 to vector<24x1xf32>
    %66 = arith.mulf %64, %65 : vector<24x1xf32>
    %cst_20 = arith.constant 9.99999974E-6 : f32
    %67 = vector.broadcast %cst_20 : f32 to vector<24x1xf32>
    %68 = arith.addf %66, %67 : vector<24x1xf32>
    %69 = math.rsqrt %68 : vector<24x1xf32>
    %70 = vector.broadcast %69 : vector<24x1xf32> to vector<24x128xf32>
    %71 = arith.mulf %61, %70 : vector<24x128xf32>
    %72 = vector.broadcast %50 : vector<1x128xf32> to vector<24x128xf32>
    %73 = arith.mulf %71, %72 : vector<24x128xf32>
    %74 = vector.broadcast %51 : vector<1x128xf32> to vector<24x128xf32>
    %75 = arith.addf %73, %74 : vector<24x128xf32>
    %76 = arith.truncf %75 : vector<24x128xf32> to vector<24x128xbf16>
    %c0_21 = arith.constant 0 : index
    %c0_22 = arith.constant 0 : index
    %c0_23 = arith.constant 0 : index
    %77 = vector.load %arg6[%c0_21, %c0_22, %c0_23] : memref<2x128x384xbf16, #tpu.memory_space<vmem>>, vector<1x128x384xbf16>
    %78 = vector.shape_cast %77 : vector<1x128x384xbf16> to vector<128x384xbf16>
    %cst_24 = arith.constant dense<0.000000e+00> : vector<24x384xf32>
    %79 = tpu.matmul %76, %78, %cst_24 {dimension_numbers = #tpu.dot_dimension_numbers<[1], [0], [0], [1], [0, 0, 1, 1], [], []>} : vector<24x128xbf16>, vector<128x384xbf16>, vector<24x384xf32> -> vector<24x384xf32>
    %80 = vector.extract_strided_slice %79 {offsets = [0, 0], sizes = [24, 128], strides = [1, 1]} : vector<24x384xf32> to vector<24x128xf32>
    %81 = vector.extract_strided_slice %79 {offsets = [0, 128], sizes = [24, 128], strides = [1, 1]} : vector<24x384xf32> to vector<24x128xf32>
    %82 = vector.extract_strided_slice %79 {offsets = [0, 256], sizes = [24, 128], strides = [1, 1]} : vector<24x384xf32> to vector<24x128xf32>
    %83 = arith.truncf %81 : vector<24x128xf32> to vector<24x128xbf16>
    %84 = vector.broadcast %12 : vector<1x128xf32> to vector<24x128xf32>
    %85 = arith.mulf %80, %84 : vector<24x128xf32>
    %86 = arith.truncf %85 : vector<24x128xf32> to vector<24x128xbf16>
    %cst_25 = arith.constant dense<0.000000e+00> : vector<24x24xf32>
    %87 = tpu.matmul %86, %83, %cst_25 {dimension_numbers = #tpu.dot_dimension_numbers<[1], [1], [0], [0], [0, 0, 1, 0], [], []>} : vector<24x128xbf16>, vector<24x128xbf16>, vector<24x24xf32> -> vector<24x24xf32>
    %88 = vector.broadcast %39 : vector<1x24xf32> to vector<24x24xf32>
    %89 = arith.addf %87, %88 : vector<24x24xf32>
    %cst_26 = arith.constant dense<0xFF800000> : vector<24xf32>
    %90 = vector.multi_reduction <maximumf>, %89, %cst_26 [1] : vector<24x24xf32> to vector<24xf32>
    %91 = vector.shape_cast %90 : vector<24xf32> to vector<24x1xf32>
    %92 = vector.broadcast %91 : vector<24x1xf32> to vector<24x24xf32>
    %93 = arith.subf %89, %92 : vector<24x24xf32>
    %94 = math.exp %93 : vector<24x24xf32>
    %cst_27 = arith.constant dense<0.000000e+00> : vector<24xf32>
    %95 = vector.multi_reduction <add>, %94, %cst_27 [1] : vector<24x24xf32> to vector<24xf32>
    %96 = vector.shape_cast %95 : vector<24xf32> to vector<24x1xf32>
    %97 = tpu.reciprocal %96 {approx = true} : vector<24x1xf32> -> vector<24x1xf32>
    %98 = vector.broadcast %97 : vector<24x1xf32> to vector<24x24xf32>
    %99 = arith.mulf %94, %98 : vector<24x24xf32>
    %100 = vector.broadcast %12 : vector<1x128xf32> to vector<24x128xf32>
    %101 = arith.mulf %82, %100 : vector<24x128xf32>
    %102 = arith.truncf %101 : vector<24x128xf32> to vector<24x128xbf16>
    %103 = arith.truncf %99 : vector<24x24xf32> to vector<24x24xbf16>
    %cst_28 = arith.constant dense<0.000000e+00> : vector<24x128xf32>
    %104 = tpu.matmul %103, %102, %cst_28 {dimension_numbers = #tpu.dot_dimension_numbers<[1], [0], [0], [1], [0, 0, 1, 1], [], []>} : vector<24x24xbf16>, vector<24x128xbf16>, vector<24x128xf32> -> vector<24x128xf32>
    %105 = vector.broadcast %19 : vector<1x128xf32> to vector<24x128xf32>
    %106 = arith.mulf %80, %105 : vector<24x128xf32>
    %107 = arith.truncf %106 : vector<24x128xf32> to vector<24x128xbf16>
    %cst_29 = arith.constant dense<0.000000e+00> : vector<24x24xf32>
    %108 = tpu.matmul %107, %83, %cst_29 {dimension_numbers = #tpu.dot_dimension_numbers<[1], [1], [0], [0], [0, 0, 1, 0], [], []>} : vector<24x128xbf16>, vector<24x128xbf16>, vector<24x24xf32> -> vector<24x24xf32>
    %109 = vector.broadcast %39 : vector<1x24xf32> to vector<24x24xf32>
    %110 = arith.addf %108, %109 : vector<24x24xf32>
    %cst_30 = arith.constant dense<0xFF800000> : vector<24xf32>
    %111 = vector.multi_reduction <maximumf>, %110, %cst_30 [1] : vector<24x24xf32> to vector<24xf32>
    %112 = vector.shape_cast %111 : vector<24xf32> to vector<24x1xf32>
    %113 = vector.broadcast %112 : vector<24x1xf32> to vector<24x24xf32>
    %114 = arith.subf %110, %113 : vector<24x24xf32>
    %115 = math.exp %114 : vector<24x24xf32>
    %cst_31 = arith.constant dense<0.000000e+00> : vector<24xf32>
    %116 = vector.multi_reduction <add>, %115, %cst_31 [1] : vector<24x24xf32> to vector<24xf32>
    %117 = vector.shape_cast %116 : vector<24xf32> to vector<24x1xf32>
    %118 = tpu.reciprocal %117 {approx = true} : vector<24x1xf32> -> vector<24x1xf32>
    %119 = vector.broadcast %118 : vector<24x1xf32> to vector<24x24xf32>
    %120 = arith.mulf %115, %119 : vector<24x24xf32>
    %121 = vector.broadcast %19 : vector<1x128xf32> to vector<24x128xf32>
    %122 = arith.mulf %82, %121 : vector<24x128xf32>
    %123 = arith.truncf %122 : vector<24x128xf32> to vector<24x128xbf16>
    %124 = arith.truncf %120 : vector<24x24xf32> to vector<24x24xbf16>
    %cst_32 = arith.constant dense<0.000000e+00> : vector<24x128xf32>
    %125 = tpu.matmul %124, %123, %cst_32 {dimension_numbers = #tpu.dot_dimension_numbers<[1], [0], [0], [1], [0, 0, 1, 1], [], []>} : vector<24x24xbf16>, vector<24x128xbf16>, vector<24x128xf32> -> vector<24x128xf32>
    %126 = arith.addf %104, %125 : vector<24x128xf32>
    %127 = vector.broadcast %26 : vector<1x128xf32> to vector<24x128xf32>
    %128 = arith.mulf %80, %127 : vector<24x128xf32>
    %129 = arith.truncf %128 : vector<24x128xf32> to vector<24x128xbf16>
    %cst_33 = arith.constant dense<0.000000e+00> : vector<24x24xf32>
    %130 = tpu.matmul %129, %83, %cst_33 {dimension_numbers = #tpu.dot_dimension_numbers<[1], [1], [0], [0], [0, 0, 1, 0], [], []>} : vector<24x128xbf16>, vector<24x128xbf16>, vector<24x24xf32> -> vector<24x24xf32>
    %131 = vector.broadcast %39 : vector<1x24xf32> to vector<24x24xf32>
    %132 = arith.addf %130, %131 : vector<24x24xf32>
    %cst_34 = arith.constant dense<0xFF800000> : vector<24xf32>
    %133 = vector.multi_reduction <maximumf>, %132, %cst_34 [1] : vector<24x24xf32> to vector<24xf32>
    %134 = vector.shape_cast %133 : vector<24xf32> to vector<24x1xf32>
    %135 = vector.broadcast %134 : vector<24x1xf32> to vector<24x24xf32>
    %136 = arith.subf %132, %135 : vector<24x24xf32>
    %137 = math.exp %136 : vector<24x24xf32>
    %cst_35 = arith.constant dense<0.000000e+00> : vector<24xf32>
    %138 = vector.multi_reduction <add>, %137, %cst_35 [1] : vector<24x24xf32> to vector<24xf32>
    %139 = vector.shape_cast %138 : vector<24xf32> to vector<24x1xf32>
    %140 = tpu.reciprocal %139 {approx = true} : vector<24x1xf32> -> vector<24x1xf32>
    %141 = vector.broadcast %140 : vector<24x1xf32> to vector<24x24xf32>
    %142 = arith.mulf %137, %141 : vector<24x24xf32>
    %143 = vector.broadcast %26 : vector<1x128xf32> to vector<24x128xf32>
    %144 = arith.mulf %82, %143 : vector<24x128xf32>
    %145 = arith.truncf %144 : vector<24x128xf32> to vector<24x128xbf16>
    %146 = arith.truncf %142 : vector<24x24xf32> to vector<24x24xbf16>
    %cst_36 = arith.constant dense<0.000000e+00> : vector<24x128xf32>
    %147 = tpu.matmul %146, %145, %cst_36 {dimension_numbers = #tpu.dot_dimension_numbers<[1], [0], [0], [1], [0, 0, 1, 1], [], []>} : vector<24x24xbf16>, vector<24x128xbf16>, vector<24x128xf32> -> vector<24x128xf32>
    %148 = arith.addf %126, %147 : vector<24x128xf32>
    %149 = vector.broadcast %33 : vector<1x128xf32> to vector<24x128xf32>
    %150 = arith.mulf %80, %149 : vector<24x128xf32>
    %151 = arith.truncf %150 : vector<24x128xf32> to vector<24x128xbf16>
    %cst_37 = arith.constant dense<0.000000e+00> : vector<24x24xf32>
    %152 = tpu.matmul %151, %83, %cst_37 {dimension_numbers = #tpu.dot_dimension_numbers<[1], [1], [0], [0], [0, 0, 1, 0], [], []>} : vector<24x128xbf16>, vector<24x128xbf16>, vector<24x24xf32> -> vector<24x24xf32>
    %153 = vector.broadcast %39 : vector<1x24xf32> to vector<24x24xf32>
    %154 = arith.addf %152, %153 : vector<24x24xf32>
    %cst_38 = arith.constant dense<0xFF800000> : vector<24xf32>
    %155 = vector.multi_reduction <maximumf>, %154, %cst_38 [1] : vector<24x24xf32> to vector<24xf32>
    %156 = vector.shape_cast %155 : vector<24xf32> to vector<24x1xf32>
    %157 = vector.broadcast %156 : vector<24x1xf32> to vector<24x24xf32>
    %158 = arith.subf %154, %157 : vector<24x24xf32>
    %159 = math.exp %158 : vector<24x24xf32>
    %cst_39 = arith.constant dense<0.000000e+00> : vector<24xf32>
    %160 = vector.multi_reduction <add>, %159, %cst_39 [1] : vector<24x24xf32> to vector<24xf32>
    %161 = vector.shape_cast %160 : vector<24xf32> to vector<24x1xf32>
    %162 = tpu.reciprocal %161 {approx = true} : vector<24x1xf32> -> vector<24x1xf32>
    %163 = vector.broadcast %162 : vector<24x1xf32> to vector<24x24xf32>
    %164 = arith.mulf %159, %163 : vector<24x24xf32>
    %165 = vector.broadcast %33 : vector<1x128xf32> to vector<24x128xf32>
    %166 = arith.mulf %82, %165 : vector<24x128xf32>
    %167 = arith.truncf %166 : vector<24x128xf32> to vector<24x128xbf16>
    %168 = arith.truncf %164 : vector<24x24xf32> to vector<24x24xbf16>
    %cst_40 = arith.constant dense<0.000000e+00> : vector<24x128xf32>
    %169 = tpu.matmul %168, %167, %cst_40 {dimension_numbers = #tpu.dot_dimension_numbers<[1], [0], [0], [1], [0, 0, 1, 1], [], []>} : vector<24x24xbf16>, vector<24x128xbf16>, vector<24x128xf32> -> vector<24x128xf32>
    %170 = arith.addf %148, %169 : vector<24x128xf32>
    %171 = arith.truncf %170 : vector<24x128xf32> to vector<24x128xbf16>
    %c0_41 = arith.constant 0 : index
    %c0_42 = arith.constant 0 : index
    %c0_43 = arith.constant 0 : index
    %172 = vector.load %arg7[%c0_41, %c0_42, %c0_43] : memref<2x128x128xbf16, #tpu.memory_space<vmem>>, vector<1x128x128xbf16>
    %173 = vector.shape_cast %172 : vector<1x128x128xbf16> to vector<128x128xbf16>
    %cst_44 = arith.constant dense<0.000000e+00> : vector<24x128xf32>
    %174 = tpu.matmul %171, %173, %cst_44 {dimension_numbers = #tpu.dot_dimension_numbers<[1], [0], [0], [1], [0, 0, 1, 1], [], []>} : vector<24x128xbf16>, vector<128x128xbf16>, vector<24x128xf32> -> vector<24x128xf32>
    %175 = arith.addf %47, %174 : vector<24x128xf32>
    %176 = vector.extract_strided_slice %49 {offsets = [2, 0], sizes = [1, 128], strides = [1, 1]} : vector<6x128xf32> to vector<1x128xf32>
    %177 = vector.broadcast %176 : vector<1x128xf32> to vector<24x128xf32>
    %178 = arith.addf %175, %177 : vector<24x128xf32>
    %179 = vector.extract_strided_slice %49 {offsets = [3, 0], sizes = [1, 128], strides = [1, 1]} : vector<6x128xf32> to vector<1x128xf32>
    %180 = vector.extract_strided_slice %49 {offsets = [4, 0], sizes = [1, 128], strides = [1, 1]} : vector<6x128xf32> to vector<1x128xf32>
    %181 = vector.broadcast %4 : vector<1x128xf32> to vector<24x128xf32>
    %182 = arith.mulf %178, %181 : vector<24x128xf32>
    %cst_45 = arith.constant dense<0.000000e+00> : vector<24xf32>
    %183 = vector.multi_reduction <add>, %182, %cst_45 [1] : vector<24x128xf32> to vector<24xf32>
    %184 = vector.shape_cast %183 : vector<24xf32> to vector<24x1xf32>
    %cst_46 = arith.constant 3.125000e-02 : f32
    %185 = vector.broadcast %cst_46 : f32 to vector<24x1xf32>
    %186 = arith.mulf %184, %185 : vector<24x1xf32>
    %187 = vector.broadcast %186 : vector<24x1xf32> to vector<24x128xf32>
    %188 = arith.subf %178, %187 : vector<24x128xf32>
    %189 = vector.broadcast %4 : vector<1x128xf32> to vector<24x128xf32>
    %190 = arith.mulf %188, %189 : vector<24x128xf32>
    %191 = arith.mulf %190, %190 : vector<24x128xf32>
    %cst_47 = arith.constant dense<0.000000e+00> : vector<24xf32>
    %192 = vector.multi_reduction <add>, %191, %cst_47 [1] : vector<24x128xf32> to vector<24xf32>
    %193 = vector.shape_cast %192 : vector<24xf32> to vector<24x1xf32>
    %cst_48 = arith.constant 3.125000e-02 : f32
    %194 = vector.broadcast %cst_48 : f32 to vector<24x1xf32>
    %195 = arith.mulf %193, %194 : vector<24x1xf32>
    %cst_49 = arith.constant 9.99999974E-6 : f32
    %196 = vector.broadcast %cst_49 : f32 to vector<24x1xf32>
    %197 = arith.addf %195, %196 : vector<24x1xf32>
    %198 = math.rsqrt %197 : vector<24x1xf32>
    %199 = vector.broadcast %198 : vector<24x1xf32> to vector<24x128xf32>
    %200 = arith.mulf %190, %199 : vector<24x128xf32>
    %201 = vector.broadcast %179 : vector<1x128xf32> to vector<24x128xf32>
    %202 = arith.mulf %200, %201 : vector<24x128xf32>
    %203 = vector.broadcast %180 : vector<1x128xf32> to vector<24x128xf32>
    %204 = arith.addf %202, %203 : vector<24x128xf32>
    %205 = arith.truncf %204 : vector<24x128xf32> to vector<24x128xbf16>
    %c0_50 = arith.constant 0 : index
    %c0_51 = arith.constant 0 : index
    %c0_52 = arith.constant 0 : index
    %206 = vector.load %arg8[%c0_50, %c0_51, %c0_52] : memref<2x128x128xbf16, #tpu.memory_space<vmem>>, vector<1x128x128xbf16>
    %207 = vector.shape_cast %206 : vector<1x128x128xbf16> to vector<128x128xbf16>
    %cst_53 = arith.constant dense<0.000000e+00> : vector<24x128xf32>
    %208 = tpu.matmul %205, %207, %cst_53 {dimension_numbers = #tpu.dot_dimension_numbers<[1], [0], [0], [1], [0, 0, 1, 1], [], []>} : vector<24x128xbf16>, vector<128x128xbf16>, vector<24x128xf32> -> vector<24x128xf32>
    %c0_54 = arith.constant 0 : index
    %c0_55 = arith.constant 0 : index
    %c0_56 = arith.constant 0 : index
    %209 = vector.load %arg5[%c0_54, %c0_55, %c0_56] : memref<2x1x128xf32, #tpu.memory_space<vmem>>, vector<1x1x128xf32>
    %210 = vector.shape_cast %209 : vector<1x1x128xf32> to vector<1x128xf32>
    %211 = vector.broadcast %210 : vector<1x128xf32> to vector<24x128xf32>
    %212 = arith.addf %208, %211 : vector<24x128xf32>
    %cst_57 = arith.constant 0.707106769 : f32
    %213 = vector.broadcast %cst_57 : f32 to vector<24x128xf32>
    %214 = arith.mulf %212, %213 : vector<24x128xf32>
    %215 = math.absf %214 : vector<24x128xf32>
    %cst_58 = arith.constant 0.327591091 : f32
    %216 = vector.broadcast %cst_58 : f32 to vector<24x128xf32>
    %217 = arith.mulf %216, %215 : vector<24x128xf32>
    %cst_59 = arith.constant 1.000000e+00 : f32
    %218 = vector.broadcast %cst_59 : f32 to vector<24x128xf32>
    %219 = arith.addf %218, %217 : vector<24x128xf32>
    %220 = tpu.reciprocal %219 {approx = true} : vector<24x128xf32> -> vector<24x128xf32>
    %cst_60 = arith.constant 1.06140542 : f32
    %221 = vector.broadcast %cst_60 : f32 to vector<24x128xf32>
    %222 = arith.mulf %221, %220 : vector<24x128xf32>
    %cst_61 = arith.constant -1.45315206 : f32
    %223 = vector.broadcast %cst_61 : f32 to vector<24x128xf32>
    %224 = arith.addf %222, %223 : vector<24x128xf32>
    %225 = arith.mulf %224, %220 : vector<24x128xf32>
    %cst_62 = arith.constant 1.42141378 : f32
    %226 = vector.broadcast %cst_62 : f32 to vector<24x128xf32>
    %227 = arith.addf %225, %226 : vector<24x128xf32>
    %228 = arith.mulf %227, %220 : vector<24x128xf32>
    %cst_63 = arith.constant -0.284496725 : f32
    %229 = vector.broadcast %cst_63 : f32 to vector<24x128xf32>
    %230 = arith.addf %228, %229 : vector<24x128xf32>
    %231 = arith.mulf %230, %220 : vector<24x128xf32>
    %cst_64 = arith.constant 0.254829586 : f32
    %232 = vector.broadcast %cst_64 : f32 to vector<24x128xf32>
    %233 = arith.addf %231, %232 : vector<24x128xf32>
    %234 = arith.mulf %233, %220 : vector<24x128xf32>
    %cst_65 = arith.constant 0.000000e+00 : f32
    %235 = vector.broadcast %cst_65 : f32 to vector<24x128xf32>
    %236 = arith.subf %235, %215 : vector<24x128xf32>
    %237 = arith.mulf %236, %215 : vector<24x128xf32>
    %238 = math.exp %237 : vector<24x128xf32>
    %239 = arith.mulf %234, %238 : vector<24x128xf32>
    %cst_66 = arith.constant 1.000000e+00 : f32
    %240 = vector.broadcast %cst_66 : f32 to vector<24x128xf32>
    %241 = arith.subf %240, %239 : vector<24x128xf32>
    %cst_67 = arith.constant 0.000000e+00 : f32
    %242 = vector.broadcast %cst_67 : f32 to vector<24x128xf32>
    %243 = arith.cmpf oge, %214, %242 : vector<24x128xf32>
    %cst_68 = arith.constant 0.000000e+00 : f32
    %244 = vector.broadcast %cst_68 : f32 to vector<24x128xf32>
    %245 = arith.subf %244, %241 : vector<24x128xf32>
    %246 = arith.select %243, %241, %245 : vector<24x128xi1>, vector<24x128xf32>
    %cst_69 = arith.constant 5.000000e-01 : f32
    %247 = vector.broadcast %cst_69 : f32 to vector<24x128xf32>
    %248 = arith.mulf %247, %212 : vector<24x128xf32>
    %cst_70 = arith.constant 1.000000e+00 : f32
    %249 = vector.broadcast %cst_70 : f32 to vector<24x128xf32>
    %250 = arith.addf %249, %246 : vector<24x128xf32>
    %251 = arith.mulf %248, %250 : vector<24x128xf32>
    %252 = arith.truncf %251 : vector<24x128xf32> to vector<24x128xbf16>
    %c0_71 = arith.constant 0 : index
    %c0_72 = arith.constant 0 : index
    %c0_73 = arith.constant 0 : index
    %253 = vector.load %arg9[%c0_71, %c0_72, %c0_73] : memref<2x128x128xbf16, #tpu.memory_space<vmem>>, vector<1x128x128xbf16>
    %254 = vector.shape_cast %253 : vector<1x128x128xbf16> to vector<128x128xbf16>
    %cst_74 = arith.constant dense<0.000000e+00> : vector<24x128xf32>
    %255 = tpu.matmul %252, %254, %cst_74 {dimension_numbers = #tpu.dot_dimension_numbers<[1], [0], [0], [1], [0, 0, 1, 1], [], []>} : vector<24x128xbf16>, vector<128x128xbf16>, vector<24x128xf32> -> vector<24x128xf32>
    %256 = arith.addf %178, %255 : vector<24x128xf32>
    %257 = vector.extract_strided_slice %49 {offsets = [5, 0], sizes = [1, 128], strides = [1, 1]} : vector<6x128xf32> to vector<1x128xf32>
    %258 = vector.broadcast %257 : vector<1x128xf32> to vector<24x128xf32>
    %259 = arith.addf %256, %258 : vector<24x128xf32>
    %c1 = arith.constant 1 : index
    %c0_75 = arith.constant 0 : index
    %c0_76 = arith.constant 0 : index
    %260 = vector.load %arg4[%c1, %c0_75, %c0_76] : memref<2x6x128xf32, #tpu.memory_space<vmem>>, vector<1x6x128xf32>
    %261 = vector.shape_cast %260 : vector<1x6x128xf32> to vector<6x128xf32>
    %262 = vector.extract_strided_slice %261 {offsets = [0, 0], sizes = [1, 128], strides = [1, 1]} : vector<6x128xf32> to vector<1x128xf32>
    %263 = vector.extract_strided_slice %261 {offsets = [1, 0], sizes = [1, 128], strides = [1, 1]} : vector<6x128xf32> to vector<1x128xf32>
    %264 = vector.broadcast %4 : vector<1x128xf32> to vector<24x128xf32>
    %265 = arith.mulf %259, %264 : vector<24x128xf32>
    %cst_77 = arith.constant dense<0.000000e+00> : vector<24xf32>
    %266 = vector.multi_reduction <add>, %265, %cst_77 [1] : vector<24x128xf32> to vector<24xf32>
    %267 = vector.shape_cast %266 : vector<24xf32> to vector<24x1xf32>
    %cst_78 = arith.constant 3.125000e-02 : f32
    %268 = vector.broadcast %cst_78 : f32 to vector<24x1xf32>
    %269 = arith.mulf %267, %268 : vector<24x1xf32>
    %270 = vector.broadcast %269 : vector<24x1xf32> to vector<24x128xf32>
    %271 = arith.subf %259, %270 : vector<24x128xf32>
    %272 = vector.broadcast %4 : vector<1x128xf32> to vector<24x128xf32>
    %273 = arith.mulf %271, %272 : vector<24x128xf32>
    %274 = arith.mulf %273, %273 : vector<24x128xf32>
    %cst_79 = arith.constant dense<0.000000e+00> : vector<24xf32>
    %275 = vector.multi_reduction <add>, %274, %cst_79 [1] : vector<24x128xf32> to vector<24xf32>
    %276 = vector.shape_cast %275 : vector<24xf32> to vector<24x1xf32>
    %cst_80 = arith.constant 3.125000e-02 : f32
    %277 = vector.broadcast %cst_80 : f32 to vector<24x1xf32>
    %278 = arith.mulf %276, %277 : vector<24x1xf32>
    %cst_81 = arith.constant 9.99999974E-6 : f32
    %279 = vector.broadcast %cst_81 : f32 to vector<24x1xf32>
    %280 = arith.addf %278, %279 : vector<24x1xf32>
    %281 = math.rsqrt %280 : vector<24x1xf32>
    %282 = vector.broadcast %281 : vector<24x1xf32> to vector<24x128xf32>
    %283 = arith.mulf %273, %282 : vector<24x128xf32>
    %284 = vector.broadcast %262 : vector<1x128xf32> to vector<24x128xf32>
    %285 = arith.mulf %283, %284 : vector<24x128xf32>
    %286 = vector.broadcast %263 : vector<1x128xf32> to vector<24x128xf32>
    %287 = arith.addf %285, %286 : vector<24x128xf32>
    %288 = arith.truncf %287 : vector<24x128xf32> to vector<24x128xbf16>
    %c1_82 = arith.constant 1 : index
    %c0_83 = arith.constant 0 : index
    %c0_84 = arith.constant 0 : index
    %289 = vector.load %arg6[%c1_82, %c0_83, %c0_84] : memref<2x128x384xbf16, #tpu.memory_space<vmem>>, vector<1x128x384xbf16>
    %290 = vector.shape_cast %289 : vector<1x128x384xbf16> to vector<128x384xbf16>
    %cst_85 = arith.constant dense<0.000000e+00> : vector<24x384xf32>
    %291 = tpu.matmul %288, %290, %cst_85 {dimension_numbers = #tpu.dot_dimension_numbers<[1], [0], [0], [1], [0, 0, 1, 1], [], []>} : vector<24x128xbf16>, vector<128x384xbf16>, vector<24x384xf32> -> vector<24x384xf32>
    %292 = vector.extract_strided_slice %291 {offsets = [0, 0], sizes = [24, 128], strides = [1, 1]} : vector<24x384xf32> to vector<24x128xf32>
    %293 = vector.extract_strided_slice %291 {offsets = [0, 128], sizes = [24, 128], strides = [1, 1]} : vector<24x384xf32> to vector<24x128xf32>
    %294 = vector.extract_strided_slice %291 {offsets = [0, 256], sizes = [24, 128], strides = [1, 1]} : vector<24x384xf32> to vector<24x128xf32>
    %295 = arith.truncf %293 : vector<24x128xf32> to vector<24x128xbf16>
    %296 = vector.broadcast %12 : vector<1x128xf32> to vector<24x128xf32>
    %297 = arith.mulf %292, %296 : vector<24x128xf32>
    %298 = arith.truncf %297 : vector<24x128xf32> to vector<24x128xbf16>
    %cst_86 = arith.constant dense<0.000000e+00> : vector<24x24xf32>
    %299 = tpu.matmul %298, %295, %cst_86 {dimension_numbers = #tpu.dot_dimension_numbers<[1], [1], [0], [0], [0, 0, 1, 0], [], []>} : vector<24x128xbf16>, vector<24x128xbf16>, vector<24x24xf32> -> vector<24x24xf32>
    %300 = vector.broadcast %39 : vector<1x24xf32> to vector<24x24xf32>
    %301 = arith.addf %299, %300 : vector<24x24xf32>
    %cst_87 = arith.constant dense<0xFF800000> : vector<24xf32>
    %302 = vector.multi_reduction <maximumf>, %301, %cst_87 [1] : vector<24x24xf32> to vector<24xf32>
    %303 = vector.shape_cast %302 : vector<24xf32> to vector<24x1xf32>
    %304 = vector.broadcast %303 : vector<24x1xf32> to vector<24x24xf32>
    %305 = arith.subf %301, %304 : vector<24x24xf32>
    %306 = math.exp %305 : vector<24x24xf32>
    %cst_88 = arith.constant dense<0.000000e+00> : vector<24xf32>
    %307 = vector.multi_reduction <add>, %306, %cst_88 [1] : vector<24x24xf32> to vector<24xf32>
    %308 = vector.shape_cast %307 : vector<24xf32> to vector<24x1xf32>
    %309 = tpu.reciprocal %308 {approx = true} : vector<24x1xf32> -> vector<24x1xf32>
    %310 = vector.broadcast %309 : vector<24x1xf32> to vector<24x24xf32>
    %311 = arith.mulf %306, %310 : vector<24x24xf32>
    %312 = vector.broadcast %12 : vector<1x128xf32> to vector<24x128xf32>
    %313 = arith.mulf %294, %312 : vector<24x128xf32>
    %314 = arith.truncf %313 : vector<24x128xf32> to vector<24x128xbf16>
    %315 = arith.truncf %311 : vector<24x24xf32> to vector<24x24xbf16>
    %cst_89 = arith.constant dense<0.000000e+00> : vector<24x128xf32>
    %316 = tpu.matmul %315, %314, %cst_89 {dimension_numbers = #tpu.dot_dimension_numbers<[1], [0], [0], [1], [0, 0, 1, 1], [], []>} : vector<24x24xbf16>, vector<24x128xbf16>, vector<24x128xf32> -> vector<24x128xf32>
    %317 = vector.broadcast %19 : vector<1x128xf32> to vector<24x128xf32>
    %318 = arith.mulf %292, %317 : vector<24x128xf32>
    %319 = arith.truncf %318 : vector<24x128xf32> to vector<24x128xbf16>
    %cst_90 = arith.constant dense<0.000000e+00> : vector<24x24xf32>
    %320 = tpu.matmul %319, %295, %cst_90 {dimension_numbers = #tpu.dot_dimension_numbers<[1], [1], [0], [0], [0, 0, 1, 0], [], []>} : vector<24x128xbf16>, vector<24x128xbf16>, vector<24x24xf32> -> vector<24x24xf32>
    %321 = vector.broadcast %39 : vector<1x24xf32> to vector<24x24xf32>
    %322 = arith.addf %320, %321 : vector<24x24xf32>
    %cst_91 = arith.constant dense<0xFF800000> : vector<24xf32>
    %323 = vector.multi_reduction <maximumf>, %322, %cst_91 [1] : vector<24x24xf32> to vector<24xf32>
    %324 = vector.shape_cast %323 : vector<24xf32> to vector<24x1xf32>
    %325 = vector.broadcast %324 : vector<24x1xf32> to vector<24x24xf32>
    %326 = arith.subf %322, %325 : vector<24x24xf32>
    %327 = math.exp %326 : vector<24x24xf32>
    %cst_92 = arith.constant dense<0.000000e+00> : vector<24xf32>
    %328 = vector.multi_reduction <add>, %327, %cst_92 [1] : vector<24x24xf32> to vector<24xf32>
    %329 = vector.shape_cast %328 : vector<24xf32> to vector<24x1xf32>
    %330 = tpu.reciprocal %329 {approx = true} : vector<24x1xf32> -> vector<24x1xf32>
    %331 = vector.broadcast %330 : vector<24x1xf32> to vector<24x24xf32>
    %332 = arith.mulf %327, %331 : vector<24x24xf32>
    %333 = vector.broadcast %19 : vector<1x128xf32> to vector<24x128xf32>
    %334 = arith.mulf %294, %333 : vector<24x128xf32>
    %335 = arith.truncf %334 : vector<24x128xf32> to vector<24x128xbf16>
    %336 = arith.truncf %332 : vector<24x24xf32> to vector<24x24xbf16>
    %cst_93 = arith.constant dense<0.000000e+00> : vector<24x128xf32>
    %337 = tpu.matmul %336, %335, %cst_93 {dimension_numbers = #tpu.dot_dimension_numbers<[1], [0], [0], [1], [0, 0, 1, 1], [], []>} : vector<24x24xbf16>, vector<24x128xbf16>, vector<24x128xf32> -> vector<24x128xf32>
    %338 = arith.addf %316, %337 : vector<24x128xf32>
    %339 = vector.broadcast %26 : vector<1x128xf32> to vector<24x128xf32>
    %340 = arith.mulf %292, %339 : vector<24x128xf32>
    %341 = arith.truncf %340 : vector<24x128xf32> to vector<24x128xbf16>
    %cst_94 = arith.constant dense<0.000000e+00> : vector<24x24xf32>
    %342 = tpu.matmul %341, %295, %cst_94 {dimension_numbers = #tpu.dot_dimension_numbers<[1], [1], [0], [0], [0, 0, 1, 0], [], []>} : vector<24x128xbf16>, vector<24x128xbf16>, vector<24x24xf32> -> vector<24x24xf32>
    %343 = vector.broadcast %39 : vector<1x24xf32> to vector<24x24xf32>
    %344 = arith.addf %342, %343 : vector<24x24xf32>
    %cst_95 = arith.constant dense<0xFF800000> : vector<24xf32>
    %345 = vector.multi_reduction <maximumf>, %344, %cst_95 [1] : vector<24x24xf32> to vector<24xf32>
    %346 = vector.shape_cast %345 : vector<24xf32> to vector<24x1xf32>
    %347 = vector.broadcast %346 : vector<24x1xf32> to vector<24x24xf32>
    %348 = arith.subf %344, %347 : vector<24x24xf32>
    %349 = math.exp %348 : vector<24x24xf32>
    %cst_96 = arith.constant dense<0.000000e+00> : vector<24xf32>
    %350 = vector.multi_reduction <add>, %349, %cst_96 [1] : vector<24x24xf32> to vector<24xf32>
    %351 = vector.shape_cast %350 : vector<24xf32> to vector<24x1xf32>
    %352 = tpu.reciprocal %351 {approx = true} : vector<24x1xf32> -> vector<24x1xf32>
    %353 = vector.broadcast %352 : vector<24x1xf32> to vector<24x24xf32>
    %354 = arith.mulf %349, %353 : vector<24x24xf32>
    %355 = vector.broadcast %26 : vector<1x128xf32> to vector<24x128xf32>
    %356 = arith.mulf %294, %355 : vector<24x128xf32>
    %357 = arith.truncf %356 : vector<24x128xf32> to vector<24x128xbf16>
    %358 = arith.truncf %354 : vector<24x24xf32> to vector<24x24xbf16>
    %cst_97 = arith.constant dense<0.000000e+00> : vector<24x128xf32>
    %359 = tpu.matmul %358, %357, %cst_97 {dimension_numbers = #tpu.dot_dimension_numbers<[1], [0], [0], [1], [0, 0, 1, 1], [], []>} : vector<24x24xbf16>, vector<24x128xbf16>, vector<24x128xf32> -> vector<24x128xf32>
    %360 = arith.addf %338, %359 : vector<24x128xf32>
    %361 = vector.broadcast %33 : vector<1x128xf32> to vector<24x128xf32>
    %362 = arith.mulf %292, %361 : vector<24x128xf32>
    %363 = arith.truncf %362 : vector<24x128xf32> to vector<24x128xbf16>
    %cst_98 = arith.constant dense<0.000000e+00> : vector<24x24xf32>
    %364 = tpu.matmul %363, %295, %cst_98 {dimension_numbers = #tpu.dot_dimension_numbers<[1], [1], [0], [0], [0, 0, 1, 0], [], []>} : vector<24x128xbf16>, vector<24x128xbf16>, vector<24x24xf32> -> vector<24x24xf32>
    %365 = vector.broadcast %39 : vector<1x24xf32> to vector<24x24xf32>
    %366 = arith.addf %364, %365 : vector<24x24xf32>
    %cst_99 = arith.constant dense<0xFF800000> : vector<24xf32>
    %367 = vector.multi_reduction <maximumf>, %366, %cst_99 [1] : vector<24x24xf32> to vector<24xf32>
    %368 = vector.shape_cast %367 : vector<24xf32> to vector<24x1xf32>
    %369 = vector.broadcast %368 : vector<24x1xf32> to vector<24x24xf32>
    %370 = arith.subf %366, %369 : vector<24x24xf32>
    %371 = math.exp %370 : vector<24x24xf32>
    %cst_100 = arith.constant dense<0.000000e+00> : vector<24xf32>
    %372 = vector.multi_reduction <add>, %371, %cst_100 [1] : vector<24x24xf32> to vector<24xf32>
    %373 = vector.shape_cast %372 : vector<24xf32> to vector<24x1xf32>
    %374 = tpu.reciprocal %373 {approx = true} : vector<24x1xf32> -> vector<24x1xf32>
    %375 = vector.broadcast %374 : vector<24x1xf32> to vector<24x24xf32>
    %376 = arith.mulf %371, %375 : vector<24x24xf32>
    %377 = vector.broadcast %33 : vector<1x128xf32> to vector<24x128xf32>
    %378 = arith.mulf %294, %377 : vector<24x128xf32>
    %379 = arith.truncf %378 : vector<24x128xf32> to vector<24x128xbf16>
    %380 = arith.truncf %376 : vector<24x24xf32> to vector<24x24xbf16>
    %cst_101 = arith.constant dense<0.000000e+00> : vector<24x128xf32>
    %381 = tpu.matmul %380, %379, %cst_101 {dimension_numbers = #tpu.dot_dimension_numbers<[1], [0], [0], [1], [0, 0, 1, 1], [], []>} : vector<24x24xbf16>, vector<24x128xbf16>, vector<24x128xf32> -> vector<24x128xf32>
    %382 = arith.addf %360, %381 : vector<24x128xf32>
    %383 = arith.truncf %382 : vector<24x128xf32> to vector<24x128xbf16>
    %c1_102 = arith.constant 1 : index
    %c0_103 = arith.constant 0 : index
    %c0_104 = arith.constant 0 : index
    %384 = vector.load %arg7[%c1_102, %c0_103, %c0_104] : memref<2x128x128xbf16, #tpu.memory_space<vmem>>, vector<1x128x128xbf16>
    %385 = vector.shape_cast %384 : vector<1x128x128xbf16> to vector<128x128xbf16>
    %cst_105 = arith.constant dense<0.000000e+00> : vector<24x128xf32>
    %386 = tpu.matmul %383, %385, %cst_105 {dimension_numbers = #tpu.dot_dimension_numbers<[1], [0], [0], [1], [0, 0, 1, 1], [], []>} : vector<24x128xbf16>, vector<128x128xbf16>, vector<24x128xf32> -> vector<24x128xf32>
    %387 = arith.addf %259, %386 : vector<24x128xf32>
    %388 = vector.extract_strided_slice %261 {offsets = [2, 0], sizes = [1, 128], strides = [1, 1]} : vector<6x128xf32> to vector<1x128xf32>
    %389 = vector.broadcast %388 : vector<1x128xf32> to vector<24x128xf32>
    %390 = arith.addf %387, %389 : vector<24x128xf32>
    %391 = vector.extract_strided_slice %261 {offsets = [3, 0], sizes = [1, 128], strides = [1, 1]} : vector<6x128xf32> to vector<1x128xf32>
    %392 = vector.extract_strided_slice %261 {offsets = [4, 0], sizes = [1, 128], strides = [1, 1]} : vector<6x128xf32> to vector<1x128xf32>
    %393 = vector.broadcast %4 : vector<1x128xf32> to vector<24x128xf32>
    %394 = arith.mulf %390, %393 : vector<24x128xf32>
    %cst_106 = arith.constant dense<0.000000e+00> : vector<24xf32>
    %395 = vector.multi_reduction <add>, %394, %cst_106 [1] : vector<24x128xf32> to vector<24xf32>
    %396 = vector.shape_cast %395 : vector<24xf32> to vector<24x1xf32>
    %cst_107 = arith.constant 3.125000e-02 : f32
    %397 = vector.broadcast %cst_107 : f32 to vector<24x1xf32>
    %398 = arith.mulf %396, %397 : vector<24x1xf32>
    %399 = vector.broadcast %398 : vector<24x1xf32> to vector<24x128xf32>
    %400 = arith.subf %390, %399 : vector<24x128xf32>
    %401 = vector.broadcast %4 : vector<1x128xf32> to vector<24x128xf32>
    %402 = arith.mulf %400, %401 : vector<24x128xf32>
    %403 = arith.mulf %402, %402 : vector<24x128xf32>
    %cst_108 = arith.constant dense<0.000000e+00> : vector<24xf32>
    %404 = vector.multi_reduction <add>, %403, %cst_108 [1] : vector<24x128xf32> to vector<24xf32>
    %405 = vector.shape_cast %404 : vector<24xf32> to vector<24x1xf32>
    %cst_109 = arith.constant 3.125000e-02 : f32
    %406 = vector.broadcast %cst_109 : f32 to vector<24x1xf32>
    %407 = arith.mulf %405, %406 : vector<24x1xf32>
    %cst_110 = arith.constant 9.99999974E-6 : f32
    %408 = vector.broadcast %cst_110 : f32 to vector<24x1xf32>
    %409 = arith.addf %407, %408 : vector<24x1xf32>
    %410 = math.rsqrt %409 : vector<24x1xf32>
    %411 = vector.broadcast %410 : vector<24x1xf32> to vector<24x128xf32>
    %412 = arith.mulf %402, %411 : vector<24x128xf32>
    %413 = vector.broadcast %391 : vector<1x128xf32> to vector<24x128xf32>
    %414 = arith.mulf %412, %413 : vector<24x128xf32>
    %415 = vector.broadcast %392 : vector<1x128xf32> to vector<24x128xf32>
    %416 = arith.addf %414, %415 : vector<24x128xf32>
    %417 = arith.truncf %416 : vector<24x128xf32> to vector<24x128xbf16>
    %c1_111 = arith.constant 1 : index
    %c0_112 = arith.constant 0 : index
    %c0_113 = arith.constant 0 : index
    %418 = vector.load %arg8[%c1_111, %c0_112, %c0_113] : memref<2x128x128xbf16, #tpu.memory_space<vmem>>, vector<1x128x128xbf16>
    %419 = vector.shape_cast %418 : vector<1x128x128xbf16> to vector<128x128xbf16>
    %cst_114 = arith.constant dense<0.000000e+00> : vector<24x128xf32>
    %420 = tpu.matmul %417, %419, %cst_114 {dimension_numbers = #tpu.dot_dimension_numbers<[1], [0], [0], [1], [0, 0, 1, 1], [], []>} : vector<24x128xbf16>, vector<128x128xbf16>, vector<24x128xf32> -> vector<24x128xf32>
    %c1_115 = arith.constant 1 : index
    %c0_116 = arith.constant 0 : index
    %c0_117 = arith.constant 0 : index
    %421 = vector.load %arg5[%c1_115, %c0_116, %c0_117] : memref<2x1x128xf32, #tpu.memory_space<vmem>>, vector<1x1x128xf32>
    %422 = vector.shape_cast %421 : vector<1x1x128xf32> to vector<1x128xf32>
    %423 = vector.broadcast %422 : vector<1x128xf32> to vector<24x128xf32>
    %424 = arith.addf %420, %423 : vector<24x128xf32>
    %cst_118 = arith.constant 0.707106769 : f32
    %425 = vector.broadcast %cst_118 : f32 to vector<24x128xf32>
    %426 = arith.mulf %424, %425 : vector<24x128xf32>
    %427 = math.absf %426 : vector<24x128xf32>
    %cst_119 = arith.constant 0.327591091 : f32
    %428 = vector.broadcast %cst_119 : f32 to vector<24x128xf32>
    %429 = arith.mulf %428, %427 : vector<24x128xf32>
    %cst_120 = arith.constant 1.000000e+00 : f32
    %430 = vector.broadcast %cst_120 : f32 to vector<24x128xf32>
    %431 = arith.addf %430, %429 : vector<24x128xf32>
    %432 = tpu.reciprocal %431 {approx = true} : vector<24x128xf32> -> vector<24x128xf32>
    %cst_121 = arith.constant 1.06140542 : f32
    %433 = vector.broadcast %cst_121 : f32 to vector<24x128xf32>
    %434 = arith.mulf %433, %432 : vector<24x128xf32>
    %cst_122 = arith.constant -1.45315206 : f32
    %435 = vector.broadcast %cst_122 : f32 to vector<24x128xf32>
    %436 = arith.addf %434, %435 : vector<24x128xf32>
    %437 = arith.mulf %436, %432 : vector<24x128xf32>
    %cst_123 = arith.constant 1.42141378 : f32
    %438 = vector.broadcast %cst_123 : f32 to vector<24x128xf32>
    %439 = arith.addf %437, %438 : vector<24x128xf32>
    %440 = arith.mulf %439, %432 : vector<24x128xf32>
    %cst_124 = arith.constant -0.284496725 : f32
    %441 = vector.broadcast %cst_124 : f32 to vector<24x128xf32>
    %442 = arith.addf %440, %441 : vector<24x128xf32>
    %443 = arith.mulf %442, %432 : vector<24x128xf32>
    %cst_125 = arith.constant 0.254829586 : f32
    %444 = vector.broadcast %cst_125 : f32 to vector<24x128xf32>
    %445 = arith.addf %443, %444 : vector<24x128xf32>
    %446 = arith.mulf %445, %432 : vector<24x128xf32>
    %cst_126 = arith.constant 0.000000e+00 : f32
    %447 = vector.broadcast %cst_126 : f32 to vector<24x128xf32>
    %448 = arith.subf %447, %427 : vector<24x128xf32>
    %449 = arith.mulf %448, %427 : vector<24x128xf32>
    %450 = math.exp %449 : vector<24x128xf32>
    %451 = arith.mulf %446, %450 : vector<24x128xf32>
    %cst_127 = arith.constant 1.000000e+00 : f32
    %452 = vector.broadcast %cst_127 : f32 to vector<24x128xf32>
    %453 = arith.subf %452, %451 : vector<24x128xf32>
    %cst_128 = arith.constant 0.000000e+00 : f32
    %454 = vector.broadcast %cst_128 : f32 to vector<24x128xf32>
    %455 = arith.cmpf oge, %426, %454 : vector<24x128xf32>
    %cst_129 = arith.constant 0.000000e+00 : f32
    %456 = vector.broadcast %cst_129 : f32 to vector<24x128xf32>
    %457 = arith.subf %456, %453 : vector<24x128xf32>
    %458 = arith.select %455, %453, %457 : vector<24x128xi1>, vector<24x128xf32>
    %cst_130 = arith.constant 5.000000e-01 : f32
    %459 = vector.broadcast %cst_130 : f32 to vector<24x128xf32>
    %460 = arith.mulf %459, %424 : vector<24x128xf32>
    %cst_131 = arith.constant 1.000000e+00 : f32
    %461 = vector.broadcast %cst_131 : f32 to vector<24x128xf32>
    %462 = arith.addf %461, %458 : vector<24x128xf32>
    %463 = arith.mulf %460, %462 : vector<24x128xf32>
    %464 = arith.truncf %463 : vector<24x128xf32> to vector<24x128xbf16>
    %c1_132 = arith.constant 1 : index
    %c0_133 = arith.constant 0 : index
    %c0_134 = arith.constant 0 : index
    %465 = vector.load %arg9[%c1_132, %c0_133, %c0_134] : memref<2x128x128xbf16, #tpu.memory_space<vmem>>, vector<1x128x128xbf16>
    %466 = vector.shape_cast %465 : vector<1x128x128xbf16> to vector<128x128xbf16>
    %cst_135 = arith.constant dense<0.000000e+00> : vector<24x128xf32>
    %467 = tpu.matmul %464, %466, %cst_135 {dimension_numbers = #tpu.dot_dimension_numbers<[1], [0], [0], [1], [0, 0, 1, 1], [], []>} : vector<24x128xbf16>, vector<128x128xbf16>, vector<24x128xf32> -> vector<24x128xf32>
    %468 = arith.addf %390, %467 : vector<24x128xf32>
    %469 = vector.extract_strided_slice %261 {offsets = [5, 0], sizes = [1, 128], strides = [1, 1]} : vector<6x128xf32> to vector<1x128xf32>
    %470 = vector.broadcast %469 : vector<1x128xf32> to vector<24x128xf32>
    %471 = arith.addf %468, %470 : vector<24x128xf32>
    %c0_136 = arith.constant 0 : index
    %c0_137 = arith.constant 0 : index
    %472 = vector.load %arg10[%c0_136, %c0_137] : memref<2x128xf32, #tpu.memory_space<vmem>>, vector<1x128xf32>
    %c1_138 = arith.constant 1 : index
    %c0_139 = arith.constant 0 : index
    %473 = vector.load %arg10[%c1_138, %c0_139] : memref<2x128xf32, #tpu.memory_space<vmem>>, vector<1x128xf32>
    %474 = vector.extract_strided_slice %471 {offsets = [0, 0], sizes = [8, 128], strides = [1, 1]} : vector<24x128xf32> to vector<8x128xf32>
    %475 = vector.broadcast %4 : vector<1x128xf32> to vector<8x128xf32>
    %476 = arith.mulf %474, %475 : vector<8x128xf32>
    %cst_140 = arith.constant dense<0.000000e+00> : vector<8xf32>
    %477 = vector.multi_reduction <add>, %476, %cst_140 [1] : vector<8x128xf32> to vector<8xf32>
    %478 = vector.shape_cast %477 : vector<8xf32> to vector<8x1xf32>
    %cst_141 = arith.constant 3.125000e-02 : f32
    %479 = vector.broadcast %cst_141 : f32 to vector<8x1xf32>
    %480 = arith.mulf %478, %479 : vector<8x1xf32>
    %481 = vector.broadcast %480 : vector<8x1xf32> to vector<8x128xf32>
    %482 = arith.subf %474, %481 : vector<8x128xf32>
    %483 = vector.broadcast %4 : vector<1x128xf32> to vector<8x128xf32>
    %484 = arith.mulf %482, %483 : vector<8x128xf32>
    %485 = arith.mulf %484, %484 : vector<8x128xf32>
    %cst_142 = arith.constant dense<0.000000e+00> : vector<8xf32>
    %486 = vector.multi_reduction <add>, %485, %cst_142 [1] : vector<8x128xf32> to vector<8xf32>
    %487 = vector.shape_cast %486 : vector<8xf32> to vector<8x1xf32>
    %cst_143 = arith.constant 3.125000e-02 : f32
    %488 = vector.broadcast %cst_143 : f32 to vector<8x1xf32>
    %489 = arith.mulf %487, %488 : vector<8x1xf32>
    %cst_144 = arith.constant 9.99999974E-6 : f32
    %490 = vector.broadcast %cst_144 : f32 to vector<8x1xf32>
    %491 = arith.addf %489, %490 : vector<8x1xf32>
    %492 = math.rsqrt %491 : vector<8x1xf32>
    %493 = vector.broadcast %492 : vector<8x1xf32> to vector<8x128xf32>
    %494 = arith.mulf %484, %493 : vector<8x128xf32>
    %495 = vector.broadcast %472 : vector<1x128xf32> to vector<8x128xf32>
    %496 = arith.mulf %494, %495 : vector<8x128xf32>
    %497 = vector.broadcast %473 : vector<1x128xf32> to vector<8x128xf32>
    %498 = arith.addf %496, %497 : vector<8x128xf32>
    %499 = arith.truncf %498 : vector<8x128xf32> to vector<8x128xbf16>
    %c0_145 = arith.constant 0 : index
    %c0_146 = arith.constant 0 : index
    %500 = vector.load %arg11[%c0_145, %c0_146] : memref<128x128xbf16, #tpu.memory_space<vmem>>, vector<128x128xbf16>
    %cst_147 = arith.constant dense<0.000000e+00> : vector<8x128xf32>
    %501 = tpu.matmul %499, %500, %cst_147 {dimension_numbers = #tpu.dot_dimension_numbers<[1], [0], [0], [1], [0, 0, 1, 1], [], []>} : vector<8x128xbf16>, vector<128x128xbf16>, vector<8x128xf32> -> vector<8x128xf32>
    %c0_148 = arith.constant 0 : index
    %c0_149 = arith.constant 0 : index
    %502 = vector.load %arg12[%c0_148, %c0_149] : memref<1x128xf32, #tpu.memory_space<vmem>>, vector<1x128xf32>
    %503 = vector.broadcast %502 : vector<1x128xf32> to vector<8x128xf32>
    %504 = arith.addf %501, %503 : vector<8x128xf32>
    %c0_150 = arith.constant 0 : index
    %c0_151 = arith.constant 0 : index
    %c0_152 = arith.constant 0 : index
    %505 = vector.load %arg13[%c0_150, %c0_151, %c0_152] : memref<1x8x128xf32, #tpu.memory_space<vmem>>, vector<1x8x128xf32>
    %506 = vector.shape_cast %505 : vector<1x8x128xf32> to vector<8x128xf32>
    %507 = vector.shape_cast %504 : vector<8x128xf32> to vector<1x8x128xf32>
    tpu.vector_store %arg13[%c0_150, %c0_151, %c0_152], %507 {strides = array<i32>} : memref<1x8x128xf32, #tpu.memory_space<vmem>>, vector<1x8x128xf32>,
    return
  }
  func.func @transform_0(%arg0: i32) -> (i32, i32, i32) {
    %c0_i32 = arith.constant 0 : i32
    %c0_i32_0 = arith.constant 0 : i32
    %c0_i32_1 = arith.constant 0 : i32
    return %arg0, %c0_i32, %c0_i32_0 : i32, i32, i32
  }
  func.func @transform_1(%arg0: i32) -> (i32, i32, i32) {
    %c0_i32 = arith.constant 0 : i32
    %c0_i32_0 = arith.constant 0 : i32
    %c0_i32_1 = arith.constant 0 : i32
    %c0_i32_2 = arith.constant 0 : i32
    return %c0_i32, %c0_i32_0, %c0_i32_1 : i32, i32, i32
  }
  func.func @transform_2(%arg0: i32) -> (i32, i32) {
    %c0_i32 = arith.constant 0 : i32
    %c0_i32_0 = arith.constant 0 : i32
    %c0_i32_1 = arith.constant 0 : i32
    return %c0_i32, %c0_i32_0 : i32, i32
  }
  func.func @transform_3(%arg0: i32) -> (i32, i32, i32) {
    %c0_i32 = arith.constant 0 : i32
    %c0_i32_0 = arith.constant 0 : i32
    %c0_i32_1 = arith.constant 0 : i32
    %c0_i32_2 = arith.constant 0 : i32
    return %c0_i32, %c0_i32_0, %c0_i32_1 : i32, i32, i32
  }
  func.func @transform_4(%arg0: i32) -> (i32, i32, i32) {
    %c0_i32 = arith.constant 0 : i32
    %c0_i32_0 = arith.constant 0 : i32
    %c0_i32_1 = arith.constant 0 : i32
    %c0_i32_2 = arith.constant 0 : i32
    return %c0_i32, %c0_i32_0, %c0_i32_1 : i32, i32, i32
  }
  func.func @transform_5(%arg0: i32) -> (i32, i32, i32) {
    %c0_i32 = arith.constant 0 : i32
    %c0_i32_0 = arith.constant 0 : i32
    %c0_i32_1 = arith.constant 0 : i32
    %c0_i32_2 = arith.constant 0 : i32
    return %c0_i32, %c0_i32_0, %c0_i32_1 : i32, i32, i32
  }
  func.func @transform_6(%arg0: i32) -> (i32, i32, i32) {
    %c0_i32 = arith.constant 0 : i32
    %c0_i32_0 = arith.constant 0 : i32
    %c0_i32_1 = arith.constant 0 : i32
    %c0_i32_2 = arith.constant 0 : i32
    return %c0_i32, %c0_i32_0, %c0_i32_1 : i32, i32, i32
  }
  func.func @transform_7(%arg0: i32) -> (i32, i32, i32) {
    %c0_i32 = arith.constant 0 : i32
    %c0_i32_0 = arith.constant 0 : i32
    %c0_i32_1 = arith.constant 0 : i32
    %c0_i32_2 = arith.constant 0 : i32
    return %c0_i32, %c0_i32_0, %c0_i32_1 : i32, i32, i32
  }
  func.func @transform_8(%arg0: i32) -> (i32, i32, i32) {
    %c0_i32 = arith.constant 0 : i32
    %c0_i32_0 = arith.constant 0 : i32
    %c0_i32_1 = arith.constant 0 : i32
    %c0_i32_2 = arith.constant 0 : i32
    return %c0_i32, %c0_i32_0, %c0_i32_1 : i32, i32, i32
  }
  func.func @transform_9(%arg0: i32) -> (i32, i32) {
    %c0_i32 = arith.constant 0 : i32
    %c0_i32_0 = arith.constant 0 : i32
    %c0_i32_1 = arith.constant 0 : i32
    return %c0_i32, %c0_i32_0 : i32, i32
  }
  func.func @transform_10(%arg0: i32) -> (i32, i32) {
    %c0_i32 = arith.constant 0 : i32
    %c0_i32_0 = arith.constant 0 : i32
    %c0_i32_1 = arith.constant 0 : i32
    return %c0_i32, %c0_i32_0 : i32, i32
  }
  func.func @transform_11(%arg0: i32) -> (i32, i32) {
    %c0_i32 = arith.constant 0 : i32
    %c0_i32_0 = arith.constant 0 : i32
    %c0_i32_1 = arith.constant 0 : i32
    return %c0_i32, %c0_i32_0 : i32, i32
  }
  func.func @transform_12(%arg0: i32) -> (i32, i32, i32) {
    %c0_i32 = arith.constant 0 : i32
    %c0_i32_0 = arith.constant 0 : i32
    %c0_i32_1 = arith.constant 0 : i32
    return %arg0, %c0_i32, %c0_i32_0 : i32, i32, i32
  }
}

</mosaic_0001>

<llo_original>
// kernel: _lambda_.1
$region0: #{_lambda_.1}
  #allocation0 [shape = 'u32[]', space=smem, size = 0x4, offset = 0x4, fixed_abs, tag = 'smem constant byte address 0x4 - core index']
  #allocation1 [shape = 'u32[144,128]{1,0:T(1,128)}', space=vmem, size = 0x12000, scoped, tag = 'internal scratch']
  %s0 = inlined_call_operand.vmem [shape: f32[2,24,128], index: 0, kind: input, shape index: {}]
  %s1 = inlined_call_operand.vmem [shape: f32[1,24,128], index: 1, kind: input, shape index: {}]
  %s2 = inlined_call_operand.vmem [shape: bf16[128,128], index: 2, kind: input, shape index: {}]
  %s3 = inlined_call_operand.vmem [shape: f32[2,6,128], index: 3, kind: input, shape index: {}]
  %s4 = inlined_call_operand.vmem [shape: f32[2,1,128], index: 4, kind: input, shape index: {}]
  %s5 = inlined_call_operand.vmem [shape: bf16[2,128,384], index: 5, kind: input, shape index: {}]
  %s6 = inlined_call_operand.vmem [shape: bf16[2,128,128], index: 6, kind: input, shape index: {}]
  %s7 = inlined_call_operand.vmem [shape: bf16[2,128,128], index: 7, kind: input, shape index: {}]
  %s8 = inlined_call_operand.vmem [shape: bf16[2,128,128], index: 8, kind: input, shape index: {}]
  %s9 = inlined_call_operand.vmem [shape: f32[2,128], index: 9, kind: input, shape index: {}]
  %s10 = inlined_call_operand.vmem [shape: bf16[128,128], index: 10, kind: input, shape index: {}]
  %s11 = inlined_call_operand.vmem [shape: f32[1,128], index: 11, kind: input, shape index: {}]
  %s12 = inlined_call_operand.vmem [shape: f32[2,8,128], index: 12, kind: output, shape index: {}]
  %s13 = sld [smem:[#allocation0]]
  $region81: #{_lambda_.1} parent=0
    _
  %s15 = ssub.s32 1, %s13
  %s16 = scalar_select 0, %s15, %s13
  loop: start=0, step=1, limit=4
  $region2: #{_lambda_.1} parent=0 // loop_pre_header
    _
  $region3: #{_lambda_.1} parent=0 // loop_header
    %s18 = sphi 0, %s22
    %p19 = scmp.ge.s32.totalorder %s18, 4
    %s28 = sphi 0, %s30
    %s31 = sphi 0, %s28
    %s32 = sphi 0, %s31
    %s48 = sphi 0, %s32
    %s52 = sphi 0, %s52
    %s54 = sphi 0, %s52
    %s55 = sphi 0, %s54
    %s69 = sphi 0, %s55
    %s73 = sphi 0, %s73
    %s75 = sphi 0, %s73
    %s76 = sphi 0, %s75
    %s90 = sphi 0, %s76
    %s94 = sphi 0, %s94
    %s96 = sphi 0, %s94
    %s97 = sphi 0, %s96
    %s111 = sphi 0, %s97
    %s115 = sphi 0, %s115
    %s117 = sphi 0, %s115
    %s118 = sphi 0, %s117
    %s132 = sphi 0, %s118
    %s136 = sphi 0, %s136
    %s138 = sphi 0, %s136
    %s139 = sphi 0, %s138
    %s153 = sphi 0, %s139
    %s157 = sphi 0, %s157
    %s159 = sphi 0, %s157
    %s160 = sphi 0, %s159
    %s174 = sphi 0, %s160
    %s178 = sphi 0, %s178
    %s180 = sphi 0, %s178
    %s181 = sphi 0, %s180
    %s195 = sphi 0, %s181
    %s199 = sphi 0, %s199
    %s201 = sphi 0, %s199
    %s202 = sphi 0, %s201
    %s216 = sphi 0, %s202
    %s220 = sphi 0, %s220
    %s222 = sphi 0, %s220
    %s223 = sphi 0, %s222
    %s237 = sphi 0, %s223
    %s241 = sphi 0, %s241
    %s243 = sphi 0, %s241
    %s244 = sphi 0, %s243
    %s258 = sphi 0, %s244
    %s262 = sphi 0, %s262
    %s264 = sphi 0, %s262
    %s265 = sphi 0, %s264
    %s279 = sphi 0, %s265
    %s285 = sphi 0, %s287
    %s288 = sphi 0, %s285
    %s289 = sphi 0, %s288
    %s305 = sphi 0, %s289
  $region4: #{_lambda_.1} parent=0 // loop_header_branch
    %21 = sbr.rel (%p19) target = $region8
  $region5: #{_lambda_.1} parent=0 // loop_body
    %s23 = ssub.s32 %s18, 1
    %s24 = ssub.s32 %s18, 2
    %s25 = sadd.s32 %s18, 1
    %s26 = ssub.s32 %s18, %s25
    %p27 = scmp.eq.s32.totalorder %s26, 0
    %s29 = sadd.s32 %s28, 1
    %s30 = scalar_select %p27, %s28, %s29
    %p33 = pneg %p27
    %p34 = scmp.eq.s32.totalorder %s18, 1
    %p35 = por %p33, %p34
    %p36 = scmp.ne.s32.totalorder %s28, %s31
    %p37 = scmp.eq.s32.totalorder %s18, 0
    %p38 = por %p36, %p37
    %p39 = scmp.ne.s32.totalorder %s28, %s31
    %p40 = scmp.eq.s32.totalorder %s23, 1
    %p41 = por %p39, %p40
    %p42 = scmp.ne.s32.totalorder %s31, %s32
    %p43 = scmp.eq.s32.totalorder %s23, 0
    %p44 = por %p42, %p43
    %p45 = scmp.ne.s32.totalorder %s31, %s32
    %p46 = scmp.eq.s32.totalorder %s24, 1
    %p47 = por %p45, %p46
    %p49 = scmp.ne.s32.totalorder %s32, %s48
    %p50 = scmp.eq.s32.totalorder %s24, 0
    %p51 = por %p49, %p50
    %s53 = sadd.s32 %s52, 1
    %p56 = scmp.eq.s32.totalorder %s18, 1
    %p57 = scmp.ne.s32.totalorder %s52, %s54
    %p58 = scmp.eq.s32.totalorder %s18, 0
    %p59 = por %p57, %p58
    %p60 = scmp.ne.s32.totalorder %s52, %s54
    %p61 = scmp.eq.s32.totalorder %s23, 1
    %p62 = por %p60, %p61
    %p63 = scmp.ne.s32.totalorder %s54, %s55
    %p64 = scmp.eq.s32.totalorder %s23, 0
    %p65 = por %p63, %p64
    %p66 = scmp.ne.s32.totalorder %s54, %s55
    %p67 = scmp.eq.s32.totalorder %s24, 1
    %p68 = por %p66, %p67
    %p70 = scmp.ne.s32.totalorder %s55, %s69
    %p71 = scmp.eq.s32.totalorder %s24, 0
    %p72 = por %p70, %p71
    %s74 = sadd.s32 %s73, 1
    %p77 = scmp.eq.s32.totalorder %s18, 1
    %p78 = scmp.ne.s32.totalorder %s73, %s75
    %p79 = scmp.eq.s32.totalorder %s18, 0
    %p80 = por %p78, %p79
    %p81 = scmp.ne.s32.totalorder %s73, %s75
    %p82 = scmp.eq.s32.totalorder %s23, 1
    %p83 = por %p81, %p82
    %p84 = scmp.ne.s32.totalorder %s75, %s76
    %p85 = scmp.eq.s32.totalorder %s23, 0
    %p86 = por %p84, %p85
    %p87 = scmp.ne.s32.totalorder %s75, %s76
    %p88 = scmp.eq.s32.totalorder %s24, 1
    %p89 = por %p87, %p88
    %p91 = scmp.ne.s32.totalorder %s76, %s90
    %p92 = scmp.eq.s32.totalorder %s24, 0
    %p93 = por %p91, %p92
    %s95 = sadd.s32 %s94, 1
    %p98 = scmp.eq.s32.totalorder %s18, 1
    %p99 = scmp.ne.s32.totalorder %s94, %s96
    %p100 = scmp.eq.s32.totalorder %s18, 0
    %p101 = por %p99, %p100
    %p102 = scmp.ne.s32.totalorder %s94, %s96
    %p103 = scmp.eq.s32.totalorder %s23, 1
    %p104 = por %p102, %p103
    %p105 = scmp.ne.s32.totalorder %s96, %s97
    %p106 = scmp.eq.s32.totalorder %s23, 0
    %p107 = por %p105, %p106
    %p108 = scmp.ne.s32.totalorder %s96, %s97
    %p109 = scmp.eq.s32.totalorder %s24, 1
    %p110 = por %p108, %p109
    %p112 = scmp.ne.s32.totalorder %s97, %s111
    %p113 = scmp.eq.s32.totalorder %s24, 0
    %p114 = por %p112, %p113
    %s116 = sadd.s32 %s115, 1
    %p119 = scmp.eq.s32.totalorder %s18, 1
    %p120 = scmp.ne.s32.totalorder %s115, %s117
    %p121 = scmp.eq.s32.totalorder %s18, 0
    %p122 = por %p120, %p121
    %p123 = scmp.ne.s32.totalorder %s115, %s117
    %p124 = scmp.eq.s32.totalorder %s23, 1
    %p125 = por %p123, %p124
    %p126 = scmp.ne.s32.totalorder %s117, %s118
    %p127 = scmp.eq.s32.totalorder %s23, 0
    %p128 = por %p126, %p127
    %p129 = scmp.ne.s32.totalorder %s117, %s118
    %p130 = scmp.eq.s32.totalorder %s24, 1
    %p131 = por %p129, %p130
    %p133 = scmp.ne.s32.totalorder %s118, %s132
    %p134 = scmp.eq.s32.totalorder %s24, 0
    %p135 = por %p133, %p134
    %s137 = sadd.s32 %s136, 1
    %p140 = scmp.eq.s32.totalorder %s18, 1
    %p141 = scmp.ne.s32.totalorder %s136, %s138
    %p142 = scmp.eq.s32.totalorder %s18, 0
    %p143 = por %p141, %p142
    %p144 = scmp.ne.s32.totalorder %s136, %s138
    %p145 = scmp.eq.s32.totalorder %s23, 1
    %p146 = por %p144, %p145
    %p147 = scmp.ne.s32.totalorder %s138, %s139
    %p148 = scmp.eq.s32.totalorder %s23, 0
    %p149 = por %p147, %p148
    %p150 = scmp.ne.s32.totalorder %s138, %s139
    %p151 = scmp.eq.s32.totalorder %s24, 1
    %p152 = por %p150, %p151
    %p154 = scmp.ne.s32.totalorder %s139, %s153
    %p155 = scmp.eq.s32.totalorder %s24, 0
    %p156 = por %p154, %p155
    %s158 = sadd.s32 %s157, 1
    %p161 = scmp.eq.s32.totalorder %s18, 1
    %p162 = scmp.ne.s32.totalorder %s157, %s159
    %p163 = scmp.eq.s32.totalorder %s18, 0
    %p164 = por %p162, %p163
    %p165 = scmp.ne.s32.totalorder %s157, %s159
    %p166 = scmp.eq.s32.totalorder %s23, 1
    %p167 = por %p165, %p166
    %p168 = scmp.ne.s32.totalorder %s159, %s160
    %p169 = scmp.eq.s32.totalorder %s23, 0
    %p170 = por %p168, %p169
    %p171 = scmp.ne.s32.totalorder %s159, %s160
    %p172 = scmp.eq.s32.totalorder %s24, 1
    %p173 = por %p171, %p172
    %p175 = scmp.ne.s32.totalorder %s160, %s174
    %p176 = scmp.eq.s32.totalorder %s24, 0
    %p177 = por %p175, %p176
    %s179 = sadd.s32 %s178, 1
    %p182 = scmp.eq.s32.totalorder %s18, 1
    %p183 = scmp.ne.s32.totalorder %s178, %s180
    %p184 = scmp.eq.s32.totalorder %s18, 0
    %p185 = por %p183, %p184
    %p186 = scmp.ne.s32.totalorder %s178, %s180
    %p187 = scmp.eq.s32.totalorder %s23, 1
    %p188 = por %p186, %p187
    %p189 = scmp.ne.s32.totalorder %s180, %s181
    %p190 = scmp.eq.s32.totalorder %s23, 0
    %p191 = por %p189, %p190
    %p192 = scmp.ne.s32.totalorder %s180, %s181
    %p193 = scmp.eq.s32.totalorder %s24, 1
    %p194 = por %p192, %p193
    %p196 = scmp.ne.s32.totalorder %s181, %s195
    %p197 = scmp.eq.s32.totalorder %s24, 0
    %p198 = por %p196, %p197
    %s200 = sadd.s32 %s199, 1
    %p203 = scmp.eq.s32.totalorder %s18, 1
    %p204 = scmp.ne.s32.totalorder %s199, %s201
    %p205 = scmp.eq.s32.totalorder %s18, 0
    %p206 = por %p204, %p205
    %p207 = scmp.ne.s32.totalorder %s199, %s201
    %p208 = scmp.eq.s32.totalorder %s23, 1
    %p209 = por %p207, %p208
    %p210 = scmp.ne.s32.totalorder %s201, %s202
    %p211 = scmp.eq.s32.totalorder %s23, 0
    %p212 = por %p210, %p211
    %p213 = scmp.ne.s32.totalorder %s201, %s202
    %p214 = scmp.eq.s32.totalorder %s24, 1
    %p215 = por %p213, %p214
    %p217 = scmp.ne.s32.totalorder %s202, %s216
    %p218 = scmp.eq.s32.totalorder %s24, 0
    %p219 = por %p217, %p218
    %s221 = sadd.s32 %s220, 1
    %p224 = scmp.eq.s32.totalorder %s18, 1
    %p225 = scmp.ne.s32.totalorder %s220, %s222
    %p226 = scmp.eq.s32.totalorder %s18, 0
    %p227 = por %p225, %p226
    %p228 = scmp.ne.s32.totalorder %s220, %s222
    %p229 = scmp.eq.s32.totalorder %s23, 1
    %p230 = por %p228, %p229
    %p231 = scmp.ne.s32.totalorder %s222, %s223
    %p232 = scmp.eq.s32.totalorder %s23, 0
    %p233 = por %p231, %p232
    %p234 = scmp.ne.s32.totalorder %s222, %s223
    %p235 = scmp.eq.s32.totalorder %s24, 1
    %p236 = por %p234, %p235
    %p238 = scmp.ne.s32.totalorder %s223, %s237
    %p239 = scmp.eq.s32.totalorder %s24, 0
    %p240 = por %p238, %p239
    %s242 = sadd.s32 %s241, 1
    %p245 = scmp.eq.s32.totalorder %s18, 1
    %p246 = scmp.ne.s32.totalorder %s241, %s243
    %p247 = scmp.eq.s32.totalorder %s18, 0
    %p248 = por %p246, %p247
    %p249 = scmp.ne.s32.totalorder %s241, %s243
    %p250 = scmp.eq.s32.totalorder %s23, 1
    %p251 = por %p249, %p250
    %p252 = scmp.ne.s32.totalorder %s243, %s244
    %p253 = scmp.eq.s32.totalorder %s23, 0
    %p254 = por %p252, %p253
    %p255 = scmp.ne.s32.totalorder %s243, %s244
    %p256 = scmp.eq.s32.totalorder %s24, 1
    %p257 = por %p255, %p256
    %p259 = scmp.ne.s32.totalorder %s244, %s258
    %p260 = scmp.eq.s32.totalorder %s24, 0
    %p261 = por %p259, %p260
    %s263 = sadd.s32 %s262, 1
    %p266 = scmp.eq.s32.totalorder %s18, 1
    %p267 = scmp.ne.s32.totalorder %s262, %s264
    %p268 = scmp.eq.s32.totalorder %s18, 0
    %p269 = por %p267, %p268
    %p270 = scmp.ne.s32.totalorder %s262, %s264
    %p271 = scmp.eq.s32.totalorder %s23, 1
    %p272 = por %p270, %p271
    %p273 = scmp.ne.s32.totalorder %s264, %s265
    %p274 = scmp.eq.s32.totalorder %s23, 0
    %p275 = por %p273, %p274
    %p276 = scmp.ne.s32.totalorder %s264, %s265
    %p277 = scmp.eq.s32.totalorder %s24, 1
    %p278 = por %p276, %p277
    %p280 = scmp.ne.s32.totalorder %s265, %s279
    %p281 = scmp.eq.s32.totalorder %s24, 0
    %p282 = por %p280, %p281
    %s283 = ssub.s32 %s18, %s25
    %p284 = scmp.eq.s32.totalorder %s283, 0
    %s286 = sadd.s32 %s285, 1
    %s287 = scalar_select %p284, %s285, %s286
    %p290 = pneg %p284
    %p291 = scmp.eq.s32.totalorder %s18, 1
    %p292 = por %p290, %p291
    %p293 = scmp.ne.s32.totalorder %s285, %s288
    %p294 = scmp.eq.s32.totalorder %s18, 0
    %p295 = por %p293, %p294
    %p296 = scmp.ne.s32.totalorder %s285, %s288
    %p297 = scmp.eq.s32.totalorder %s23, 1
    %p298 = por %p296, %p297
    %p299 = scmp.ne.s32.totalorder %s288, %s289
    %p300 = scmp.eq.s32.totalorder %s23, 0
    %p301 = por %p299, %p300
    %p302 = scmp.ne.s32.totalorder %s288, %s289
    %p303 = scmp.eq.s32.totalorder %s24, 1
    %p304 = por %p302, %p303
    %p306 = scmp.ne.s32.totalorder %s289, %s305
    %p307 = scmp.eq.s32.totalorder %s24, 0
    %p308 = por %p306, %p307
    %p309 = scmp.le.s32.totalorder 1, %s18
    %p310 = scmp.lt.s32.totalorder %s18, 3
    %p311 = pnand %p309, %p310
    %p312 = pneg %p311
    // Predicated region
    $region9: #{_lambda_.1} parent=5 // pred_check
      _
    $region10: #{_lambda_.1} parent=5 // pred_check_branch
      %314 = sbr.rel (%p311) target = $region12
    $region11: #{_lambda_.1} parent=5 // pred_region
      %s315 = ssub.s32 %s18, 1
      // Predicated region
      $region13: #{_lambda_.1} parent=11 // pred_check
        %p316 = pneg %p65
      $region14: #{_lambda_.1} parent=11 // pred_check_branch
        %318 = sbr.rel (%p316) target = $region16
      $region15: #{_lambda_.1} parent=11 // pred_region
        _
      $region16: #{_lambda_.1} parent=11 // pred_fallthru
        _
      // Predicated region
      $region17: #{_lambda_.1} parent=11 // pred_check
        %p319 = pneg %p86
      $region18: #{_lambda_.1} parent=11 // pred_check_branch
        %321 = sbr.rel (%p319) target = $region20
      $region19: #{_lambda_.1} parent=11 // pred_region
        _
      $region20: #{_lambda_.1} parent=11 // pred_fallthru
        _
      // Predicated region
      $region21: #{_lambda_.1} parent=11 // pred_check
        %p322 = pneg %p107
      $region22: #{_lambda_.1} parent=11 // pred_check_branch
        %324 = sbr.rel (%p322) target = $region24
      $region23: #{_lambda_.1} parent=11 // pred_region
        _
      $region24: #{_lambda_.1} parent=11 // pred_fallthru
        _
      // Predicated region
      $region25: #{_lambda_.1} parent=11 // pred_check
        %p325 = pneg %p128
      $region26: #{_lambda_.1} parent=11 // pred_check_branch
        %327 = sbr.rel (%p325) target = $region28
      $region27: #{_lambda_.1} parent=11 // pred_region
        _
      $region28: #{_lambda_.1} parent=11 // pred_fallthru
        _
      // Predicated region
      $region29: #{_lambda_.1} parent=11 // pred_check
        %p328 = pneg %p149
      $region30: #{_lambda_.1} parent=11 // pred_check_branch
        %330 = sbr.rel (%p328) target = $region32
      $region31: #{_lambda_.1} parent=11 // pred_region
        _
      $region32: #{_lambda_.1} parent=11 // pred_fallthru
        _
      // Predicated region
      $region33: #{_lambda_.1} parent=11 // pred_check
        %p331 = pneg %p170
      $region34: #{_lambda_.1} parent=11 // pred_check_branch
        %333 = sbr.rel (%p331) target = $region36
      $region35: #{_lambda_.1} parent=11 // pred_region
        _
      $region36: #{_lambda_.1} parent=11 // pred_fallthru
        _
      // Predicated region
      $region37: #{_lambda_.1} parent=11 // pred_check
        %p334 = pneg %p191
      $region38: #{_lambda_.1} parent=11 // pred_check_branch
        %336 = sbr.rel (%p334) target = $region40
      $region39: #{_lambda_.1} parent=11 // pred_region
        _
      $region40: #{_lambda_.1} parent=11 // pred_fallthru
        _
      // Predicated region
      $region41: #{_lambda_.1} parent=11 // pred_check
        %p337 = pneg %p212
      $region42: #{_lambda_.1} parent=11 // pred_check_branch
        %339 = sbr.rel (%p337) target = $region44
      $region43: #{_lambda_.1} parent=11 // pred_region
        _
      $region44: #{_lambda_.1} parent=11 // pred_fallthru
        _
      // Predicated region
      $region45: #{_lambda_.1} parent=11 // pred_check
        %p340 = pneg %p233
      $region46: #{_lambda_.1} parent=11 // pred_check_branch
        %342 = sbr.rel (%p340) target = $region48
      $region47: #{_lambda_.1} parent=11 // pred_region
        _
      $region48: #{_lambda_.1} parent=11 // pred_fallthru
        _
      // Predicated region
      $region49: #{_lambda_.1} parent=11 // pred_check
        %p343 = pneg %p254
      $region50: #{_lambda_.1} parent=11 // pred_check_branch
        %345 = sbr.rel (%p343) target = $region52
      $region51: #{_lambda_.1} parent=11 // pred_region
        _
      $region52: #{_lambda_.1} parent=11 // pred_fallthru
        _
      // Predicated region
      $region53: #{_lambda_.1} parent=11 // pred_check
        %p346 = pneg %p275
      $region54: #{_lambda_.1} parent=11 // pred_check_branch
        %348 = sbr.rel (%p346) target = $region56
      $region55: #{_lambda_.1} parent=11 // pred_region
        _
      $region56: #{_lambda_.1} parent=11 // pred_fallthru
        _
    $region12: #{_lambda_.1} parent=5 // pred_fallthru
      _
    %p349 = scmp.lt.s32.totalorder %s18, 2
    // Predicated region
    $region57: #{_lambda_.1} parent=5 // pred_check
      %p350 = pneg %p349
    $region58: #{_lambda_.1} parent=5 // pred_check_branch
      %352 = sbr.rel (%p350) target = $region60
    $region59: #{_lambda_.1} parent=5 // pred_region
      // Predicated region
      $region61: #{_lambda_.1} parent=59 // pred_check
        %p353 = pneg %p38
      $region62: #{_lambda_.1} parent=59 // pred_check_branch
        %355 = sbr.rel (%p353) target = $region64
      $region63: #{_lambda_.1} parent=59 // pred_region
        %p356 = scmp.lt.s32.totalorder %s18, 1
        %s357 = scalar_select %p356, %s18, 1
        %s358 = smul.addr %s357, 3
        %s359 = smul.addr %s358, 8
        %s360 = scalar_lea.vmem %s0, %s359
      $region64: #{_lambda_.1} parent=59 // pred_fallthru
        _
    $region60: #{_lambda_.1} parent=5 // pred_fallthru
      _
    %p361 = scmp.le.s32.totalorder 1, %s18
    %p362 = scmp.lt.s32.totalorder %s18, 3
    %p363 = pnand %p361, %p362
    %p364 = pneg %p363
    // Predicated region
    $region65: #{_lambda_.1} parent=5 // pred_check
      _
    $region66: #{_lambda_.1} parent=5 // pred_check_branch
      %366 = sbr.rel (%p363) target = $region68
    $region67: #{_lambda_.1} parent=5 // pred_region
      %s367 = ssub.s32 %s18, 1
      %p368 = scmp.lt.s32.totalorder %s23, 1
      %s369 = scalar_select %p368, %s23, 1
      %s370 = smul.addr %s369, 3
      %s371 = smul.addr %s370, 8
      %s372 = scalar_lea.vmem %s0, %s371
      %p373 = pneg %p44
      %p374 = pneg %p41
      %p375 = pneg %p65
      %p376 = pneg %p62
      %p377 = pneg %p86
      %p378 = pneg %p83
      %p379 = pneg %p107
      %p380 = pneg %p104
      %p381 = pneg %p128
      %p382 = pneg %p125
      %p383 = pneg %p149
      %p384 = pneg %p146
      %p385 = pneg %p170
      %p386 = pneg %p167
      %p387 = pneg %p191
      %p388 = pneg %p188
      %p389 = pneg %p212
      %p390 = pneg %p209
      %p391 = pneg %p233
      %p392 = pneg %p230
      %p393 = pneg %p254
      %p394 = pneg %p251
      %p395 = pneg %p275
      %p396 = pneg %p272
      %p397 = pneg %p301
      %p398 = pneg %p298
      %p399 = scmp.lt.s32.totalorder %s23, 1
      %s400 = scalar_select %p399, %s23, 1
      %s401 = smul.addr %s400, 8
      %s402 = scalar_lea.vmem %s12, %s401
      %p403 = scmp.lt.s32.totalorder %s23, 1
      %s404 = scalar_select %p403, %s23, 1
      %s405 = smul.addr %s404, 3
      %s406 = smul.addr %s405, 8
      %s407 = scalar_lea.vmem %s0, %s406
      %p408 = scmp.lt.s32.totalorder %s23, 1
      %s409 = scalar_select %p408, %s23, 1
      %s410 = smul.addr %s409, 8
      %s411 = scalar_lea.vmem %s12, %s410
      %v413 = vlaneseq
      %v414 = vand.u32 %v413, 127
      %vm415 = vcmp.lt.s32.totalorder %v414, 32
      %v416 = vsel %vm415, 1, 0
      %v417 = vcvt.s32.f32 %v416
      %vm418 = vcmp.ge.s32.totalorder %v414, 0
      %vm419 = vcmp.lt.s32.totalorder %v414, 8
      %vm420 = vmand %vm418, %vm419
      %v421 = vsel %vm420, 1, 0
      %v422 = vcvt.s32.f32 %v421
      %vm423 = vcmp.ge.s32.totalorder %v414, 8
      %vm424 = vcmp.lt.s32.totalorder %v414, 16
      %vm425 = vmand %vm423, %vm424
      %v426 = vsel %vm425, 1, 0
      %v427 = vcvt.s32.f32 %v426
      %vm428 = vcmp.ge.s32.totalorder %v414, 16
      %vm429 = vcmp.lt.s32.totalorder %v414, 24
      %vm430 = vmand %vm428, %vm429
      %v431 = vsel %vm430, 1, 0
      %v432 = vcvt.s32.f32 %v431
      %vm433 = vcmp.ge.s32.totalorder %v414, 24
      %vm434 = vmand %vm433, %vm415
      %v435 = vsel %vm434, 1, 0
      %v436 = vcvt.s32.f32 %v435
      %vm437 = vcmp.lt.s32.totalorder %v414, 17
      %v438 = vsel %vm437, 0.0, -1e+30
      %v439 = vld [vmem:[%s407] sm:$0xff]
      %v440 = vld [vmem:[%s407 + $0x8] sm:$0xff]
      %v441 = vld [vmem:[%s407 + $0x10] sm:$0xff]
      %v442 = vpack.c.bf16 %v440, %v439
      %v443 = vpack.c.bf16 %v441, %v441
      %v444 = vld [vmem:[%s2] sm:$0xf]
      %v445 = vld [vmem:[%s2 + $0x4] sm:$0xf]
      %v446 = vld [vmem:[%s2 + $0x8] sm:$0xf]
      %v447 = vld [vmem:[%s2 + $0xc] sm:$0xf]
      %v448 = vld [vmem:[%s2 + $0x10] sm:$0xf]
      %v449 = vld [vmem:[%s2 + $0x14] sm:$0xf]
      %v450 = vld [vmem:[%s2 + $0x18] sm:$0xf]
      %v451 = vld [vmem:[%s2 + $0x1c] sm:$0xf]
      %v452 = vld [vmem:[%s2 + $0x20] sm:$0xf]
      %v453 = vld [vmem:[%s2 + $0x24] sm:$0xf]
      %v454 = vld [vmem:[%s2 + $0x28] sm:$0xf]
      %v455 = vld [vmem:[%s2 + $0x2c] sm:$0xf]
      %v456 = vld [vmem:[%s2 + $0x30] sm:$0xf]
      %v457 = vld [vmem:[%s2 + $0x34] sm:$0xf]
      %v458 = vld [vmem:[%s2 + $0x38] sm:$0xf]
      %v459 = vld [vmem:[%s2 + $0x3c] sm:$0xf]
      %v460 = vld [vmem:[%s1] sm:$0xff]
      %v461 = vld [vmem:[%s1 + $0x8] sm:$0xff]
      %v462 = vld [vmem:[%s1 + $0x10] sm:$0xff]
      %v479 = vunpack.c.l.b16 %v444
      %v480 = vunpack.c.l.b16 %v445
      %v481 = vunpack.c.l.b16 %v446
      %v482 = vunpack.c.l.b16 %v447
      %v483 = vunpack.c.l.b16 %v448
      %v484 = vunpack.c.l.b16 %v449
      %v485 = vunpack.c.l.b16 %v450
      %v486 = vunpack.c.l.b16 %v451
      %v487 = vunpack.c.l.b16 %v452
      %v488 = vunpack.c.l.b16 %v453
      %v489 = vunpack.c.l.b16 %v454
      %v490 = vunpack.c.l.b16 %v455
      %v491 = vunpack.c.l.b16 %v456
      %v492 = vunpack.c.l.b16 %v457
      %v493 = vunpack.c.l.b16 %v458
      %v494 = vunpack.c.l.b16 %v459
      %v495 = vpack.c.b16 %v480, %v479
      %v496 = vpack.c.b16 %v482, %v481
      %v497 = vpack.c.b16 %v484, %v483
      %v498 = vpack.c.b16 %v486, %v485
      %v499 = vpack.c.b16 %v488, %v487
      %v500 = vpack.c.b16 %v490, %v489
      %v501 = vpack.c.b16 %v492, %v491
      %v502 = vpack.c.b16 %v494, %v493
      %511 = vmatprep.subr.bf16.mxu0 0
      %512 = vmatpush1.bf16.msra.mxu0 %v502
      %513 = vmatprep.subr.bf16.mxu0 0
      %514 = vmatpush1.bf16.msra.mxu0 %v501
      %515 = vmatprep.subr.bf16.mxu0 0
      %516 = vmatpush1.bf16.msra.mxu0 %v500
      %517 = vmatprep.subr.bf16.mxu0 0
      %518 = vmatpush1.bf16.msra.mxu0 %v499
      %519 = vmatprep.subr.bf16.mxu0 0
      %520 = vmatpush1.bf16.msra.mxu0 %v498
      %521 = vmatprep.subr.bf16.mxu0 0
      %522 = vmatpush1.bf16.msra.mxu0 %v497
      %523 = vmatprep.subr.bf16.mxu0 0
      %524 = vmatpush1.bf16.msra.mxu0 %v496
      %525 = vmatprep.subr.bf16.mxu0 0
      %526 = vmatpush1.bf16.msra.mxu0 %v495
      %527 = vmatprep.subr.bf16.mxu0 0
      %528 = vmatpush2.bf16.msra.mxu0 0
      %529 = vmatprep.subr.bf16.mxu0 0
      %530 = vmatpush2.bf16.msra.mxu0 0
      %531 = vmatprep.subr.bf16.mxu0 0
      %532 = vmatpush2.bf16.msra.mxu0 0
      %533 = vmatprep.subr.bf16.mxu0 0
      %534 = vmatpush2.bf16.msra.mxu0 0
      %535 = vmatprep.subr.bf16.mxu0 0
      %536 = vmatpush2.bf16.msra.mxu0 0
      %537 = vmatprep.subr.bf16.mxu0 0
      %538 = vmatpush2.bf16.msra.mxu0 0
      %539 = vmatprep.subr.bf16.mxu0 0
      %540 = vmatpush2.bf16.msra.mxu0 0
      %541 = vmatprep.subr.bf16.mxu0 0
      %542 = vmatpush2.bf16.msra.mxu0 0
      %543 = vmatprep.mubr.bf16.mxu0 0
      %544 = vmatmul.mubr.bf16.gmra.mxu0 %v442
      %v545 = vpop.f32.mrf.mxu0
      %v546 = vadd.f32 %v460, %v545
      %v547 = vpop.f32.mrf.mxu0
      %v548 = vpop.f32.mrf.mxu0
      %v549 = vadd.f32 %v461, %v548
      %v550 = vpop.f32.mrf.mxu0
      %551 = vmatprep.mubr.bf16.mxu0 0
      %552 = vmatmul.mubr.bf16.gmra.mxu0 %v443
      %v553 = vpop.f32.mrf.mxu0
      %v554 = vadd.f32 %v462, %v553
      %v555 = vpop.f32.mrf.mxu0
      %v556 = vpop.f32.mrf.mxu0
      %v557 = vpop.f32.mrf.mxu0
      %558 = vdwg.mxu0
      %v559 = vld [vmem:[%s3] sm:$0x3f]
      %v560 = vmul.f32 %v546, %v417
      %v561 = vmul.f32 %v549, %v417
      %v562 = vmul.f32 %v554, %v417
      %563 = vadd.xlane.f32.xlu0 %v560
      %v564 = vpop.xlane.xlu0 %563
      %565 = vadd.xlane.f32.xlu0 %v561
      %v566 = vpop.xlane.xlu0 %565
      %567 = vadd.xlane.f32.xlu0 %v562
      %v568 = vpop.xlane.xlu0 %567
      %v569 = vmul.f32 %v564, 0.03125
      %v570 = vmul.f32 %v566, 0.03125
      %v571 = vmul.f32 %v568, 0.03125
      %v572 = vsub.f32 %v546, %v569
      %v573 = vsub.f32 %v549, %v570
      %v574 = vsub.f32 %v554, %v571
      %v575 = vmul.f32 %v572, %v417
      %v576 = vmul.f32 %v573, %v417
      %v577 = vmul.f32 %v574, %v417
      %v578 = vmul.f32 %v575, %v575
      %v579 = vmul.f32 %v576, %v576
      %v580 = vmul.f32 %v577, %v577
      %581 = vadd.xlane.f32.xlu0 %v578
      %v582 = vpop.xlane.xlu0 %581
      %583 = vadd.xlane.f32.xlu0 %v579
      %v584 = vpop.xlane.xlu0 %583
      %585 = vadd.xlane.f32.xlu0 %v580
      %v586 = vpop.xlane.xlu0 %585
      %v587 = vmul.f32 %v582, 0.03125
      %v588 = vmul.f32 %v584, 0.03125
      %v589 = vmul.f32 %v586, 0.03125
      %v590 = vadd.f32 %v587, 1e-05
      %v591 = vadd.f32 %v588, 1e-05
      %v592 = vadd.f32 %v589, 1e-05
      %v593 = vrsqrt.pop %v590
      %v594 = vrsqrt.pop %v591
      %v595 = vrsqrt.pop %v592
      %v596 = vmul.f32 %v575, %v593
      %v597 = vmul.f32 %v576, %v594
      %v598 = vmul.f32 %v577, %v595
      %v599 = vlaneseq
      %v600 = vshrl.u32 %v599, 7
      %v601 = vsub.s32 0, %v600
      %v602 = vrot.slane %v559, %v601
      %v603 = vmul.f32 %v596, %v602
      %v604 = vmul.f32 %v597, %v602
      %v605 = vmul.f32 %v598, %v602
      %v606 = vlaneseq
      %v607 = vshrl.u32 %v606, 7
      %v608 = vsub.s32 1, %v607
      %v609 = vrot.slane %v559, %v608
      %v610 = vadd.f32 %v603, %v609
      %v611 = vadd.f32 %v604, %v609
      %v612 = vadd.f32 %v605, %v609
      %v613 = vpack.c.bf16 %v611, %v610
      %v614 = vpack.c.bf16 %v612, %v612
      %v615 = vld [vmem:[%s5] sm:$0xff]
      %v616 = vld [vmem:[%s5 + $0x8] sm:$0xf]
      %v617 = vld [vmem:[%s5 + $0xc] sm:$0xff]
      %v618 = vld [vmem:[%s5 + $0x14] sm:$0xf]
      %v619 = vld [vmem:[%s5 + $0x18] sm:$0xff]
      %v620 = vld [vmem:[%s5 + $0x20] sm:$0xf]
      %v621 = vld [vmem:[%s5 + $0x24] sm:$0xff]
      %v622 = vld [vmem:[%s5 + $0x2c] sm:$0xf]
      %v623 = vld [vmem:[%s5 + $0x30] sm:$0xff]
      %v624 = vld [vmem:[%s5 + $0x38] sm:$0xf]
      %v625 = vld [vmem:[%s5 + $0x3c] sm:$0xff]
      %v626 = vld [vmem:[%s5 + $0x44] sm:$0xf]
      %v627 = vld [vmem:[%s5 + $0x48] sm:$0xff]
      %v628 = vld [vmem:[%s5 + $0x50] sm:$0xf]
      %v629 = vld [vmem:[%s5 + $0x54] sm:$0xff]
      %v630 = vld [vmem:[%s5 + $0x5c] sm:$0xf]
      %v631 = vld [vmem:[%s5 + $0x60] sm:$0xff]
      %v632 = vld [vmem:[%s5 + $0x68] sm:$0xf]
      %v633 = vld [vmem:[%s5 + $0x6c] sm:$0xff]
      %v634 = vld [vmem:[%s5 + $0x74] sm:$0xf]
      %v635 = vld [vmem:[%s5 + $0x78] sm:$0xff]
      %v636 = vld [vmem:[%s5 + $0x80] sm:$0xf]
      %v637 = vld [vmem:[%s5 + $0x84] sm:$0xff]
      %v638 = vld [vmem:[%s5 + $0x8c] sm:$0xf]
      %v639 = vld [vmem:[%s5 + $0x90] sm:$0xff]
      %v640 = vld [vmem:[%s5 + $0x98] sm:$0xf]
      %v641 = vld [vmem:[%s5 + $0x9c] sm:$0xff]
      %v642 = vld [vmem:[%s5 + $0xa4] sm:$0xf]
      %v643 = vld [vmem:[%s5 + $0xa8] sm:$0xff]
      %v644 = vld [vmem:[%s5 + $0xb0] sm:$0xf]
      %v645 = vld [vmem:[%s5 + $0xb4] sm:$0xff]
      %v646 = vld [vmem:[%s5 + $0xbc] sm:$0xf]
      %v679 = vunpack.c.l.b16 %v615
      %v680 = vunpack.c.h.b16 %v615
      %v681 = vunpack.c.l.b16 %v616
      %v682 = vunpack.c.l.b16 %v617
      %v683 = vunpack.c.h.b16 %v617
      %v684 = vunpack.c.l.b16 %v618
      %v685 = vunpack.c.l.b16 %v619
      %v686 = vunpack.c.h.b16 %v619
      %v687 = vunpack.c.l.b16 %v620
      %v688 = vunpack.c.l.b16 %v621
      %v689 = vunpack.c.h.b16 %v621
      %v690 = vunpack.c.l.b16 %v622
      %v691 = vunpack.c.l.b16 %v623
      %v692 = vunpack.c.h.b16 %v623
      %v693 = vunpack.c.l.b16 %v624
      %v694 = vunpack.c.l.b16 %v625
      %v695 = vunpack.c.h.b16 %v625
      %v696 = vunpack.c.l.b16 %v626
      %v697 = vunpack.c.l.b16 %v627
      %v698 = vunpack.c.h.b16 %v627
      %v699 = vunpack.c.l.b16 %v628
      %v700 = vunpack.c.l.b16 %v629
      %v701 = vunpack.c.h.b16 %v629
      %v702 = vunpack.c.l.b16 %v630
      %v703 = vunpack.c.l.b16 %v631
      %v704 = vunpack.c.h.b16 %v631
      %v705 = vunpack.c.l.b16 %v632
      %v706 = vunpack.c.l.b16 %v633
      %v707 = vunpack.c.h.b16 %v633
      %v708 = vunpack.c.l.b16 %v634
      %v709 = vunpack.c.l.b16 %v635
      %v710 = vunpack.c.h.b16 %v635
      %v711 = vunpack.c.l.b16 %v636
      %v712 = vunpack.c.l.b16 %v637
      %v713 = vunpack.c.h.b16 %v637
      %v714 = vunpack.c.l.b16 %v638
      %v715 = vunpack.c.l.b16 %v639
      %v716 = vunpack.c.h.b16 %v639
      %v717 = vunpack.c.l.b16 %v640
      %v718 = vunpack.c.l.b16 %v641
      %v719 = vunpack.c.h.b16 %v641
      %v720 = vunpack.c.l.b16 %v642
      %v721 = vunpack.c.l.b16 %v643
      %v722 = vunpack.c.h.b16 %v643
      %v723 = vunpack.c.l.b16 %v644
      %v724 = vunpack.c.l.b16 %v645
      %v725 = vunpack.c.h.b16 %v645
      %v726 = vunpack.c.l.b16 %v646
      %v727 = vpack.c.b16 %v682, %v679
      %v728 = vpack.c.b16 %v683, %v680
      %v729 = vpack.c.b16 %v684, %v681
      %v730 = vpack.c.b16 %v688, %v685
      %v731 = vpack.c.b16 %v689, %v686
      %v732 = vpack.c.b16 %v690, %v687
      %v733 = vpack.c.b16 %v694, %v691
      %v734 = vpack.c.b16 %v695, %v692
      %v735 = vpack.c.b16 %v696, %v693
      %v736 = vpack.c.b16 %v700, %v697
      %v737 = vpack.c.b16 %v701, %v698
      %v738 = vpack.c.b16 %v702, %v699
      %v739 = vpack.c.b16 %v706, %v703
      %v740 = vpack.c.b16 %v707, %v704
      %v741 = vpack.c.b16 %v708, %v705
      %v742 = vpack.c.b16 %v712, %v709
      %v743 = vpack.c.b16 %v713, %v710
      %v744 = vpack.c.b16 %v714, %v711
      %v745 = vpack.c.b16 %v718, %v715
      %v746 = vpack.c.b16 %v719, %v716
      %v747 = vpack.c.b16 %v720, %v717
      %v748 = vpack.c.b16 %v724, %v721
      %v749 = vpack.c.b16 %v725, %v722
      %v750 = vpack.c.b16 %v726, %v723
      %775 = vmatprep.subr.bf16.mxu0 %v749
      %776 = vmatpush1.bf16.msra.mxu0 %v748
      %777 = vmatprep.subr.bf16.mxu0 %v746
      %778 = vmatpush1.bf16.msra.mxu0 %v745
      %779 = vmatprep.subr.bf16.mxu0 %v743
      %780 = vmatpush1.bf16.msra.mxu0 %v742
      %781 = vmatprep.subr.bf16.mxu0 %v740
      %782 = vmatpush1.bf16.msra.mxu0 %v739
      %783 = vmatprep.subr.bf16.mxu0 %v737
      %784 = vmatpush1.bf16.msra.mxu0 %v736
      %785 = vmatprep.subr.bf16.mxu0 %v734
      %786 = vmatpush1.bf16.msra.mxu0 %v733
      %787 = vmatprep.subr.bf16.mxu0 %v731
      %788 = vmatpush1.bf16.msra.mxu0 %v730
      %789 = vmatprep.subr.bf16.mxu0 %v728
      %790 = vmatpush1.bf16.msra.mxu0 %v727
      %791 = vmatprep.subr.bf16.mxu0 0
      %792 = vmatpush2.bf16.msra.mxu0 0
      %793 = vmatprep.subr.bf16.mxu0 0
      %794 = vmatpush2.bf16.msra.mxu0 0
      %795 = vmatprep.subr.bf16.mxu0 0
      %796 = vmatpush2.bf16.msra.mxu0 0
      %797 = vmatprep.subr.bf16.mxu0 0
      %798 = vmatpush2.bf16.msra.mxu0 0
      %799 = vmatprep.subr.bf16.mxu0 0
      %800 = vmatpush2.bf16.msra.mxu0 0
      %801 = vmatprep.subr.bf16.mxu0 0
      %802 = vmatpush2.bf16.msra.mxu0 0
      %803 = vmatprep.subr.bf16.mxu0 0
      %804 = vmatpush2.bf16.msra.mxu0 0
      %805 = vmatprep.subr.bf16.mxu0 0
      %806 = vmatpush2.bf16.msra.mxu0 0
      %807 = vmatprep.mubr.bf16.mxu0 0
      %808 = vmatmul.mubr.bf16.gmra.mxu0 %v613
      %v809 = vpop.f32.mrf.mxu0
      %v810 = vadd.f32 0.0, %v809
      %v811 = vpop.f32.mrf.mxu0
      %v812 = vadd.f32 0.0, %v811
      %v813 = vpop.f32.mrf.mxu0
      %v814 = vadd.f32 0.0, %v813
      %v815 = vpop.f32.mrf.mxu0
      %v816 = vadd.f32 0.0, %v815
      %817 = vmatprep.mubr.bf16.mxu0 0
      %818 = vmatmul.mubr.bf16.gmra.mxu0 %v614
      %v819 = vpop.f32.mrf.mxu0
      %v820 = vadd.f32 0.0, %v819
      %v821 = vpop.f32.mrf.mxu0
      %v822 = vadd.f32 0.0, %v821
      %v823 = vpop.f32.mrf.mxu0
      %v824 = vpop.f32.mrf.mxu0
      %825 = vdwg.mxu0
      %826 = vmatprep.subr.bf16.mxu0 0
      %827 = vmatpush1.bf16.msra.mxu0 %v750
      %828 = vmatprep.subr.bf16.mxu0 0
      %829 = vmatpush1.bf16.msra.mxu0 %v747
      %830 = vmatprep.subr.bf16.mxu0 0
      %831 = vmatpush1.bf16.msra.mxu0 %v744
      %832 = vmatprep.subr.bf16.mxu0 0
      %833 = vmatpush1.bf16.msra.mxu0 %v741
      %834 = vmatprep.subr.bf16.mxu0 0
      %835 = vmatpush1.bf16.msra.mxu0 %v738
      %836 = vmatprep.subr.bf16.mxu0 0
      %837 = vmatpush1.bf16.msra.mxu0 %v735
      %838 = vmatprep.subr.bf16.mxu0 0
      %839 = vmatpush1.bf16.msra.mxu0 %v732
      %840 = vmatprep.subr.bf16.mxu0 0
      %841 = vmatpush1.bf16.msra.mxu0 %v729
      %842 = vmatprep.subr.bf16.mxu0 0
      %843 = vmatpush2.bf16.msra.mxu0 0
      %844 = vmatprep.subr.bf16.mxu0 0
      %845 = vmatpush2.bf16.msra.mxu0 0
      %846 = vmatprep.subr.bf16.mxu0 0
      %847 = vmatpush2.bf16.msra.mxu0 0
      %848 = vmatprep.subr.bf16.mxu0 0
      %849 = vmatpush2.bf16.msra.mxu0 0
      %850 = vmatprep.subr.bf16.mxu0 0
      %851 = vmatpush2.bf16.msra.mxu0 0
      %852 = vmatprep.subr.bf16.mxu0 0
      %853 = vmatpush2.bf16.msra.mxu0 0
      %854 = vmatprep.subr.bf16.mxu0 0
      %855 = vmatpush2.bf16.msra.mxu0 0
      %856 = vmatprep.subr.bf16.mxu0 0
      %857 = vmatpush2.bf16.msra.mxu0 0
      %858 = vmatprep.mubr.bf16.mxu0 0
      %859 = vmatmul.mubr.bf16.gmra.mxu0 %v613
      %v860 = vpop.f32.mrf.mxu0
      %v861 = vadd.f32 0.0, %v860
      %v862 = vpop.f32.mrf.mxu0
      %v863 = vpop.f32.mrf.mxu0
      %v864 = vadd.f32 0.0, %v863
      %v865 = vpop.f32.mrf.mxu0
      %866 = vmatprep.mubr.bf16.mxu0 0
      %867 = vmatmul.mubr.bf16.gmra.mxu0 %v614
      %v868 = vpop.f32.mrf.mxu0
      %v869 = vadd.f32 0.0, %v868
      %v870 = vpop.f32.mrf.mxu0
      %v871 = vpop.f32.mrf.mxu0
      %v872 = vpop.f32.mrf.mxu0
      %873 = vdwg.mxu0
      %v874 = vpack.c.bf16 %v816, %v812
      %v875 = vpack.c.bf16 %v822, %v822
      %v876 = vmul.f32 %v810, %v422
      %v877 = vmul.f32 %v814, %v422
      %v878 = vmul.f32 %v820, %v422
      %v879 = vpack.c.bf16 %v877, %v876
      %v880 = vpack.c.bf16 %v878, %v878
      %881 = vmatprep.subr.bf16.mxu0 0
      %882 = vmatpush1.bf16.xpose.msra.mxu0 0
      %883 = vmatprep.subr.bf16.mxu0 0
      %884 = vmatpush1.bf16.xpose.msra.mxu0 0
      %885 = vmatprep.subr.bf16.mxu0 0
      %886 = vmatpush1.bf16.xpose.msra.mxu0 0
      %887 = vmatprep.subr.bf16.mxu0 0
      %888 = vmatpush1.bf16.xpose.msra.mxu0 0
      %889 = vmatprep.subr.bf16.mxu0 0
      %890 = vmatpush1.bf16.xpose.msra.mxu0 0
      %891 = vmatprep.subr.bf16.mxu0 0
      %892 = vmatpush1.bf16.xpose.msra.mxu0 0
      %893 = vmatprep.subr.bf16.mxu0 0
      %894 = vmatpush1.bf16.xpose.msra.mxu0 %v875
      %895 = vmatprep.subr.bf16.mxu0 0
      %896 = vmatpush1.bf16.xpose.msra.mxu0 %v874
      %897 = vmatprep.subr.bf16.mxu0 0
      %898 = vmatpush2.bf16.xpose.msra.mxu0 0
      %899 = vmatprep.subr.bf16.mxu0 0
      %900 = vmatpush2.bf16.xpose.msra.mxu0 0
      %901 = vmatprep.subr.bf16.mxu0 0
      %902 = vmatpush2.bf16.xpose.msra.mxu0 0
      %903 = vmatprep.subr.bf16.mxu0 0
      %904 = vmatpush2.bf16.xpose.msra.mxu0 0
      %905 = vmatprep.subr.bf16.mxu0 0
      %906 = vmatpush2.bf16.xpose.msra.mxu0 0
      %907 = vmatprep.subr.bf16.mxu0 0
      %908 = vmatpush2.bf16.xpose.msra.mxu0 0
      %909 = vmatprep.subr.bf16.mxu0 0
      %910 = vmatpush2.bf16.xpose.msra.mxu0 0
      %911 = vmatprep.subr.bf16.mxu0 0
      %912 = vmatpush2.bf16.xpose.msra.mxu0 0
      %913 = vmatprep.mubr.bf16.mxu0 0
      %914 = vmatmul.mubr.bf16.gmra.mxu0 %v879
      %v915 = vpop.f32.mrf.mxu0
      %v916 = vadd.f32 %v438, %v915
      %v917 = vpop.f32.mrf.mxu0
      %v918 = vpop.f32.mrf.mxu0
      %v919 = vadd.f32 %v438, %v918
      %v920 = vpop.f32.mrf.mxu0
      %921 = vmatprep.mubr.bf16.mxu0 0
      %922 = vmatmul.mubr.bf16.gmra.mxu0 %v880
      %v923 = vpop.f32.mrf.mxu0
      %v924 = vadd.f32 %v438, %v923
      %v925 = vpop.f32.mrf.mxu0
      %v926 = vpop.f32.mrf.mxu0
      %v927 = vpop.f32.mrf.mxu0
      %928 = vdwg.mxu0
      %vm929 = vcmask 195584
      %v930 = vsel %vm929, %v916, -inf
      %931 = vmax.xlane.f32.xlu0 %v930
      %v932 = vpop.xlane.xlu0 %931
      %v933 = vsel %vm929, %v919, -inf
      %934 = vmax.xlane.f32.xlu0 %v933
      %v935 = vpop.xlane.xlu0 %934
      %v936 = vsel %vm929, %v924, -inf
      %937 = vmax.xlane.f32.xlu0 %v936
      %v938 = vpop.xlane.xlu0 %937
      %v939 = vsub.f32 %v916, %v932
      %v940 = vsub.f32 %v919, %v935
      %v941 = vsub.f32 %v924, %v938
      %v942 = vmul.f32 %v939, 1.442695
      %v943 = vpow.pop %v942
      %v944 = vmul.f32 %v940, 1.442695
      %v945 = vpow.pop %v944
      %v946 = vmul.f32 %v941, 1.442695
      %v947 = vpow.pop %v946
      %v948 = vsel %vm929, %v943, 0.0
      %949 = vadd.xlane.f32.xlu0 %v948
      %v950 = vpop.xlane.xlu0 %949
      %v951 = vsel %vm929, %v945, 0.0
      %952 = vadd.xlane.f32.xlu0 %v951
      %v953 = vpop.xlane.xlu0 %952
      %v954 = vsel %vm929, %v947, 0.0
      %955 = vadd.xlane.f32.xlu0 %v954
      %v956 = vpop.xlane.xlu0 %955
      %v957 = vrcp.pop %v950
      %v958 = vrcp.pop %v953
      %v959 = vrcp.pop %v956
      %v960 = vmul.f32 %v943, %v957
      %v961 = vmul.f32 %v945, %v958
      %v962 = vmul.f32 %v947, %v959
      %v963 = vmul.f32 %v861, %v422
      %v964 = vmul.f32 %v864, %v422
      %v965 = vmul.f32 %v869, %v422
      %v966 = vpack.c.bf16 %v964, %v963
      %v967 = vpack.c.bf16 %v965, %v965
      %v968 = vpack.c.bf16 %v961, %v960
      %v969 = vpack.c.bf16 %v962, %v962
      %v970 = vmul.f32 %v810, %v427
      %v971 = vmul.f32 %v814, %v427
      %v972 = vmul.f32 %v820, %v427
      %v973 = vpack.c.bf16 %v971, %v970
      %v974 = vpack.c.bf16 %v972, %v972
      %975 = vmatprep.subr.bf16.mxu0 0
      %976 = vmatpush1.bf16.xpose.msra.mxu0 0
      %977 = vmatprep.subr.bf16.mxu0 0
      %978 = vmatpush1.bf16.xpose.msra.mxu0 0
      %979 = vmatprep.subr.bf16.mxu0 0
      %980 = vmatpush1.bf16.xpose.msra.mxu0 0
      %981 = vmatprep.subr.bf16.mxu0 0
      %982 = vmatpush1.bf16.xpose.msra.mxu0 0
      %983 = vmatprep.subr.bf16.mxu0 0
      %984 = vmatpush1.bf16.xpose.msra.mxu0 0
      %985 = vmatprep.subr.bf16.mxu0 0
      %986 = vmatpush1.bf16.xpose.msra.mxu0 0
      %987 = vmatprep.subr.bf16.mxu0 0
      %988 = vmatpush1.bf16.xpose.msra.mxu0 %v875
      %989 = vmatprep.subr.bf16.mxu0 0
      %990 = vmatpush1.bf16.xpose.msra.mxu0 %v874
      %991 = vmatprep.subr.bf16.mxu0 0
      %992 = vmatpush2.bf16.xpose.msra.mxu0 0
      %993 = vmatprep.subr.bf16.mxu0 0
      %994 = vmatpush2.bf16.xpose.msra.mxu0 0
      %995 = vmatprep.subr.bf16.mxu0 0
      %996 = vmatpush2.bf16.xpose.msra.mxu0 0
      %997 = vmatprep.subr.bf16.mxu0 0
      %998 = vmatpush2.bf16.xpose.msra.mxu0 0
      %999 = vmatprep.subr.bf16.mxu0 0
      %1000 = vmatpush2.bf16.xpose.msra.mxu0 0
      %1001 = vmatprep.subr.bf16.mxu0 0
      %1002 = vmatpush2.bf16.xpose.msra.mxu0 0
      %1003 = vmatprep.subr.bf16.mxu0 0
      %1004 = vmatpush2.bf16.xpose.msra.mxu0 0
      %1005 = vmatprep.subr.bf16.mxu0 0
      %1006 = vmatpush2.bf16.xpose.msra.mxu0 0
      %1007 = vmatprep.mubr.bf16.mxu0 0
      %1008 = vmatmul.mubr.bf16.gmra.mxu0 %v973
      %v1009 = vpop.f32.mrf.mxu0
      %v1010 = vadd.f32 %v438, %v1009
      %v1011 = vpop.f32.mrf.mxu0
      %v1012 = vpop.f32.mrf.mxu0
      %v1013 = vadd.f32 %v438, %v1012
      %v1014 = vpop.f32.mrf.mxu0
      %1015 = vmatprep.mubr.bf16.mxu0 0
      %1016 = vmatmul.mubr.bf16.gmra.mxu0 %v974
      %v1017 = vpop.f32.mrf.mxu0
      %v1018 = vadd.f32 %v438, %v1017
      %v1019 = vpop.f32.mrf.mxu0
      %v1020 = vpop.f32.mrf.mxu0
      %v1021 = vpop.f32.mrf.mxu0
      %1022 = vdwg.mxu0
      %v1023 = vsel %vm929, %v1010, -inf
      %1024 = vmax.xlane.f32.xlu0 %v1023
      %v1025 = vpop.xlane.xlu0 %1024
      %v1026 = vsel %vm929, %v1013, -inf
      %1027 = vmax.xlane.f32.xlu0 %v1026
      %v1028 = vpop.xlane.xlu0 %1027
      %v1029 = vsel %vm929, %v1018, -inf
      %1030 = vmax.xlane.f32.xlu0 %v1029
      %v1031 = vpop.xlane.xlu0 %1030
      %v1032 = vsub.f32 %v1010, %v1025
      %v1033 = vsub.f32 %v1013, %v1028
      %v1034 = vsub.f32 %v1018, %v1031
      %v1035 = vmul.f32 %v1032, 1.442695
      %v1036 = vpow.pop %v1035
      %v1037 = vmul.f32 %v1033, 1.442695
      %v1038 = vpow.pop %v1037
      %v1039 = vmul.f32 %v1034, 1.442695
      %v1040 = vpow.pop %v1039
      %v1041 = vsel %vm929, %v1036, 0.0
      %1042 = vadd.xlane.f32.xlu0 %v1041
      %v1043 = vpop.xlane.xlu0 %1042
      %v1044 = vsel %vm929, %v1038, 0.0
      %1045 = vadd.xlane.f32.xlu0 %v1044
      %v1046 = vpop.xlane.xlu0 %1045
      %v1047 = vsel %vm929, %v1040, 0.0
      %1048 = vadd.xlane.f32.xlu0 %v1047
      %v1049 = vpop.xlane.xlu0 %1048
      %v1050 = vrcp.pop %v1043
      %v1051 = vrcp.pop %v1046
      %v1052 = vrcp.pop %v1049
      %v1053 = vmul.f32 %v1036, %v1050
      %v1054 = vmul.f32 %v1038, %v1051
      %v1055 = vmul.f32 %v1040, %v1052
      %v1056 = vmul.f32 %v861, %v427
      %v1057 = vmul.f32 %v864, %v427
      %v1058 = vmul.f32 %v869, %v427
      %v1059 = vpack.c.bf16 %v1057, %v1056
      %v1060 = vpack.c.bf16 %v1058, %v1058
      %v1061 = vpack.c.bf16 %v1054, %v1053
      %v1062 = vpack.c.bf16 %v1055, %v1055
      %v1064 = vsel %vm929, %v1061, 0
      %v1067 = vsel %vm929, %v1062, 0
      %vm1069 = vcmask 1043456
      %v1071 = vsel %vm1069, %v1060, 0
      %1073 = vmatprep.subr.bf16.mxu0 0
      %1074 = vmatpush1.bf16.msra.mxu0 0
      %1075 = vmatprep.subr.bf16.mxu0 0
      %1076 = vmatpush1.bf16.msra.mxu0 0
      %1077 = vmatprep.subr.bf16.mxu0 0
      %1078 = vmatpush1.bf16.msra.mxu0 0
      %1079 = vmatprep.subr.bf16.mxu0 0
      %1080 = vmatpush1.bf16.msra.mxu0 0
      %1081 = vmatprep.subr.bf16.mxu0 0
      %1082 = vmatpush1.bf16.msra.mxu0 0
      %1083 = vmatprep.subr.bf16.mxu0 0
      %1084 = vmatpush1.bf16.msra.mxu0 0
      %1085 = vmatprep.subr.bf16.mxu0 0
      %1086 = vmatpush1.bf16.msra.mxu0 %v1071
      %1087 = vmatprep.subr.bf16.mxu0 0
      %1088 = vmatpush1.bf16.msra.mxu0 %v1059
      %1089 = vmatprep.subr.bf16.mxu0 0
      %1090 = vmatpush2.bf16.msra.mxu0 0
      %1091 = vmatprep.subr.bf16.mxu0 0
      %1092 = vmatpush2.bf16.msra.mxu0 0
      %1093 = vmatprep.subr.bf16.mxu0 0
      %1094 = vmatpush2.bf16.msra.mxu0 0
      %1095 = vmatprep.subr.bf16.mxu0 0
      %1096 = vmatpush2.bf16.msra.mxu0 0
      %1097 = vmatprep.subr.bf16.mxu0 0
      %1098 = vmatpush2.bf16.msra.mxu0 0
      %1099 = vmatprep.subr.bf16.mxu0 0
      %1100 = vmatpush2.bf16.msra.mxu0 0
      %1101 = vmatprep.subr.bf16.mxu0 0
      %1102 = vmatpush2.bf16.msra.mxu0 0
      %1103 = vmatprep.subr.bf16.mxu0 0
      %1104 = vmatpush2.bf16.msra.mxu0 0
      %1105 = vmatprep.mubr.bf16.mxu0 0
      %1106 = vmatmul.mubr.bf16.gmra.mxu0 %v1064
      %v1107 = vpop.f32.mrf.mxu0
      %v1108 = vadd.f32 0.0, %v1107
      %v1109 = vpop.f32.mrf.mxu0
      %v1110 = vpop.f32.mrf.mxu0
      %v1111 = vadd.f32 0.0, %v1110
      %v1112 = vpop.f32.mrf.mxu0
      %1113 = vmatprep.mubr.bf16.mxu0 0
      %1114 = vmatmul.mubr.bf16.gmra.mxu0 %v1067
      %v1115 = vpop.f32.mrf.mxu0
      %v1116 = vadd.f32 0.0, %v1115
      %v1117 = vpop.f32.mrf.mxu0
      %v1118 = vpop.f32.mrf.mxu0
      %v1119 = vpop.f32.mrf.mxu0
      %1120 = vdwg.mxu0
      %v1122 = vsel %vm929, %v968, 0
      %v1125 = vsel %vm929, %v969, 0
      %v1128 = vsel %vm1069, %v967, 0
      %1130 = vmatprep.subr.bf16.mxu0 0
      %1131 = vmatpush1.bf16.msra.mxu0 0
      %1132 = vmatprep.subr.bf16.mxu0 0
      %1133 = vmatpush1.bf16.msra.mxu0 0
      %1134 = vmatprep.subr.bf16.mxu0 0
      %1135 = vmatpush1.bf16.msra.mxu0 0
      %1136 = vmatprep.subr.bf16.mxu0 0
      %1137 = vmatpush1.bf16.msra.mxu0 0
      %1138 = vmatprep.subr.bf16.mxu0 0
      %1139 = vmatpush1.bf16.msra.mxu0 0
      %1140 = vmatprep.subr.bf16.mxu0 0
      %1141 = vmatpush1.bf16.msra.mxu0 0
      %1142 = vmatprep.subr.bf16.mxu0 0
      %1143 = vmatpush1.bf16.msra.mxu0 %v1128
      %1144 = vmatprep.subr.bf16.mxu0 0
      %1145 = vmatpush1.bf16.msra.mxu0 %v966
      %1146 = vmatprep.subr.bf16.mxu0 0
      %1147 = vmatpush2.bf16.msra.mxu0 0
      %1148 = vmatprep.subr.bf16.mxu0 0
      %1149 = vmatpush2.bf16.msra.mxu0 0
      %1150 = vmatprep.subr.bf16.mxu0 0
      %1151 = vmatpush2.bf16.msra.mxu0 0
      %1152 = vmatprep.subr.bf16.mxu0 0
      %1153 = vmatpush2.bf16.msra.mxu0 0
      %1154 = vmatprep.subr.bf16.mxu0 0
      %1155 = vmatpush2.bf16.msra.mxu0 0
      %1156 = vmatprep.subr.bf16.mxu0 0
      %1157 = vmatpush2.bf16.msra.mxu0 0
      %1158 = vmatprep.subr.bf16.mxu0 0
      %1159 = vmatpush2.bf16.msra.mxu0 0
      %1160 = vmatprep.subr.bf16.mxu0 0
      %1161 = vmatpush2.bf16.msra.mxu0 0
      %1162 = vmatprep.mubr.bf16.mxu0 0
      %1163 = vmatmul.mubr.bf16.gmra.mxu0 %v1122
      %v1164 = vpop.f32.mrf.mxu0
      %v1165 = vadd.f32 %v1108, %v1164
      %v1166 = vpop.f32.mrf.mxu0
      %v1167 = vpop.f32.mrf.mxu0
      %v1168 = vadd.f32 %v1111, %v1167
      %v1169 = vpop.f32.mrf.mxu0
      %1170 = vmatprep.mubr.bf16.mxu0 0
      %1171 = vmatmul.mubr.bf16.gmra.mxu0 %v1125
      %v1172 = vpop.f32.mrf.mxu0
      %v1173 = vadd.f32 %v1116, %v1172
      %v1174 = vpop.f32.mrf.mxu0
      %v1175 = vpop.f32.mrf.mxu0
      %v1176 = vpop.f32.mrf.mxu0
      %1177 = vdwg.mxu0
      %v1178 = vmul.f32 %v810, %v432
      %v1179 = vmul.f32 %v814, %v432
      %v1180 = vmul.f32 %v820, %v432
      %v1181 = vpack.c.bf16 %v1179, %v1178
      %v1182 = vpack.c.bf16 %v1180, %v1180
      %1183 = vmatprep.subr.bf16.mxu0 0
      %1184 = vmatpush1.bf16.xpose.msra.mxu0 0
      %1185 = vmatprep.subr.bf16.mxu0 0
      %1186 = vmatpush1.bf16.xpose.msra.mxu0 0
      %1187 = vmatprep.subr.bf16.mxu0 0
      %1188 = vmatpush1.bf16.xpose.msra.mxu0 0
      %1189 = vmatprep.subr.bf16.mxu0 0
      %1190 = vmatpush1.bf16.xpose.msra.mxu0 0
      %1191 = vmatprep.subr.bf16.mxu0 0
      %1192 = vmatpush1.bf16.xpose.msra.mxu0 0
      %1193 = vmatprep.subr.bf16.mxu0 0
      %1194 = vmatpush1.bf16.xpose.msra.mxu0 0
      %1195 = vmatprep.subr.bf16.mxu0 0
      %1196 = vmatpush1.bf16.xpose.msra.mxu0 %v875
      %1197 = vmatprep.subr.bf16.mxu0 0
      %1198 = vmatpush1.bf16.xpose.msra.mxu0 %v874
      %1199 = vmatprep.subr.bf16.mxu0 0
      %1200 = vmatpush2.bf16.xpose.msra.mxu0 0
      %1201 = vmatprep.subr.bf16.mxu0 0
      %1202 = vmatpush2.bf16.xpose.msra.mxu0 0
      %1203 = vmatprep.subr.bf16.mxu0 0
      %1204 = vmatpush2.bf16.xpose.msra.mxu0 0
      %1205 = vmatprep.subr.bf16.mxu0 0
      %1206 = vmatpush2.bf16.xpose.msra.mxu0 0
      %1207 = vmatprep.subr.bf16.mxu0 0
      %1208 = vmatpush2.bf16.xpose.msra.mxu0 0
      %1209 = vmatprep.subr.bf16.mxu0 0
      %1210 = vmatpush2.bf16.xpose.msra.mxu0 0
      %1211 = vmatprep.subr.bf16.mxu0 0
      %1212 = vmatpush2.bf16.xpose.msra.mxu0 0
      %1213 = vmatprep.subr.bf16.mxu0 0
      %1214 = vmatpush2.bf16.xpose.msra.mxu0 0
      %1215 = vmatprep.mubr.bf16.mxu0 0
      %1216 = vmatmul.mubr.bf16.gmra.mxu0 %v1181
      %v1217 = vpop.f32.mrf.mxu0
      %v1218 = vadd.f32 %v438, %v1217
      %v1219 = vpop.f32.mrf.mxu0
      %v1220 = vpop.f32.mrf.mxu0
      %v1221 = vadd.f32 %v438, %v1220
      %v1222 = vpop.f32.mrf.mxu0
      %1223 = vmatprep.mubr.bf16.mxu0 0
      %1224 = vmatmul.mubr.bf16.gmra.mxu0 %v1182
      %v1225 = vpop.f32.mrf.mxu0
      %v1226 = vadd.f32 %v438, %v1225
      %v1227 = vpop.f32.mrf.mxu0
      %v1228 = vpop.f32.mrf.mxu0
      %v1229 = vpop.f32.mrf.mxu0
      %1230 = vdwg.mxu0
      %v1231 = vsel %vm929, %v1218, -inf
      %1232 = vmax.xlane.f32.xlu0 %v1231
      %v1233 = vpop.xlane.xlu0 %1232
      %v1234 = vsel %vm929, %v1221, -inf
      %1235 = vmax.xlane.f32.xlu0 %v1234
      %v1236 = vpop.xlane.xlu0 %1235
      %v1237 = vsel %vm929, %v1226, -inf
      %1238 = vmax.xlane.f32.xlu0 %v1237
      %v1239 = vpop.xlane.xlu0 %1238
      %v1240 = vsub.f32 %v1218, %v1233
      %v1241 = vsub.f32 %v1221, %v1236
      %v1242 = vsub.f32 %v1226, %v1239
      %v1243 = vmul.f32 %v1240, 1.442695
      %v1244 = vpow.pop %v1243
      %v1245 = vmul.f32 %v1241, 1.442695
      %v1246 = vpow.pop %v1245
      %v1247 = vmul.f32 %v1242, 1.442695
      %v1248 = vpow.pop %v1247
      %v1249 = vsel %vm929, %v1244, 0.0
      %1250 = vadd.xlane.f32.xlu0 %v1249
      %v1251 = vpop.xlane.xlu0 %1250
      %v1252 = vsel %vm929, %v1246, 0.0
      %1253 = vadd.xlane.f32.xlu0 %v1252
      %v1254 = vpop.xlane.xlu0 %1253
      %v1255 = vsel %vm929, %v1248, 0.0
      %1256 = vadd.xlane.f32.xlu0 %v1255
      %v1257 = vpop.xlane.xlu0 %1256
      %v1258 = vrcp.pop %v1251
      %v1259 = vrcp.pop %v1254
      %v1260 = vrcp.pop %v1257
      %v1261 = vmul.f32 %v1244, %v1258
      %v1262 = vmul.f32 %v1246, %v1259
      %v1263 = vmul.f32 %v1248, %v1260
      %v1264 = vmul.f32 %v861, %v432
      %v1265 = vmul.f32 %v864, %v432
      %v1266 = vmul.f32 %v869, %v432
      %v1267 = vpack.c.bf16 %v1265, %v1264
      %v1268 = vpack.c.bf16 %v1266, %v1266
      %v1269 = vpack.c.bf16 %v1262, %v1261
      %v1270 = vpack.c.bf16 %v1263, %v1263
      %v1272 = vsel %vm929, %v1269, 0
      %v1275 = vsel %vm929, %v1270, 0
      %v1278 = vsel %vm1069, %v1268, 0
      %1280 = vmatprep.subr.bf16.mxu0 0
      %1281 = vmatpush1.bf16.msra.mxu0 0
      %1282 = vmatprep.subr.bf16.mxu0 0
      %1283 = vmatpush1.bf16.msra.mxu0 0
      %1284 = vmatprep.subr.bf16.mxu0 0
      %1285 = vmatpush1.bf16.msra.mxu0 0
      %1286 = vmatprep.subr.bf16.mxu0 0
      %1287 = vmatpush1.bf16.msra.mxu0 0
      %1288 = vmatprep.subr.bf16.mxu0 0
      %1289 = vmatpush1.bf16.msra.mxu0 0
      %1290 = vmatprep.subr.bf16.mxu0 0
      %1291 = vmatpush1.bf16.msra.mxu0 0
      %1292 = vmatprep.subr.bf16.mxu0 0
      %1293 = vmatpush1.bf16.msra.mxu0 %v1278
      %1294 = vmatprep.subr.bf16.mxu0 0
      %1295 = vmatpush1.bf16.msra.mxu0 %v1267
      %1296 = vmatprep.subr.bf16.mxu0 0
      %1297 = vmatpush2.bf16.msra.mxu0 0
      %1298 = vmatprep.subr.bf16.mxu0 0
      %1299 = vmatpush2.bf16.msra.mxu0 0
      %1300 = vmatprep.subr.bf16.mxu0 0
      %1301 = vmatpush2.bf16.msra.mxu0 0
      %1302 = vmatprep.subr.bf16.mxu0 0
      %1303 = vmatpush2.bf16.msra.mxu0 0
      %1304 = vmatprep.subr.bf16.mxu0 0
      %1305 = vmatpush2.bf16.msra.mxu0 0
      %1306 = vmatprep.subr.bf16.mxu0 0
      %1307 = vmatpush2.bf16.msra.mxu0 0
      %1308 = vmatprep.subr.bf16.mxu0 0
      %1309 = vmatpush2.bf16.msra.mxu0 0
      %1310 = vmatprep.subr.bf16.mxu0 0
      %1311 = vmatpush2.bf16.msra.mxu0 0
      %1312 = vmatprep.mubr.bf16.mxu0 0
      %1313 = vmatmul.mubr.bf16.gmra.mxu0 %v1272
      %v1314 = vpop.f32.mrf.mxu0
      %v1315 = vadd.f32 0.0, %v1314
      %v1316 = vpop.f32.mrf.mxu0
      %v1317 = vpop.f32.mrf.mxu0
      %v1318 = vadd.f32 0.0, %v1317
      %v1319 = vpop.f32.mrf.mxu0
      %1320 = vmatprep.mubr.bf16.mxu0 0
      %1321 = vmatmul.mubr.bf16.gmra.mxu0 %v1275
      %v1322 = vpop.f32.mrf.mxu0
      %v1323 = vadd.f32 0.0, %v1322
      %v1324 = vpop.f32.mrf.mxu0
      %v1325 = vpop.f32.mrf.mxu0
      %v1326 = vpop.f32.mrf.mxu0
      %1327 = vdwg.mxu0
      %v1328 = vadd.f32 %v1165, %v1315
      %v1329 = vadd.f32 %v1168, %v1318
      %v1330 = vadd.f32 %v1173, %v1323
      %v1331 = vmul.f32 %v810, %v436
      %v1332 = vmul.f32 %v814, %v436
      %v1333 = vmul.f32 %v820, %v436
      %v1334 = vpack.c.bf16 %v1332, %v1331
      %v1335 = vpack.c.bf16 %v1333, %v1333
      %1336 = vmatprep.subr.bf16.mxu0 0
      %1337 = vmatpush1.bf16.xpose.msra.mxu0 0
      %1338 = vmatprep.subr.bf16.mxu0 0
      %1339 = vmatpush1.bf16.xpose.msra.mxu0 0
      %1340 = vmatprep.subr.bf16.mxu0 0
      %1341 = vmatpush1.bf16.xpose.msra.mxu0 0
      %1342 = vmatprep.subr.bf16.mxu0 0
      %1343 = vmatpush1.bf16.xpose.msra.mxu0 0
      %1344 = vmatprep.subr.bf16.mxu0 0
      %1345 = vmatpush1.bf16.xpose.msra.mxu0 0
      %1346 = vmatprep.subr.bf16.mxu0 0
      %1347 = vmatpush1.bf16.xpose.msra.mxu0 0
      %1348 = vmatprep.subr.bf16.mxu0 0
      %1349 = vmatpush1.bf16.xpose.msra.mxu0 %v875
      %1350 = vmatprep.subr.bf16.mxu0 0
      %1351 = vmatpush1.bf16.xpose.msra.mxu0 %v874
      %1352 = vmatprep.subr.bf16.mxu0 0
      %1353 = vmatpush2.bf16.xpose.msra.mxu0 0
      %1354 = vmatprep.subr.bf16.mxu0 0
      %1355 = vmatpush2.bf16.xpose.msra.mxu0 0
      %1356 = vmatprep.subr.bf16.mxu0 0
      %1357 = vmatpush2.bf16.xpose.msra.mxu0 0
      %1358 = vmatprep.subr.bf16.mxu0 0
      %1359 = vmatpush2.bf16.xpose.msra.mxu0 0
      %1360 = vmatprep.subr.bf16.mxu0 0
      %1361 = vmatpush2.bf16.xpose.msra.mxu0 0
      %1362 = vmatprep.subr.bf16.mxu0 0
      %1363 = vmatpush2.bf16.xpose.msra.mxu0 0
      %1364 = vmatprep.subr.bf16.mxu0 0
      %1365 = vmatpush2.bf16.xpose.msra.mxu0 0
      %1366 = vmatprep.subr.bf16.mxu0 0
      %1367 = vmatpush2.bf16.xpose.msra.mxu0 0
      %1368 = vmatprep.mubr.bf16.mxu0 0
      %1369 = vmatmul.mubr.bf16.gmra.mxu0 %v1334
      %v1370 = vpop.f32.mrf.mxu0
      %v1371 = vadd.f32 %v438, %v1370
      %v1372 = vpop.f32.mrf.mxu0
      %v1373 = vpop.f32.mrf.mxu0
      %v1374 = vadd.f32 %v438, %v1373
      %v1375 = vpop.f32.mrf.mxu0
      %1376 = vmatprep.mubr.bf16.mxu0 0
      %1377 = vmatmul.mubr.bf16.gmra.mxu0 %v1335
      %v1378 = vpop.f32.mrf.mxu0
      %v1379 = vadd.f32 %v438, %v1378
      %v1380 = vpop.f32.mrf.mxu0
      %v1381 = vpop.f32.mrf.mxu0
      %v1382 = vpop.f32.mrf.mxu0
      %1383 = vdwg.mxu0
      %v1384 = vsel %vm929, %v1371, -inf
      %1385 = vmax.xlane.f32.xlu0 %v1384
      %v1386 = vpop.xlane.xlu0 %1385
      %v1387 = vsel %vm929, %v1374, -inf
      %1388 = vmax.xlane.f32.xlu0 %v1387
      %v1389 = vpop.xlane.xlu0 %1388
      %v1390 = vsel %vm929, %v1379, -inf
      %1391 = vmax.xlane.f32.xlu0 %v1390
      %v1392 = vpop.xlane.xlu0 %1391
      %v1393 = vsub.f32 %v1371, %v1386
      %v1394 = vsub.f32 %v1374, %v1389
      %v1395 = vsub.f32 %v1379, %v1392
      %v1396 = vmul.f32 %v1393, 1.442695
      %v1397 = vpow.pop %v1396
      %v1398 = vmul.f32 %v1394, 1.442695
      %v1399 = vpow.pop %v1398
      %v1400 = vmul.f32 %v1395, 1.442695
      %v1401 = vpow.pop %v1400
      %v1402 = vsel %vm929, %v1397, 0.0
      %1403 = vadd.xlane.f32.xlu0 %v1402
      %v1404 = vpop.xlane.xlu0 %1403
      %v1405 = vsel %vm929, %v1399, 0.0
      %1406 = vadd.xlane.f32.xlu0 %v1405
      %v1407 = vpop.xlane.xlu0 %1406
      %v1408 = vsel %vm929, %v1401, 0.0
      %1409 = vadd.xlane.f32.xlu0 %v1408
      %v1410 = vpop.xlane.xlu0 %1409
      %v1411 = vrcp.pop %v1404
      %v1412 = vrcp.pop %v1407
      %v1413 = vrcp.pop %v1410
      %v1414 = vmul.f32 %v1397, %v1411
      %v1415 = vmul.f32 %v1399, %v1412
      %v1416 = vmul.f32 %v1401, %v1413
      %v1417 = vmul.f32 %v861, %v436
      %v1418 = vmul.f32 %v864, %v436
      %v1419 = vmul.f32 %v869, %v436
      %v1420 = vpack.c.bf16 %v1418, %v1417
      %v1421 = vpack.c.bf16 %v1419, %v1419
      %v1422 = vpack.c.bf16 %v1415, %v1414
      %v1423 = vpack.c.bf16 %v1416, %v1416
      %v1425 = vsel %vm929, %v1422, 0
      %v1428 = vsel %vm929, %v1423, 0
      %v1431 = vsel %vm1069, %v1421, 0
      %1433 = vmatprep.subr.bf16.mxu0 0
      %1434 = vmatpush1.bf16.msra.mxu0 0
      %1435 = vmatprep.subr.bf16.mxu0 0
      %1436 = vmatpush1.bf16.msra.mxu0 0
      %1437 = vmatprep.subr.bf16.mxu0 0
      %1438 = vmatpush1.bf16.msra.mxu0 0
      %1439 = vmatprep.subr.bf16.mxu0 0
      %1440 = vmatpush1.bf16.msra.mxu0 0
      %1441 = vmatprep.subr.bf16.mxu0 0
      %1442 = vmatpush1.bf16.msra.mxu0 0
      %1443 = vmatprep.subr.bf16.mxu0 0
      %1444 = vmatpush1.bf16.msra.mxu0 0
      %1445 = vmatprep.subr.bf16.mxu0 0
      %1446 = vmatpush1.bf16.msra.mxu0 %v1431
      %1447 = vmatprep.subr.bf16.mxu0 0
      %1448 = vmatpush1.bf16.msra.mxu0 %v1420
      %1449 = vmatprep.subr.bf16.mxu0 0
      %1450 = vmatpush2.bf16.msra.mxu0 0
      %1451 = vmatprep.subr.bf16.mxu0 0
      %1452 = vmatpush2.bf16.msra.mxu0 0
      %1453 = vmatprep.subr.bf16.mxu0 0
      %1454 = vmatpush2.bf16.msra.mxu0 0
      %1455 = vmatprep.subr.bf16.mxu0 0
      %1456 = vmatpush2.bf16.msra.mxu0 0
      %1457 = vmatprep.subr.bf16.mxu0 0
      %1458 = vmatpush2.bf16.msra.mxu0 0
      %1459 = vmatprep.subr.bf16.mxu0 0
      %1460 = vmatpush2.bf16.msra.mxu0 0
      %1461 = vmatprep.subr.bf16.mxu0 0
      %1462 = vmatpush2.bf16.msra.mxu0 0
      %1463 = vmatprep.subr.bf16.mxu0 0
      %1464 = vmatpush2.bf16.msra.mxu0 0
      %1465 = vmatprep.mubr.bf16.mxu0 0
      %1466 = vmatmul.mubr.bf16.gmra.mxu0 %v1425
      %v1467 = vpop.f32.mrf.mxu0
      %v1468 = vadd.f32 0.0, %v1467
      %v1469 = vpop.f32.mrf.mxu0
      %v1470 = vpop.f32.mrf.mxu0
      %v1471 = vadd.f32 0.0, %v1470
      %v1472 = vpop.f32.mrf.mxu0
      %1473 = vmatprep.mubr.bf16.mxu0 0
      %1474 = vmatmul.mubr.bf16.gmra.mxu0 %v1428
      %v1475 = vpop.f32.mrf.mxu0
      %v1476 = vadd.f32 0.0, %v1475
      %v1477 = vpop.f32.mrf.mxu0
      %v1478 = vpop.f32.mrf.mxu0
      %v1479 = vpop.f32.mrf.mxu0
      %1480 = vdwg.mxu0
      %v1481 = vadd.f32 %v1328, %v1468
      %v1482 = vadd.f32 %v1329, %v1471
      %v1483 = vadd.f32 %v1330, %v1476
      %v1484 = vpack.c.bf16 %v1482, %v1481
      %v1485 = vpack.c.bf16 %v1483, %v1483
      %v1486 = vld [vmem:[%s6] sm:$0xf]
      %v1487 = vld [vmem:[%s6 + $0x4] sm:$0xf]
      %v1488 = vld [vmem:[%s6 + $0x8] sm:$0xf]
      %v1489 = vld [vmem:[%s6 + $0xc] sm:$0xf]
      %v1490 = vld [vmem:[%s6 + $0x10] sm:$0xf]
      %v1491 = vld [vmem:[%s6 + $0x14] sm:$0xf]
      %v1492 = vld [vmem:[%s6 + $0x18] sm:$0xf]
      %v1493 = vld [vmem:[%s6 + $0x1c] sm:$0xf]
      %v1494 = vld [vmem:[%s6 + $0x20] sm:$0xf]
      %v1495 = vld [vmem:[%s6 + $0x24] sm:$0xf]
      %v1496 = vld [vmem:[%s6 + $0x28] sm:$0xf]
      %v1497 = vld [vmem:[%s6 + $0x2c] sm:$0xf]
      %v1498 = vld [vmem:[%s6 + $0x30] sm:$0xf]
      %v1499 = vld [vmem:[%s6 + $0x34] sm:$0xf]
      %v1500 = vld [vmem:[%s6 + $0x38] sm:$0xf]
      %v1501 = vld [vmem:[%s6 + $0x3c] sm:$0xf]
      %v1518 = vunpack.c.l.b16 %v1486
      %v1519 = vunpack.c.l.b16 %v1487
      %v1520 = vunpack.c.l.b16 %v1488
      %v1521 = vunpack.c.l.b16 %v1489
      %v1522 = vunpack.c.l.b16 %v1490
      %v1523 = vunpack.c.l.b16 %v1491
      %v1524 = vunpack.c.l.b16 %v1492
      %v1525 = vunpack.c.l.b16 %v1493
      %v1526 = vunpack.c.l.b16 %v1494
      %v1527 = vunpack.c.l.b16 %v1495
      %v1528 = vunpack.c.l.b16 %v1496
      %v1529 = vunpack.c.l.b16 %v1497
      %v1530 = vunpack.c.l.b16 %v1498
      %v1531 = vunpack.c.l.b16 %v1499
      %v1532 = vunpack.c.l.b16 %v1500
      %v1533 = vunpack.c.l.b16 %v1501
      %v1534 = vpack.c.b16 %v1519, %v1518
      %v1535 = vpack.c.b16 %v1521, %v1520
      %v1536 = vpack.c.b16 %v1523, %v1522
      %v1537 = vpack.c.b16 %v1525, %v1524
      %v1538 = vpack.c.b16 %v1527, %v1526
      %v1539 = vpack.c.b16 %v1529, %v1528
      %v1540 = vpack.c.b16 %v1531, %v1530
      %v1541 = vpack.c.b16 %v1533, %v1532
      %1550 = vmatprep.subr.bf16.mxu0 0
      %1551 = vmatpush1.bf16.msra.mxu0 %v1541
      %1552 = vmatprep.subr.bf16.mxu0 0
      %1553 = vmatpush1.bf16.msra.mxu0 %v1540
      %1554 = vmatprep.subr.bf16.mxu0 0
      %1555 = vmatpush1.bf16.msra.mxu0 %v1539
      %1556 = vmatprep.subr.bf16.mxu0 0
      %1557 = vmatpush1.bf16.msra.mxu0 %v1538
      %1558 = vmatprep.subr.bf16.mxu0 0
      %1559 = vmatpush1.bf16.msra.mxu0 %v1537
      %1560 = vmatprep.subr.bf16.mxu0 0
      %1561 = vmatpush1.bf16.msra.mxu0 %v1536
      %1562 = vmatprep.subr.bf16.mxu0 0
      %1563 = vmatpush1.bf16.msra.mxu0 %v1535
      %1564 = vmatprep.subr.bf16.mxu0 0
      %1565 = vmatpush1.bf16.msra.mxu0 %v1534
      %1566 = vmatprep.subr.bf16.mxu0 0
      %1567 = vmatpush2.bf16.msra.mxu0 0
      %1568 = vmatprep.subr.bf16.mxu0 0
      %1569 = vmatpush2.bf16.msra.mxu0 0
      %1570 = vmatprep.subr.bf16.mxu0 0
      %1571 = vmatpush2.bf16.msra.mxu0 0
      %1572 = vmatprep.subr.bf16.mxu0 0
      %1573 = vmatpush2.bf16.msra.mxu0 0
      %1574 = vmatprep.subr.bf16.mxu0 0
      %1575 = vmatpush2.bf16.msra.mxu0 0
      %1576 = vmatprep.subr.bf16.mxu0 0
      %1577 = vmatpush2.bf16.msra.mxu0 0
      %1578 = vmatprep.subr.bf16.mxu0 0
      %1579 = vmatpush2.bf16.msra.mxu0 0
      %1580 = vmatprep.subr.bf16.mxu0 0
      %1581 = vmatpush2.bf16.msra.mxu0 0
      %1582 = vmatprep.mubr.bf16.mxu0 0
      %1583 = vmatmul.mubr.bf16.gmra.mxu0 %v1484
      %v1584 = vpop.f32.mrf.mxu0
      %v1585 = vadd.f32 0.0, %v1584
      %v1586 = vpop.f32.mrf.mxu0
      %v1587 = vpop.f32.mrf.mxu0
      %v1588 = vadd.f32 0.0, %v1587
      %v1589 = vpop.f32.mrf.mxu0
      %1590 = vmatprep.mubr.bf16.mxu0 0
      %1591 = vmatmul.mubr.bf16.gmra.mxu0 %v1485
      %v1592 = vpop.f32.mrf.mxu0
      %v1593 = vadd.f32 0.0, %v1592
      %v1594 = vpop.f32.mrf.mxu0
      %v1595 = vpop.f32.mrf.mxu0
      %v1596 = vpop.f32.mrf.mxu0
      %1597 = vdwg.mxu0
      %v1598 = vadd.f32 %v546, %v1585
      %v1599 = vadd.f32 %v549, %v1588
      %v1600 = vadd.f32 %v554, %v1593
      %v1601 = vlaneseq
      %v1602 = vshrl.u32 %v1601, 7
      %v1603 = vsub.s32 2, %v1602
      %v1604 = vrot.slane %v559, %v1603
      %v1605 = vadd.f32 %v1598, %v1604
      %v1606 = vadd.f32 %v1599, %v1604
      %v1607 = vadd.f32 %v1600, %v1604
      %v1608 = vmul.f32 %v1605, %v417
      %v1609 = vmul.f32 %v1606, %v417
      %v1610 = vmul.f32 %v1607, %v417
      %1611 = vadd.xlane.f32.xlu0 %v1608
      %v1612 = vpop.xlane.xlu0 %1611
      %1613 = vadd.xlane.f32.xlu0 %v1609
      %v1614 = vpop.xlane.xlu0 %1613
      %1615 = vadd.xlane.f32.xlu0 %v1610
      %v1616 = vpop.xlane.xlu0 %1615
      %v1617 = vmul.f32 %v1612, 0.03125
      %v1618 = vmul.f32 %v1614, 0.03125
      %v1619 = vmul.f32 %v1616, 0.03125
      %v1620 = vsub.f32 %v1605, %v1617
      %v1621 = vsub.f32 %v1606, %v1618
      %v1622 = vsub.f32 %v1607, %v1619
      %v1623 = vmul.f32 %v1620, %v417
      %v1624 = vmul.f32 %v1621, %v417
      %v1625 = vmul.f32 %v1622, %v417
      %v1626 = vmul.f32 %v1623, %v1623
      %v1627 = vmul.f32 %v1624, %v1624
      %v1628 = vmul.f32 %v1625, %v1625
      %1629 = vadd.xlane.f32.xlu0 %v1626
      %v1630 = vpop.xlane.xlu0 %1629
      %1631 = vadd.xlane.f32.xlu0 %v1627
      %v1632 = vpop.xlane.xlu0 %1631
      %1633 = vadd.xlane.f32.xlu0 %v1628
      %v1634 = vpop.xlane.xlu0 %1633
      %v1635 = vmul.f32 %v1630, 0.03125
      %v1636 = vmul.f32 %v1632, 0.03125
      %v1637 = vmul.f32 %v1634, 0.03125
      %v1638 = vadd.f32 %v1635, 1e-05
      %v1639 = vadd.f32 %v1636, 1e-05
      %v1640 = vadd.f32 %v1637, 1e-05
      %v1641 = vrsqrt.pop %v1638
      %v1642 = vrsqrt.pop %v1639
      %v1643 = vrsqrt.pop %v1640
      %v1644 = vmul.f32 %v1623, %v1641
      %v1645 = vmul.f32 %v1624, %v1642
      %v1646 = vmul.f32 %v1625, %v1643
      %v1647 = vlaneseq
      %v1648 = vshrl.u32 %v1647, 7
      %v1649 = vsub.s32 3, %v1648
      %v1650 = vrot.slane %v559, %v1649
      %v1651 = vmul.f32 %v1644, %v1650
      %v1652 = vmul.f32 %v1645, %v1650
      %v1653 = vmul.f32 %v1646, %v1650
      %v1654 = vlaneseq
      %v1655 = vshrl.u32 %v1654, 7
      %v1656 = vsub.s32 4, %v1655
      %v1657 = vrot.slane %v559, %v1656
      %v1658 = vadd.f32 %v1651, %v1657
      %v1659 = vadd.f32 %v1652, %v1657
      %v1660 = vadd.f32 %v1653, %v1657
      %v1661 = vpack.c.bf16 %v1659, %v1658
      %v1662 = vpack.c.bf16 %v1660, %v1660
      %v1663 = vld [vmem:[%s7] sm:$0xf]
      %v1664 = vld [vmem:[%s7 + $0x4] sm:$0xf]
      %v1665 = vld [vmem:[%s7 + $0x8] sm:$0xf]
      %v1666 = vld [vmem:[%s7 + $0xc] sm:$0xf]
      %v1667 = vld [vmem:[%s7 + $0x10] sm:$0xf]
      %v1668 = vld [vmem:[%s7 + $0x14] sm:$0xf]
      %v1669 = vld [vmem:[%s7 + $0x18] sm:$0xf]
      %v1670 = vld [vmem:[%s7 + $0x1c] sm:$0xf]
      %v1671 = vld [vmem:[%s7 + $0x20] sm:$0xf]
      %v1672 = vld [vmem:[%s7 + $0x24] sm:$0xf]
      %v1673 = vld [vmem:[%s7 + $0x28] sm:$0xf]
      %v1674 = vld [vmem:[%s7 + $0x2c] sm:$0xf]
      %v1675 = vld [vmem:[%s7 + $0x30] sm:$0xf]
      %v1676 = vld [vmem:[%s7 + $0x34] sm:$0xf]
      %v1677 = vld [vmem:[%s7 + $0x38] sm:$0xf]
      %v1678 = vld [vmem:[%s7 + $0x3c] sm:$0xf]
      %v1679 = vld [vmem:[%s4] sm:$0x1]
      %v1681 = vlaneseq
      %v1682 = vshrl.u32 %v1681, 7
      %v1683 = vsub.s32 0, %v1682
      %v1684 = vrot.slane %v1679, %v1683
      %v1702 = vunpack.c.l.b16 %v1663
      %v1703 = vunpack.c.l.b16 %v1664
      %v1704 = vunpack.c.l.b16 %v1665
      %v1705 = vunpack.c.l.b16 %v1666
      %v1706 = vunpack.c.l.b16 %v1667
      %v1707 = vunpack.c.l.b16 %v1668
      %v1708 = vunpack.c.l.b16 %v1669
      %v1709 = vunpack.c.l.b16 %v1670
      %v1710 = vunpack.c.l.b16 %v1671
      %v1711 = vunpack.c.l.b16 %v1672
      %v1712 = vunpack.c.l.b16 %v1673
      %v1713 = vunpack.c.l.b16 %v1674
      %v1714 = vunpack.c.l.b16 %v1675
      %v1715 = vunpack.c.l.b16 %v1676
      %v1716 = vunpack.c.l.b16 %v1677
      %v1717 = vunpack.c.l.b16 %v1678
      %v1718 = vpack.c.b16 %v1703, %v1702
      %v1719 = vpack.c.b16 %v1705, %v1704
      %v1720 = vpack.c.b16 %v1707, %v1706
      %v1721 = vpack.c.b16 %v1709, %v1708
      %v1722 = vpack.c.b16 %v1711, %v1710
      %v1723 = vpack.c.b16 %v1713, %v1712
      %v1724 = vpack.c.b16 %v1715, %v1714
      %v1725 = vpack.c.b16 %v1717, %v1716
      %1734 = vmatprep.subr.bf16.mxu0 0
      %1735 = vmatpush1.bf16.msra.mxu0 %v1725
      %1736 = vmatprep.subr.bf16.mxu0 0
      %1737 = vmatpush1.bf16.msra.mxu0 %v1724
      %1738 = vmatprep.subr.bf16.mxu0 0
      %1739 = vmatpush1.bf16.msra.mxu0 %v1723
      %1740 = vmatprep.subr.bf16.mxu0 0
      %1741 = vmatpush1.bf16.msra.mxu0 %v1722
      %1742 = vmatprep.subr.bf16.mxu0 0
      %1743 = vmatpush1.bf16.msra.mxu0 %v1721
      %1744 = vmatprep.subr.bf16.mxu0 0
      %1745 = vmatpush1.bf16.msra.mxu0 %v1720
      %1746 = vmatprep.subr.bf16.mxu0 0
      %1747 = vmatpush1.bf16.msra.mxu0 %v1719
      %1748 = vmatprep.subr.bf16.mxu0 0
      %1749 = vmatpush1.bf16.msra.mxu0 %v1718
      %1750 = vmatprep.subr.bf16.mxu0 0
      %1751 = vmatpush2.bf16.msra.mxu0 0
      %1752 = vmatprep.subr.bf16.mxu0 0
      %1753 = vmatpush2.bf16.msra.mxu0 0
      %1754 = vmatprep.subr.bf16.mxu0 0
      %1755 = vmatpush2.bf16.msra.mxu0 0
      %1756 = vmatprep.subr.bf16.mxu0 0
      %1757 = vmatpush2.bf16.msra.mxu0 0
      %1758 = vmatprep.subr.bf16.mxu0 0
      %1759 = vmatpush2.bf16.msra.mxu0 0
      %1760 = vmatprep.subr.bf16.mxu0 0
      %1761 = vmatpush2.bf16.msra.mxu0 0
      %1762 = vmatprep.subr.bf16.mxu0 0
      %1763 = vmatpush2.bf16.msra.mxu0 0
      %1764 = vmatprep.subr.bf16.mxu0 0
      %1765 = vmatpush2.bf16.msra.mxu0 0
      %1766 = vmatprep.mubr.bf16.mxu0 0
      %1767 = vmatmul.mubr.bf16.gmra.mxu0 %v1661
      %v1768 = vpop.f32.mrf.mxu0
      %v1769 = vadd.f32 %v1684, %v1768
      %v1770 = vpop.f32.mrf.mxu0
      %v1771 = vpop.f32.mrf.mxu0
      %v1772 = vadd.f32 %v1684, %v1771
      %v1773 = vpop.f32.mrf.mxu0
      %1774 = vmatprep.mubr.bf16.mxu0 0
      %1775 = vmatmul.mubr.bf16.gmra.mxu0 %v1662
      %v1776 = vpop.f32.mrf.mxu0
      %v1777 = vadd.f32 %v1684, %v1776
      %v1778 = vpop.f32.mrf.mxu0
      %v1779 = vpop.f32.mrf.mxu0
      %v1780 = vpop.f32.mrf.mxu0
      %1781 = vdwg.mxu0
      %v1782 = vmul.f32 %v1769, 0.70710677
      %v1783 = vmul.f32 %v1772, 0.70710677
      %v1784 = vmul.f32 %v1777, 0.70710677
      %v1785 = vand.u32 2147483647, %v1782
      %v1786 = vand.u32 2147483647, %v1783
      %v1787 = vand.u32 2147483647, %v1784
      %v1788 = vmul.f32 %v1785, 0.3275911
      %v1789 = vmul.f32 %v1786, 0.3275911
      %v1790 = vmul.f32 %v1787, 0.3275911
      %v1791 = vadd.f32 %v1788, 1.0
      %v1792 = vadd.f32 %v1789, 1.0
      %v1793 = vadd.f32 %v1790, 1.0
      %v1794 = vrcp.pop %v1791
      %v1795 = vrcp.pop %v1792
      %v1796 = vrcp.pop %v1793
      %v1797 = vmul.f32 %v1794, 1.0614054
      %v1798 = vmul.f32 %v1795, 1.0614054
      %v1799 = vmul.f32 %v1796, 1.0614054
      %v1800 = vadd.f32 %v1797, -1.4531521
      %v1801 = vadd.f32 %v1798, -1.4531521
      %v1802 = vadd.f32 %v1799, -1.4531521
      %v1803 = vmul.f32 %v1800, %v1794
      %v1804 = vmul.f32 %v1801, %v1795
      %v1805 = vmul.f32 %v1802, %v1796
      %v1806 = vadd.f32 %v1803, 1.4214138
      %v1807 = vadd.f32 %v1804, 1.4214138
      %v1808 = vadd.f32 %v1805, 1.4214138
      %v1809 = vmul.f32 %v1806, %v1794
      %v1810 = vmul.f32 %v1807, %v1795
      %v1811 = vmul.f32 %v1808, %v1796
      %v1812 = vadd.f32 %v1809, -0.28449672
      %v1813 = vadd.f32 %v1810, -0.28449672
      %v1814 = vadd.f32 %v1811, -0.28449672
      %v1815 = vmul.f32 %v1812, %v1794
      %v1816 = vmul.f32 %v1813, %v1795
      %v1817 = vmul.f32 %v1814, %v1796
      %v1818 = vadd.f32 %v1815, 0.2548296
      %v1819 = vadd.f32 %v1816, 0.2548296
      %v1820 = vadd.f32 %v1817, 0.2548296
      %v1821 = vmul.f32 %v1818, %v1794
      %v1822 = vmul.f32 %v1819, %v1795
      %v1823 = vmul.f32 %v1820, %v1796
      %v1824 = vsub.f32 0.0, %v1785
      %v1825 = vsub.f32 0.0, %v1786
      %v1826 = vsub.f32 0.0, %v1787
      %v1827 = vmul.f32 %v1824, %v1785
      %v1828 = vmul.f32 %v1825, %v1786
      %v1829 = vmul.f32 %v1826, %v1787
      %v1830 = vmul.f32 %v1827, 1.442695
      %v1831 = vpow.pop %v1830
      %v1832 = vmul.f32 %v1828, 1.442695
      %v1833 = vpow.pop %v1832
      %v1834 = vmul.f32 %v1829, 1.442695
      %v1835 = vpow.pop %v1834
      %v1836 = vmul.f32 %v1821, %v1831
      %v1837 = vmul.f32 %v1822, %v1833
      %v1838 = vmul.f32 %v1823, %v1835
      %v1839 = vsub.f32 1.0, %v1836
      %v1840 = vsub.f32 1.0, %v1837
      %v1841 = vsub.f32 1.0, %v1838
      %vm1842 = vcmp.ge.f32.partialorder %v1782, 0.0
      %vm1843 = vcmp.ge.f32.partialorder %v1783, 0.0
      %vm1844 = vcmp.ge.f32.partialorder %v1784, 0.0
      %v1845 = vsub.f32 0.0, %v1839
      %v1846 = vsub.f32 0.0, %v1840
      %v1847 = vsub.f32 0.0, %v1841
      %v1848 = vsel %vm1842, %v1839, %v1845
      %v1849 = vsel %vm1843, %v1840, %v1846
      %v1850 = vsel %vm1844, %v1841, %v1847
      %v1851 = vmul.f32 %v1769, 0.5
      %v1852 = vmul.f32 %v1772, 0.5
      %v1853 = vmul.f32 %v1777, 0.5
      %v1854 = vadd.f32 %v1848, 1.0
      %v1855 = vadd.f32 %v1849, 1.0
      %v1856 = vadd.f32 %v1850, 1.0
      %v1857 = vmul.f32 %v1851, %v1854
      %v1858 = vmul.f32 %v1852, %v1855
      %v1859 = vmul.f32 %v1853, %v1856
      %v1860 = vpack.c.bf16 %v1858, %v1857
      %v1861 = vpack.c.bf16 %v1859, %v1859
      %v1862 = vld [vmem:[%s8] sm:$0xf]
      %v1863 = vld [vmem:[%s8 + $0x4] sm:$0xf]
      %v1864 = vld [vmem:[%s8 + $0x8] sm:$0xf]
      %v1865 = vld [vmem:[%s8 + $0xc] sm:$0xf]
      %v1866 = vld [vmem:[%s8 + $0x10] sm:$0xf]
      %v1867 = vld [vmem:[%s8 + $0x14] sm:$0xf]
      %v1868 = vld [vmem:[%s8 + $0x18] sm:$0xf]
      %v1869 = vld [vmem:[%s8 + $0x1c] sm:$0xf]
      %v1870 = vld [vmem:[%s8 + $0x20] sm:$0xf]
      %v1871 = vld [vmem:[%s8 + $0x24] sm:$0xf]
      %v1872 = vld [vmem:[%s8 + $0x28] sm:$0xf]
      %v1873 = vld [vmem:[%s8 + $0x2c] sm:$0xf]
      %v1874 = vld [vmem:[%s8 + $0x30] sm:$0xf]
      %v1875 = vld [vmem:[%s8 + $0x34] sm:$0xf]
      %v1876 = vld [vmem:[%s8 + $0x38] sm:$0xf]
      %v1877 = vld [vmem:[%s8 + $0x3c] sm:$0xf]
      %v1894 = vunpack.c.l.b16 %v1862
      %v1895 = vunpack.c.l.b16 %v1863
      %v1896 = vunpack.c.l.b16 %v1864
      %v1897 = vunpack.c.l.b16 %v1865
      %v1898 = vunpack.c.l.b16 %v1866
      %v1899 = vunpack.c.l.b16 %v1867
      %v1900 = vunpack.c.l.b16 %v1868
      %v1901 = vunpack.c.l.b16 %v1869
      %v1902 = vunpack.c.l.b16 %v1870
      %v1903 = vunpack.c.l.b16 %v1871
      %v1904 = vunpack.c.l.b16 %v1872
      %v1905 = vunpack.c.l.b16 %v1873
      %v1906 = vunpack.c.l.b16 %v1874
      %v1907 = vunpack.c.l.b16 %v1875
      %v1908 = vunpack.c.l.b16 %v1876
      %v1909 = vunpack.c.l.b16 %v1877
      %v1910 = vpack.c.b16 %v1895, %v1894
      %v1911 = vpack.c.b16 %v1897, %v1896
      %v1912 = vpack.c.b16 %v1899, %v1898
      %v1913 = vpack.c.b16 %v1901, %v1900
      %v1914 = vpack.c.b16 %v1903, %v1902
      %v1915 = vpack.c.b16 %v1905, %v1904
      %v1916 = vpack.c.b16 %v1907, %v1906
      %v1917 = vpack.c.b16 %v1909, %v1908
      %1926 = vmatprep.subr.bf16.mxu0 0
      %1927 = vmatpush1.bf16.msra.mxu0 %v1917
      %1928 = vmatprep.subr.bf16.mxu0 0
      %1929 = vmatpush1.bf16.msra.mxu0 %v1916
      %1930 = vmatprep.subr.bf16.mxu0 0
      %1931 = vmatpush1.bf16.msra.mxu0 %v1915
      %1932 = vmatprep.subr.bf16.mxu0 0
      %1933 = vmatpush1.bf16.msra.mxu0 %v1914
      %1934 = vmatprep.subr.bf16.mxu0 0
      %1935 = vmatpush1.bf16.msra.mxu0 %v1913
      %1936 = vmatprep.subr.bf16.mxu0 0
      %1937 = vmatpush1.bf16.msra.mxu0 %v1912
      %1938 = vmatprep.subr.bf16.mxu0 0
      %1939 = vmatpush1.bf16.msra.mxu0 %v1911
      %1940 = vmatprep.subr.bf16.mxu0 0
      %1941 = vmatpush1.bf16.msra.mxu0 %v1910
      %1942 = vmatprep.subr.bf16.mxu0 0
      %1943 = vmatpush2.bf16.msra.mxu0 0
      %1944 = vmatprep.subr.bf16.mxu0 0
      %1945 = vmatpush2.bf16.msra.mxu0 0
      %1946 = vmatprep.subr.bf16.mxu0 0
      %1947 = vmatpush2.bf16.msra.mxu0 0
      %1948 = vmatprep.subr.bf16.mxu0 0
      %1949 = vmatpush2.bf16.msra.mxu0 0
      %1950 = vmatprep.subr.bf16.mxu0 0
      %1951 = vmatpush2.bf16.msra.mxu0 0
      %1952 = vmatprep.subr.bf16.mxu0 0
      %1953 = vmatpush2.bf16.msra.mxu0 0
      %1954 = vmatprep.subr.bf16.mxu0 0
      %1955 = vmatpush2.bf16.msra.mxu0 0
      %1956 = vmatprep.subr.bf16.mxu0 0
      %1957 = vmatpush2.bf16.msra.mxu0 0
      %1958 = vmatprep.mubr.bf16.mxu0 0
      %1959 = vmatmul.mubr.bf16.gmra.mxu0 %v1860
      %v1960 = vpop.f32.mrf.mxu0
      %v1961 = vadd.f32 0.0, %v1960
      %v1962 = vpop.f32.mrf.mxu0
      %v1963 = vpop.f32.mrf.mxu0
      %v1964 = vadd.f32 0.0, %v1963
      %v1965 = vpop.f32.mrf.mxu0
      %1966 = vmatprep.mubr.bf16.mxu0 0
      %1967 = vmatmul.mubr.bf16.gmra.mxu0 %v1861
      %v1968 = vpop.f32.mrf.mxu0
      %v1969 = vadd.f32 0.0, %v1968
      %v1970 = vpop.f32.mrf.mxu0
      %v1971 = vpop.f32.mrf.mxu0
      %v1972 = vpop.f32.mrf.mxu0
      %1973 = vdwg.mxu0
      %v1974 = vadd.f32 %v1605, %v1961
      %v1975 = vadd.f32 %v1606, %v1964
      %v1976 = vadd.f32 %v1607, %v1969
      %v1977 = vlaneseq
      %v1978 = vshrl.u32 %v1977, 7
      %v1979 = vsub.s32 5, %v1978
      %v1980 = vrot.slane %v559, %v1979
      %v1981 = vadd.f32 %v1974, %v1980
      %v1982 = vadd.f32 %v1975, %v1980
      %v1983 = vadd.f32 %v1976, %v1980
      %s1984 = scalar_lea.vmem %s3, 8
      %v1985 = vld [vmem:[%s1984] sm:$0x3f]
      %v1986 = vmul.f32 %v1981, %v417
      %v1987 = vmul.f32 %v1982, %v417
      %v1988 = vmul.f32 %v1983, %v417
      %1989 = vadd.xlane.f32.xlu0 %v1986
      %v1990 = vpop.xlane.xlu0 %1989
      %1991 = vadd.xlane.f32.xlu0 %v1987
      %v1992 = vpop.xlane.xlu0 %1991
      %1993 = vadd.xlane.f32.xlu0 %v1988
      %v1994 = vpop.xlane.xlu0 %1993
      %v1995 = vmul.f32 %v1990, 0.03125
      %v1996 = vmul.f32 %v1992, 0.03125
      %v1997 = vmul.f32 %v1994, 0.03125
      %v1998 = vsub.f32 %v1981, %v1995
      %v1999 = vsub.f32 %v1982, %v1996
      %v2000 = vsub.f32 %v1983, %v1997
      %v2001 = vmul.f32 %v1998, %v417
      %v2002 = vmul.f32 %v1999, %v417
      %v2003 = vmul.f32 %v2000, %v417
      %v2004 = vmul.f32 %v2001, %v2001
      %v2005 = vmul.f32 %v2002, %v2002
      %v2006 = vmul.f32 %v2003, %v2003
      %2007 = vadd.xlane.f32.xlu0 %v2004
      %v2008 = vpop.xlane.xlu0 %2007
      %2009 = vadd.xlane.f32.xlu0 %v2005
      %v2010 = vpop.xlane.xlu0 %2009
      %2011 = vadd.xlane.f32.xlu0 %v2006
      %v2012 = vpop.xlane.xlu0 %2011
      %v2013 = vmul.f32 %v2008, 0.03125
      %v2014 = vmul.f32 %v2010, 0.03125
      %v2015 = vmul.f32 %v2012, 0.03125
      %v2016 = vadd.f32 %v2013, 1e-05
      %v2017 = vadd.f32 %v2014, 1e-05
      %v2018 = vadd.f32 %v2015, 1e-05
      %v2019 = vrsqrt.pop %v2016
      %v2020 = vrsqrt.pop %v2017
      %v2021 = vrsqrt.pop %v2018
      %v2022 = vmul.f32 %v2001, %v2019
      %v2023 = vmul.f32 %v2002, %v2020
      %v2024 = vmul.f32 %v2003, %v2021
      %v2025 = vlaneseq
      %v2026 = vshrl.u32 %v2025, 7
      %v2027 = vsub.s32 0, %v2026
      %v2028 = vrot.slane %v1985, %v2027
      %v2029 = vmul.f32 %v2022, %v2028
      %v2030 = vmul.f32 %v2023, %v2028
      %v2031 = vmul.f32 %v2024, %v2028
      %v2032 = vlaneseq
      %v2033 = vshrl.u32 %v2032, 7
      %v2034 = vsub.s32 1, %v2033
      %v2035 = vrot.slane %v1985, %v2034
      %v2036 = vadd.f32 %v2029, %v2035
      %v2037 = vadd.f32 %v2030, %v2035
      %v2038 = vadd.f32 %v2031, %v2035
      %v2039 = vpack.c.bf16 %v2037, %v2036
      %v2040 = vpack.c.bf16 %v2038, %v2038
      %s2041 = scalar_lea.vmem %s5, 192
      %v2042 = vld [vmem:[%s2041] sm:$0xff]
      %v2043 = vld [vmem:[%s2041 + $0x8] sm:$0xf]
      %v2044 = vld [vmem:[%s2041 + $0xc] sm:$0xff]
      %v2045 = vld [vmem:[%s2041 + $0x14] sm:$0xf]
      %v2046 = vld [vmem:[%s2041 + $0x18] sm:$0xff]
      %v2047 = vld [vmem:[%s2041 + $0x20] sm:$0xf]
      %v2048 = vld [vmem:[%s2041 + $0x24] sm:$0xff]
      %v2049 = vld [vmem:[%s2041 + $0x2c] sm:$0xf]
      %v2050 = vld [vmem:[%s2041 + $0x30] sm:$0xff]
      %v2051 = vld [vmem:[%s2041 + $0x38] sm:$0xf]
      %v2052 = vld [vmem:[%s2041 + $0x3c] sm:$0xff]
      %v2053 = vld [vmem:[%s2041 + $0x44] sm:$0xf]
      %v2054 = vld [vmem:[%s2041 + $0x48] sm:$0xff]
      %v2055 = vld [vmem:[%s2041 + $0x50] sm:$0xf]
      %v2056 = vld [vmem:[%s2041 + $0x54] sm:$0xff]
      %v2057 = vld [vmem:[%s2041 + $0x5c] sm:$0xf]
      %v2058 = vld [vmem:[%s2041 + $0x60] sm:$0xff]
      %v2059 = vld [vmem:[%s2041 + $0x68] sm:$0xf]
      %v2060 = vld [vmem:[%s2041 + $0x6c] sm:$0xff]
      %v2061 = vld [vmem:[%s2041 + $0x74] sm:$0xf]
      %v2062 = vld [vmem:[%s2041 + $0x78] sm:$0xff]
      %v2063 = vld [vmem:[%s2041 + $0x80] sm:$0xf]
      %v2064 = vld [vmem:[%s2041 + $0x84] sm:$0xff]
      %v2065 = vld [vmem:[%s2041 + $0x8c] sm:$0xf]
      %v2066 = vld [vmem:[%s2041 + $0x90] sm:$0xff]
      %v2067 = vld [vmem:[%s2041 + $0x98] sm:$0xf]
      %v2068 = vld [vmem:[%s2041 + $0x9c] sm:$0xff]
      %v2069 = vld [vmem:[%s2041 + $0xa4] sm:$0xf]
      %v2070 = vld [vmem:[%s2041 + $0xa8] sm:$0xff]
      %v2071 = vld [vmem:[%s2041 + $0xb0] sm:$0xf]
      %v2072 = vld [vmem:[%s2041 + $0xb4] sm:$0xff]
      %v2073 = vld [vmem:[%s2041 + $0xbc] sm:$0xf]
      %v2106 = vunpack.c.l.b16 %v2042
      %v2107 = vunpack.c.h.b16 %v2042
      %v2108 = vunpack.c.l.b16 %v2043
      %v2109 = vunpack.c.l.b16 %v2044
      %v2110 = vunpack.c.h.b16 %v2044
      %v2111 = vunpack.c.l.b16 %v2045
      %v2112 = vunpack.c.l.b16 %v2046
      %v2113 = vunpack.c.h.b16 %v2046
      %v2114 = vunpack.c.l.b16 %v2047
      %v2115 = vunpack.c.l.b16 %v2048
      %v2116 = vunpack.c.h.b16 %v2048
      %v2117 = vunpack.c.l.b16 %v2049
      %v2118 = vunpack.c.l.b16 %v2050
      %v2119 = vunpack.c.h.b16 %v2050
      %v2120 = vunpack.c.l.b16 %v2051
      %v2121 = vunpack.c.l.b16 %v2052
      %v2122 = vunpack.c.h.b16 %v2052
      %v2123 = vunpack.c.l.b16 %v2053
      %v2124 = vunpack.c.l.b16 %v2054
      %v2125 = vunpack.c.h.b16 %v2054
      %v2126 = vunpack.c.l.b16 %v2055
      %v2127 = vunpack.c.l.b16 %v2056
      %v2128 = vunpack.c.h.b16 %v2056
      %v2129 = vunpack.c.l.b16 %v2057
      %v2130 = vunpack.c.l.b16 %v2058
      %v2131 = vunpack.c.h.b16 %v2058
      %v2132 = vunpack.c.l.b16 %v2059
      %v2133 = vunpack.c.l.b16 %v2060
      %v2134 = vunpack.c.h.b16 %v2060
      %v2135 = vunpack.c.l.b16 %v2061
      %v2136 = vunpack.c.l.b16 %v2062
      %v2137 = vunpack.c.h.b16 %v2062
      %v2138 = vunpack.c.l.b16 %v2063
      %v2139 = vunpack.c.l.b16 %v2064
      %v2140 = vunpack.c.h.b16 %v2064
      %v2141 = vunpack.c.l.b16 %v2065
      %v2142 = vunpack.c.l.b16 %v2066
      %v2143 = vunpack.c.h.b16 %v2066
      %v2144 = vunpack.c.l.b16 %v2067
      %v2145 = vunpack.c.l.b16 %v2068
      %v2146 = vunpack.c.h.b16 %v2068
      %v2147 = vunpack.c.l.b16 %v2069
      %v2148 = vunpack.c.l.b16 %v2070
      %v2149 = vunpack.c.h.b16 %v2070
      %v2150 = vunpack.c.l.b16 %v2071
      %v2151 = vunpack.c.l.b16 %v2072
      %v2152 = vunpack.c.h.b16 %v2072
      %v2153 = vunpack.c.l.b16 %v2073
      %v2154 = vpack.c.b16 %v2109, %v2106
      %v2155 = vpack.c.b16 %v2110, %v2107
      %v2156 = vpack.c.b16 %v2111, %v2108
      %v2157 = vpack.c.b16 %v2115, %v2112
      %v2158 = vpack.c.b16 %v2116, %v2113
      %v2159 = vpack.c.b16 %v2117, %v2114
      %v2160 = vpack.c.b16 %v2121, %v2118
      %v2161 = vpack.c.b16 %v2122, %v2119
      %v2162 = vpack.c.b16 %v2123, %v2120
      %v2163 = vpack.c.b16 %v2127, %v2124
      %v2164 = vpack.c.b16 %v2128, %v2125
      %v2165 = vpack.c.b16 %v2129, %v2126
      %v2166 = vpack.c.b16 %v2133, %v2130
      %v2167 = vpack.c.b16 %v2134, %v2131
      %v2168 = vpack.c.b16 %v2135, %v2132
      %v2169 = vpack.c.b16 %v2139, %v2136
      %v2170 = vpack.c.b16 %v2140, %v2137
      %v2171 = vpack.c.b16 %v2141, %v2138
      %v2172 = vpack.c.b16 %v2145, %v2142
      %v2173 = vpack.c.b16 %v2146, %v2143
      %v2174 = vpack.c.b16 %v2147, %v2144
      %v2175 = vpack.c.b16 %v2151, %v2148
      %v2176 = vpack.c.b16 %v2152, %v2149
      %v2177 = vpack.c.b16 %v2153, %v2150
      %2202 = vmatprep.subr.bf16.mxu0 %v2176
      %2203 = vmatpush1.bf16.msra.mxu0 %v2175
      %2204 = vmatprep.subr.bf16.mxu0 %v2173
      %2205 = vmatpush1.bf16.msra.mxu0 %v2172
      %2206 = vmatprep.subr.bf16.mxu0 %v2170
      %2207 = vmatpush1.bf16.msra.mxu0 %v2169
      %2208 = vmatprep.subr.bf16.mxu0 %v2167
      %2209 = vmatpush1.bf16.msra.mxu0 %v2166
      %2210 = vmatprep.subr.bf16.mxu0 %v2164
      %2211 = vmatpush1.bf16.msra.mxu0 %v2163
      %2212 = vmatprep.subr.bf16.mxu0 %v2161
      %2213 = vmatpush1.bf16.msra.mxu0 %v2160
      %2214 = vmatprep.subr.bf16.mxu0 %v2158
      %2215 = vmatpush1.bf16.msra.mxu0 %v2157
      %2216 = vmatprep.subr.bf16.mxu0 %v2155
      %2217 = vmatpush1.bf16.msra.mxu0 %v2154
      %2218 = vmatprep.subr.bf16.mxu0 0
      %2219 = vmatpush2.bf16.msra.mxu0 0
      %2220 = vmatprep.subr.bf16.mxu0 0
      %2221 = vmatpush2.bf16.msra.mxu0 0
      %2222 = vmatprep.subr.bf16.mxu0 0
      %2223 = vmatpush2.bf16.msra.mxu0 0
      %2224 = vmatprep.subr.bf16.mxu0 0
      %2225 = vmatpush2.bf16.msra.mxu0 0
      %2226 = vmatprep.subr.bf16.mxu0 0
      %2227 = vmatpush2.bf16.msra.mxu0 0
      %2228 = vmatprep.subr.bf16.mxu0 0
      %2229 = vmatpush2.bf16.msra.mxu0 0
      %2230 = vmatprep.subr.bf16.mxu0 0
      %2231 = vmatpush2.bf16.msra.mxu0 0
      %2232 = vmatprep.subr.bf16.mxu0 0
      %2233 = vmatpush2.bf16.msra.mxu0 0
      %2234 = vmatprep.mubr.bf16.mxu0 0
      %2235 = vmatmul.mubr.bf16.gmra.mxu0 %v2039
      %v2236 = vpop.f32.mrf.mxu0
      %v2237 = vadd.f32 0.0, %v2236
      %v2238 = vpop.f32.mrf.mxu0
      %v2239 = vadd.f32 0.0, %v2238
      %v2240 = vpop.f32.mrf.mxu0
      %v2241 = vadd.f32 0.0, %v2240
      %v2242 = vpop.f32.mrf.mxu0
      %v2243 = vadd.f32 0.0, %v2242
      %2244 = vmatprep.mubr.bf16.mxu0 0
      %2245 = vmatmul.mubr.bf16.gmra.mxu0 %v2040
      %v2246 = vpop.f32.mrf.mxu0
      %v2247 = vadd.f32 0.0, %v2246
      %v2248 = vpop.f32.mrf.mxu0
      %v2249 = vadd.f32 0.0, %v2248
      %v2250 = vpop.f32.mrf.mxu0
      %v2251 = vpop.f32.mrf.mxu0
      %2252 = vdwg.mxu0
      %2253 = vmatprep.subr.bf16.mxu0 0
      %2254 = vmatpush1.bf16.msra.mxu0 %v2177
      %2255 = vmatprep.subr.bf16.mxu0 0
      %2256 = vmatpush1.bf16.msra.mxu0 %v2174
      %2257 = vmatprep.subr.bf16.mxu0 0
      %2258 = vmatpush1.bf16.msra.mxu0 %v2171
      %2259 = vmatprep.subr.bf16.mxu0 0
      %2260 = vmatpush1.bf16.msra.mxu0 %v2168
      %2261 = vmatprep.subr.bf16.mxu0 0
      %2262 = vmatpush1.bf16.msra.mxu0 %v2165
      %2263 = vmatprep.subr.bf16.mxu0 0
      %2264 = vmatpush1.bf16.msra.mxu0 %v2162
      %2265 = vmatprep.subr.bf16.mxu0 0
      %2266 = vmatpush1.bf16.msra.mxu0 %v2159
      %2267 = vmatprep.subr.bf16.mxu0 0
      %2268 = vmatpush1.bf16.msra.mxu0 %v2156
      %2269 = vmatprep.subr.bf16.mxu0 0
      %2270 = vmatpush2.bf16.msra.mxu0 0
      %2271 = vmatprep.subr.bf16.mxu0 0
      %2272 = vmatpush2.bf16.msra.mxu0 0
      %2273 = vmatprep.subr.bf16.mxu0 0
      %2274 = vmatpush2.bf16.msra.mxu0 0
      %2275 = vmatprep.subr.bf16.mxu0 0
      %2276 = vmatpush2.bf16.msra.mxu0 0
      %2277 = vmatprep.subr.bf16.mxu0 0
      %2278 = vmatpush2.bf16.msra.mxu0 0
      %2279 = vmatprep.subr.bf16.mxu0 0
      %2280 = vmatpush2.bf16.msra.mxu0 0
      %2281 = vmatprep.subr.bf16.mxu0 0
      %2282 = vmatpush2.bf16.msra.mxu0 0
      %2283 = vmatprep.subr.bf16.mxu0 0
      %2284 = vmatpush2.bf16.msra.mxu0 0
      %2285 = vmatprep.mubr.bf16.mxu0 0
      %2286 = vmatmul.mubr.bf16.gmra.mxu0 %v2039
      %v2287 = vpop.f32.mrf.mxu0
      %v2288 = vadd.f32 0.0, %v2287
      %v2289 = vpop.f32.mrf.mxu0
      %v2290 = vpop.f32.mrf.mxu0
      %v2291 = vadd.f32 0.0, %v2290
      %v2292 = vpop.f32.mrf.mxu0
      %2293 = vmatprep.mubr.bf16.mxu0 0
      %2294 = vmatmul.mubr.bf16.gmra.mxu0 %v2040
      %v2295 = vpop.f32.mrf.mxu0
      %v2296 = vadd.f32 0.0, %v2295
      %v2297 = vpop.f32.mrf.mxu0
      %v2298 = vpop.f32.mrf.mxu0
      %v2299 = vpop.f32.mrf.mxu0
      %2300 = vdwg.mxu0
      %v2301 = vpack.c.bf16 %v2243, %v2239
      %v2302 = vpack.c.bf16 %v2249, %v2249
      %v2303 = vmul.f32 %v2237, %v422
      %v2304 = vmul.f32 %v2241, %v422
      %v2305 = vmul.f32 %v2247, %v422
      %v2306 = vpack.c.bf16 %v2304, %v2303
      %v2307 = vpack.c.bf16 %v2305, %v2305
      %2308 = vmatprep.subr.bf16.mxu0 0
      %2309 = vmatpush1.bf16.xpose.msra.mxu0 0
      %2310 = vmatprep.subr.bf16.mxu0 0
      %2311 = vmatpush1.bf16.xpose.msra.mxu0 0
      %2312 = vmatprep.subr.bf16.mxu0 0
      %2313 = vmatpush1.bf16.xpose.msra.mxu0 0
      %2314 = vmatprep.subr.bf16.mxu0 0
      %2315 = vmatpush1.bf16.xpose.msra.mxu0 0
      %2316 = vmatprep.subr.bf16.mxu0 0
      %2317 = vmatpush1.bf16.xpose.msra.mxu0 0
      %2318 = vmatprep.subr.bf16.mxu0 0
      %2319 = vmatpush1.bf16.xpose.msra.mxu0 0
      %2320 = vmatprep.subr.bf16.mxu0 0
      %2321 = vmatpush1.bf16.xpose.msra.mxu0 %v2302
      %2322 = vmatprep.subr.bf16.mxu0 0
      %2323 = vmatpush1.bf16.xpose.msra.mxu0 %v2301
      %2324 = vmatprep.subr.bf16.mxu0 0
      %2325 = vmatpush2.bf16.xpose.msra.mxu0 0
      %2326 = vmatprep.subr.bf16.mxu0 0
      %2327 = vmatpush2.bf16.xpose.msra.mxu0 0
      %2328 = vmatprep.subr.bf16.mxu0 0
      %2329 = vmatpush2.bf16.xpose.msra.mxu0 0
      %2330 = vmatprep.subr.bf16.mxu0 0
      %2331 = vmatpush2.bf16.xpose.msra.mxu0 0
      %2332 = vmatprep.subr.bf16.mxu0 0
      %2333 = vmatpush2.bf16.xpose.msra.mxu0 0
      %2334 = vmatprep.subr.bf16.mxu0 0
      %2335 = vmatpush2.bf16.xpose.msra.mxu0 0
      %2336 = vmatprep.subr.bf16.mxu0 0
      %2337 = vmatpush2.bf16.xpose.msra.mxu0 0
      %2338 = vmatprep.subr.bf16.mxu0 0
      %2339 = vmatpush2.bf16.xpose.msra.mxu0 0
      %2340 = vmatprep.mubr.bf16.mxu0 0
      %2341 = vmatmul.mubr.bf16.gmra.mxu0 %v2306
      %v2342 = vpop.f32.mrf.mxu0
      %v2343 = vadd.f32 %v438, %v2342
      %v2344 = vpop.f32.mrf.mxu0
      %v2345 = vpop.f32.mrf.mxu0
      %v2346 = vadd.f32 %v438, %v2345
      %v2347 = vpop.f32.mrf.mxu0
      %2348 = vmatprep.mubr.bf16.mxu0 0
      %2349 = vmatmul.mubr.bf16.gmra.mxu0 %v2307
      %v2350 = vpop.f32.mrf.mxu0
      %v2351 = vadd.f32 %v438, %v2350
      %v2352 = vpop.f32.mrf.mxu0
      %v2353 = vpop.f32.mrf.mxu0
      %v2354 = vpop.f32.mrf.mxu0
      %2355 = vdwg.mxu0
      %v2356 = vsel %vm929, %v2343, -inf
      %2357 = vmax.xlane.f32.xlu0 %v2356
      %v2358 = vpop.xlane.xlu0 %2357
      %v2359 = vsel %vm929, %v2346, -inf
      %2360 = vmax.xlane.f32.xlu0 %v2359
      %v2361 = vpop.xlane.xlu0 %2360
      %v2362 = vsel %vm929, %v2351, -inf
      %2363 = vmax.xlane.f32.xlu0 %v2362
      %v2364 = vpop.xlane.xlu0 %2363
      %v2365 = vsub.f32 %v2343, %v2358
      %v2366 = vsub.f32 %v2346, %v2361
      %v2367 = vsub.f32 %v2351, %v2364
      %v2368 = vmul.f32 %v2365, 1.442695
      %v2369 = vpow.pop %v2368
      %v2370 = vmul.f32 %v2366, 1.442695
      %v2371 = vpow.pop %v2370
      %v2372 = vmul.f32 %v2367, 1.442695
      %v2373 = vpow.pop %v2372
      %v2374 = vsel %vm929, %v2369, 0.0
      %2375 = vadd.xlane.f32.xlu0 %v2374
      %v2376 = vpop.xlane.xlu0 %2375
      %v2377 = vsel %vm929, %v2371, 0.0
      %2378 = vadd.xlane.f32.xlu0 %v2377
      %v2379 = vpop.xlane.xlu0 %2378
      %v2380 = vsel %vm929, %v2373, 0.0
      %2381 = vadd.xlane.f32.xlu0 %v2380
      %v2382 = vpop.xlane.xlu0 %2381
      %v2383 = vrcp.pop %v2376
      %v2384 = vrcp.pop %v2379
      %v2385 = vrcp.pop %v2382
      %v2386 = vmul.f32 %v2369, %v2383
      %v2387 = vmul.f32 %v2371, %v2384
      %v2388 = vmul.f32 %v2373, %v2385
      %v2389 = vmul.f32 %v2288, %v422
      %v2390 = vmul.f32 %v2291, %v422
      %v2391 = vmul.f32 %v2296, %v422
      %v2392 = vpack.c.bf16 %v2390, %v2389
      %v2393 = vpack.c.bf16 %v2391, %v2391
      %v2394 = vpack.c.bf16 %v2387, %v2386
      %v2395 = vpack.c.bf16 %v2388, %v2388
      %v2396 = vmul.f32 %v2237, %v427
      %v2397 = vmul.f32 %v2241, %v427
      %v2398 = vmul.f32 %v2247, %v427
      %v2399 = vpack.c.bf16 %v2397, %v2396
      %v2400 = vpack.c.bf16 %v2398, %v2398
      %2401 = vmatprep.subr.bf16.mxu0 0
      %2402 = vmatpush1.bf16.xpose.msra.mxu0 0
      %2403 = vmatprep.subr.bf16.mxu0 0
      %2404 = vmatpush1.bf16.xpose.msra.mxu0 0
      %2405 = vmatprep.subr.bf16.mxu0 0
      %2406 = vmatpush1.bf16.xpose.msra.mxu0 0
      %2407 = vmatprep.subr.bf16.mxu0 0
      %2408 = vmatpush1.bf16.xpose.msra.mxu0 0
      %2409 = vmatprep.subr.bf16.mxu0 0
      %2410 = vmatpush1.bf16.xpose.msra.mxu0 0
      %2411 = vmatprep.subr.bf16.mxu0 0
      %2412 = vmatpush1.bf16.xpose.msra.mxu0 0
      %2413 = vmatprep.subr.bf16.mxu0 0
      %2414 = vmatpush1.bf16.xpose.msra.mxu0 %v2302
      %2415 = vmatprep.subr.bf16.mxu0 0
      %2416 = vmatpush1.bf16.xpose.msra.mxu0 %v2301
      %2417 = vmatprep.subr.bf16.mxu0 0
      %2418 = vmatpush2.bf16.xpose.msra.mxu0 0
      %2419 = vmatprep.subr.bf16.mxu0 0
      %2420 = vmatpush2.bf16.xpose.msra.mxu0 0
      %2421 = vmatprep.subr.bf16.mxu0 0
      %2422 = vmatpush2.bf16.xpose.msra.mxu0 0
      %2423 = vmatprep.subr.bf16.mxu0 0
      %2424 = vmatpush2.bf16.xpose.msra.mxu0 0
      %2425 = vmatprep.subr.bf16.mxu0 0
      %2426 = vmatpush2.bf16.xpose.msra.mxu0 0
      %2427 = vmatprep.subr.bf16.mxu0 0
      %2428 = vmatpush2.bf16.xpose.msra.mxu0 0
      %2429 = vmatprep.subr.bf16.mxu0 0
      %2430 = vmatpush2.bf16.xpose.msra.mxu0 0
      %2431 = vmatprep.subr.bf16.mxu0 0
      %2432 = vmatpush2.bf16.xpose.msra.mxu0 0
      %2433 = vmatprep.mubr.bf16.mxu0 0
      %2434 = vmatmul.mubr.bf16.gmra.mxu0 %v2399
      %v2435 = vpop.f32.mrf.mxu0
      %v2436 = vadd.f32 %v438, %v2435
      %v2437 = vpop.f32.mrf.mxu0
      %v2438 = vpop.f32.mrf.mxu0
      %v2439 = vadd.f32 %v438, %v2438
      %v2440 = vpop.f32.mrf.mxu0
      %2441 = vmatprep.mubr.bf16.mxu0 0
      %2442 = vmatmul.mubr.bf16.gmra.mxu0 %v2400
      %v2443 = vpop.f32.mrf.mxu0
      %v2444 = vadd.f32 %v438, %v2443
      %v2445 = vpop.f32.mrf.mxu0
      %v2446 = vpop.f32.mrf.mxu0
      %v2447 = vpop.f32.mrf.mxu0
      %2448 = vdwg.mxu0
      %v2449 = vsel %vm929, %v2436, -inf
      %2450 = vmax.xlane.f32.xlu0 %v2449
      %v2451 = vpop.xlane.xlu0 %2450
      %v2452 = vsel %vm929, %v2439, -inf
      %2453 = vmax.xlane.f32.xlu0 %v2452
      %v2454 = vpop.xlane.xlu0 %2453
      %v2455 = vsel %vm929, %v2444, -inf
      %2456 = vmax.xlane.f32.xlu0 %v2455
      %v2457 = vpop.xlane.xlu0 %2456
      %v2458 = vsub.f32 %v2436, %v2451
      %v2459 = vsub.f32 %v2439, %v2454
      %v2460 = vsub.f32 %v2444, %v2457
      %v2461 = vmul.f32 %v2458, 1.442695
      %v2462 = vpow.pop %v2461
      %v2463 = vmul.f32 %v2459, 1.442695
      %v2464 = vpow.pop %v2463
      %v2465 = vmul.f32 %v2460, 1.442695
      %v2466 = vpow.pop %v2465
      %v2467 = vsel %vm929, %v2462, 0.0
      %2468 = vadd.xlane.f32.xlu0 %v2467
      %v2469 = vpop.xlane.xlu0 %2468
      %v2470 = vsel %vm929, %v2464, 0.0
      %2471 = vadd.xlane.f32.xlu0 %v2470
      %v2472 = vpop.xlane.xlu0 %2471
      %v2473 = vsel %vm929, %v2466, 0.0
      %2474 = vadd.xlane.f32.xlu0 %v2473
      %v2475 = vpop.xlane.xlu0 %2474
      %v2476 = vrcp.pop %v2469
      %v2477 = vrcp.pop %v2472
      %v2478 = vrcp.pop %v2475
      %v2479 = vmul.f32 %v2462, %v2476
      %v2480 = vmul.f32 %v2464, %v2477
      %v2481 = vmul.f32 %v2466, %v2478
      %v2482 = vmul.f32 %v2288, %v427
      %v2483 = vmul.f32 %v2291, %v427
      %v2484 = vmul.f32 %v2296, %v427
      %v2485 = vpack.c.bf16 %v2483, %v2482
      %v2486 = vpack.c.bf16 %v2484, %v2484
      %v2487 = vpack.c.bf16 %v2480, %v2479
      %v2488 = vpack.c.bf16 %v2481, %v2481
      %v2490 = vsel %vm929, %v2487, 0
      %v2493 = vsel %vm929, %v2488, 0
      %v2496 = vsel %vm1069, %v2486, 0
      %2498 = vmatprep.subr.bf16.mxu0 0
      %2499 = vmatpush1.bf16.msra.mxu0 0
      %2500 = vmatprep.subr.bf16.mxu0 0
      %2501 = vmatpush1.bf16.msra.mxu0 0
      %2502 = vmatprep.subr.bf16.mxu0 0
      %2503 = vmatpush1.bf16.msra.mxu0 0
      %2504 = vmatprep.subr.bf16.mxu0 0
      %2505 = vmatpush1.bf16.msra.mxu0 0
      %2506 = vmatprep.subr.bf16.mxu0 0
      %2507 = vmatpush1.bf16.msra.mxu0 0
      %2508 = vmatprep.subr.bf16.mxu0 0
      %2509 = vmatpush1.bf16.msra.mxu0 0
      %2510 = vmatprep.subr.bf16.mxu0 0
      %2511 = vmatpush1.bf16.msra.mxu0 %v2496
      %2512 = vmatprep.subr.bf16.mxu0 0
      %2513 = vmatpush1.bf16.msra.mxu0 %v2485
      %2514 = vmatprep.subr.bf16.mxu0 0
      %2515 = vmatpush2.bf16.msra.mxu0 0
      %2516 = vmatprep.subr.bf16.mxu0 0
      %2517 = vmatpush2.bf16.msra.mxu0 0
      %2518 = vmatprep.subr.bf16.mxu0 0
      %2519 = vmatpush2.bf16.msra.mxu0 0
      %2520 = vmatprep.subr.bf16.mxu0 0
      %2521 = vmatpush2.bf16.msra.mxu0 0
      %2522 = vmatprep.subr.bf16.mxu0 0
      %2523 = vmatpush2.bf16.msra.mxu0 0
      %2524 = vmatprep.subr.bf16.mxu0 0
      %2525 = vmatpush2.bf16.msra.mxu0 0
      %2526 = vmatprep.subr.bf16.mxu0 0
      %2527 = vmatpush2.bf16.msra.mxu0 0
      %2528 = vmatprep.subr.bf16.mxu0 0
      %2529 = vmatpush2.bf16.msra.mxu0 0
      %2530 = vmatprep.mubr.bf16.mxu0 0
      %2531 = vmatmul.mubr.bf16.gmra.mxu0 %v2490
      %v2532 = vpop.f32.mrf.mxu0
      %v2533 = vadd.f32 0.0, %v2532
      %v2534 = vpop.f32.mrf.mxu0
      %v2535 = vpop.f32.mrf.mxu0
      %v2536 = vadd.f32 0.0, %v2535
      %v2537 = vpop.f32.mrf.mxu0
      %2538 = vmatprep.mubr.bf16.mxu0 0
      %2539 = vmatmul.mubr.bf16.gmra.mxu0 %v2493
      %v2540 = vpop.f32.mrf.mxu0
      %v2541 = vadd.f32 0.0, %v2540
      %v2542 = vpop.f32.mrf.mxu0
      %v2543 = vpop.f32.mrf.mxu0
      %v2544 = vpop.f32.mrf.mxu0
      %2545 = vdwg.mxu0
      %v2547 = vsel %vm929, %v2394, 0
      %v2550 = vsel %vm929, %v2395, 0
      %v2553 = vsel %vm1069, %v2393, 0
      %2555 = vmatprep.subr.bf16.mxu0 0
      %2556 = vmatpush1.bf16.msra.mxu0 0
      %2557 = vmatprep.subr.bf16.mxu0 0
      %2558 = vmatpush1.bf16.msra.mxu0 0
      %2559 = vmatprep.subr.bf16.mxu0 0
      %2560 = vmatpush1.bf16.msra.mxu0 0
      %2561 = vmatprep.subr.bf16.mxu0 0
      %2562 = vmatpush1.bf16.msra.mxu0 0
      %2563 = vmatprep.subr.bf16.mxu0 0
      %2564 = vmatpush1.bf16.msra.mxu0 0
      %2565 = vmatprep.subr.bf16.mxu0 0
      %2566 = vmatpush1.bf16.msra.mxu0 0
      %2567 = vmatprep.subr.bf16.mxu0 0
      %2568 = vmatpush1.bf16.msra.mxu0 %v2553
      %2569 = vmatprep.subr.bf16.mxu0 0
      %2570 = vmatpush1.bf16.msra.mxu0 %v2392
      %2571 = vmatprep.subr.bf16.mxu0 0
      %2572 = vmatpush2.bf16.msra.mxu0 0
      %2573 = vmatprep.subr.bf16.mxu0 0
      %2574 = vmatpush2.bf16.msra.mxu0 0
      %2575 = vmatprep.subr.bf16.mxu0 0
      %2576 = vmatpush2.bf16.msra.mxu0 0
      %2577 = vmatprep.subr.bf16.mxu0 0
      %2578 = vmatpush2.bf16.msra.mxu0 0
      %2579 = vmatprep.subr.bf16.mxu0 0
      %2580 = vmatpush2.bf16.msra.mxu0 0
      %2581 = vmatprep.subr.bf16.mxu0 0
      %2582 = vmatpush2.bf16.msra.mxu0 0
      %2583 = vmatprep.subr.bf16.mxu0 0
      %2584 = vmatpush2.bf16.msra.mxu0 0
      %2585 = vmatprep.subr.bf16.mxu0 0
      %2586 = vmatpush2.bf16.msra.mxu0 0
      %2587 = vmatprep.mubr.bf16.mxu0 0
      %2588 = vmatmul.mubr.bf16.gmra.mxu0 %v2547
      %v2589 = vpop.f32.mrf.mxu0
      %v2590 = vadd.f32 %v2533, %v2589
      %v2591 = vpop.f32.mrf.mxu0
      %v2592 = vpop.f32.mrf.mxu0
      %v2593 = vadd.f32 %v2536, %v2592
      %v2594 = vpop.f32.mrf.mxu0
      %2595 = vmatprep.mubr.bf16.mxu0 0
      %2596 = vmatmul.mubr.bf16.gmra.mxu0 %v2550
      %v2597 = vpop.f32.mrf.mxu0
      %v2598 = vadd.f32 %v2541, %v2597
      %v2599 = vpop.f32.mrf.mxu0
      %v2600 = vpop.f32.mrf.mxu0
      %v2601 = vpop.f32.mrf.mxu0
      %2602 = vdwg.mxu0
      %v2603 = vmul.f32 %v2237, %v432
      %v2604 = vmul.f32 %v2241, %v432
      %v2605 = vmul.f32 %v2247, %v432
      %v2606 = vpack.c.bf16 %v2604, %v2603
      %v2607 = vpack.c.bf16 %v2605, %v2605
      %2608 = vmatprep.subr.bf16.mxu0 0
      %2609 = vmatpush1.bf16.xpose.msra.mxu0 0
      %2610 = vmatprep.subr.bf16.mxu0 0
      %2611 = vmatpush1.bf16.xpose.msra.mxu0 0
      %2612 = vmatprep.subr.bf16.mxu0 0
      %2613 = vmatpush1.bf16.xpose.msra.mxu0 0
      %2614 = vmatprep.subr.bf16.mxu0 0
      %2615 = vmatpush1.bf16.xpose.msra.mxu0 0
      %2616 = vmatprep.subr.bf16.mxu0 0
      %2617 = vmatpush1.bf16.xpose.msra.mxu0 0
      %2618 = vmatprep.subr.bf16.mxu0 0
      %2619 = vmatpush1.bf16.xpose.msra.mxu0 0
      %2620 = vmatprep.subr.bf16.mxu0 0
      %2621 = vmatpush1.bf16.xpose.msra.mxu0 %v2302
      %2622 = vmatprep.subr.bf16.mxu0 0
      %2623 = vmatpush1.bf16.xpose.msra.mxu0 %v2301
      %2624 = vmatprep.subr.bf16.mxu0 0
      %2625 = vmatpush2.bf16.xpose.msra.mxu0 0
      %2626 = vmatprep.subr.bf16.mxu0 0
      %2627 = vmatpush2.bf16.xpose.msra.mxu0 0
      %2628 = vmatprep.subr.bf16.mxu0 0
      %2629 = vmatpush2.bf16.xpose.msra.mxu0 0
      %2630 = vmatprep.subr.bf16.mxu0 0
      %2631 = vmatpush2.bf16.xpose.msra.mxu0 0
      %2632 = vmatprep.subr.bf16.mxu0 0
      %2633 = vmatpush2.bf16.xpose.msra.mxu0 0
      %2634 = vmatprep.subr.bf16.mxu0 0
      %2635 = vmatpush2.bf16.xpose.msra.mxu0 0
      %2636 = vmatprep.subr.bf16.mxu0 0
      %2637 = vmatpush2.bf16.xpose.msra.mxu0 0
      %2638 = vmatprep.subr.bf16.mxu0 0
      %2639 = vmatpush2.bf16.xpose.msra.mxu0 0
      %2640 = vmatprep.mubr.bf16.mxu0 0
      %2641 = vmatmul.mubr.bf16.gmra.mxu0 %v2606
      %v2642 = vpop.f32.mrf.mxu0
      %v2643 = vadd.f32 %v438, %v2642
      %v2644 = vpop.f32.mrf.mxu0
      %v2645 = vpop.f32.mrf.mxu0
      %v2646 = vadd.f32 %v438, %v2645
      %v2647 = vpop.f32.mrf.mxu0
      %2648 = vmatprep.mubr.bf16.mxu0 0
      %2649 = vmatmul.mubr.bf16.gmra.mxu0 %v2607
      %v2650 = vpop.f32.mrf.mxu0
      %v2651 = vadd.f32 %v438, %v2650
      %v2652 = vpop.f32.mrf.mxu0
      %v2653 = vpop.f32.mrf.mxu0
      %v2654 = vpop.f32.mrf.mxu0
      %2655 = vdwg.mxu0
      %v2656 = vsel %vm929, %v2643, -inf
      %2657 = vmax.xlane.f32.xlu0 %v2656
      %v2658 = vpop.xlane.xlu0 %2657
      %v2659 = vsel %vm929, %v2646, -inf
      %2660 = vmax.xlane.f32.xlu0 %v2659
      %v2661 = vpop.xlane.xlu0 %2660
      %v2662 = vsel %vm929, %v2651, -inf
      %2663 = vmax.xlane.f32.xlu0 %v2662
      %v2664 = vpop.xlane.xlu0 %2663
      %v2665 = vsub.f32 %v2643, %v2658
      %v2666 = vsub.f32 %v2646, %v2661
      %v2667 = vsub.f32 %v2651, %v2664
      %v2668 = vmul.f32 %v2665, 1.442695
      %v2669 = vpow.pop %v2668
      %v2670 = vmul.f32 %v2666, 1.442695
      %v2671 = vpow.pop %v2670
      %v2672 = vmul.f32 %v2667, 1.442695
      %v2673 = vpow.pop %v2672
      %v2674 = vsel %vm929, %v2669, 0.0
      %2675 = vadd.xlane.f32.xlu0 %v2674
      %v2676 = vpop.xlane.xlu0 %2675
      %v2677 = vsel %vm929, %v2671, 0.0
      %2678 = vadd.xlane.f32.xlu0 %v2677
      %v2679 = vpop.xlane.xlu0 %2678
      %v2680 = vsel %vm929, %v2673, 0.0
      %2681 = vadd.xlane.f32.xlu0 %v2680
      %v2682 = vpop.xlane.xlu0 %2681
      %v2683 = vrcp.pop %v2676
      %v2684 = vrcp.pop %v2679
      %v2685 = vrcp.pop %v2682
      %v2686 = vmul.f32 %v2669, %v2683
      %v2687 = vmul.f32 %v2671, %v2684
      %v2688 = vmul.f32 %v2673, %v2685
      %v2689 = vmul.f32 %v2288, %v432
      %v2690 = vmul.f32 %v2291, %v432
      %v2691 = vmul.f32 %v2296, %v432
      %v2692 = vpack.c.bf16 %v2690, %v2689
      %v2693 = vpack.c.bf16 %v2691, %v2691
      %v2694 = vpack.c.bf16 %v2687, %v2686
      %v2695 = vpack.c.bf16 %v2688, %v2688
      %v2697 = vsel %vm929, %v2694, 0
      %v2700 = vsel %vm929, %v2695, 0
      %v2703 = vsel %vm1069, %v2693, 0
      %2705 = vmatprep.subr.bf16.mxu0 0
      %2706 = vmatpush1.bf16.msra.mxu0 0
      %2707 = vmatprep.subr.bf16.mxu0 0
      %2708 = vmatpush1.bf16.msra.mxu0 0
      %2709 = vmatprep.subr.bf16.mxu0 0
      %2710 = vmatpush1.bf16.msra.mxu0 0
      %2711 = vmatprep.subr.bf16.mxu0 0
      %2712 = vmatpush1.bf16.msra.mxu0 0
      %2713 = vmatprep.subr.bf16.mxu0 0
      %2714 = vmatpush1.bf16.msra.mxu0 0
      %2715 = vmatprep.subr.bf16.mxu0 0
      %2716 = vmatpush1.bf16.msra.mxu0 0
      %2717 = vmatprep.subr.bf16.mxu0 0
      %2718 = vmatpush1.bf16.msra.mxu0 %v2703
      %2719 = vmatprep.subr.bf16.mxu0 0
      %2720 = vmatpush1.bf16.msra.mxu0 %v2692
      %2721 = vmatprep.subr.bf16.mxu0 0
      %2722 = vmatpush2.bf16.msra.mxu0 0
      %2723 = vmatprep.subr.bf16.mxu0 0
      %2724 = vmatpush2.bf16.msra.mxu0 0
      %2725 = vmatprep.subr.bf16.mxu0 0
      %2726 = vmatpush2.bf16.msra.mxu0 0
      %2727 = vmatprep.subr.bf16.mxu0 0
      %2728 = vmatpush2.bf16.msra.mxu0 0
      %2729 = vmatprep.subr.bf16.mxu0 0
      %2730 = vmatpush2.bf16.msra.mxu0 0
      %2731 = vmatprep.subr.bf16.mxu0 0
      %2732 = vmatpush2.bf16.msra.mxu0 0
      %2733 = vmatprep.subr.bf16.mxu0 0
      %2734 = vmatpush2.bf16.msra.mxu0 0
      %2735 = vmatprep.subr.bf16.mxu0 0
      %2736 = vmatpush2.bf16.msra.mxu0 0
      %2737 = vmatprep.mubr.bf16.mxu0 0
      %2738 = vmatmul.mubr.bf16.gmra.mxu0 %v2697
      %v2739 = vpop.f32.mrf.mxu0
      %v2740 = vadd.f32 0.0, %v2739
      %v2741 = vpop.f32.mrf.mxu0
      %v2742 = vpop.f32.mrf.mxu0
      %v2743 = vadd.f32 0.0, %v2742
      %v2744 = vpop.f32.mrf.mxu0
      %2745 = vmatprep.mubr.bf16.mxu0 0
      %2746 = vmatmul.mubr.bf16.gmra.mxu0 %v2700
      %v2747 = vpop.f32.mrf.mxu0
      %v2748 = vadd.f32 0.0, %v2747
      %v2749 = vpop.f32.mrf.mxu0
      %v2750 = vpop.f32.mrf.mxu0
      %v2751 = vpop.f32.mrf.mxu0
      %2752 = vdwg.mxu0
      %v2753 = vadd.f32 %v2590, %v2740
      %v2754 = vadd.f32 %v2593, %v2743
      %v2755 = vadd.f32 %v2598, %v2748
      %v2756 = vmul.f32 %v2237, %v436
      %v2757 = vmul.f32 %v2241, %v436
      %v2758 = vmul.f32 %v2247, %v436
      %v2759 = vpack.c.bf16 %v2757, %v2756
      %v2760 = vpack.c.bf16 %v2758, %v2758
      %2761 = vmatprep.subr.bf16.mxu0 0
      %2762 = vmatpush1.bf16.xpose.msra.mxu0 0
      %2763 = vmatprep.subr.bf16.mxu0 0
      %2764 = vmatpush1.bf16.xpose.msra.mxu0 0
      %2765 = vmatprep.subr.bf16.mxu0 0
      %2766 = vmatpush1.bf16.xpose.msra.mxu0 0
      %2767 = vmatprep.subr.bf16.mxu0 0
      %2768 = vmatpush1.bf16.xpose.msra.mxu0 0
      %2769 = vmatprep.subr.bf16.mxu0 0
      %2770 = vmatpush1.bf16.xpose.msra.mxu0 0
      %2771 = vmatprep.subr.bf16.mxu0 0
      %2772 = vmatpush1.bf16.xpose.msra.mxu0 0
      %2773 = vmatprep.subr.bf16.mxu0 0
      %2774 = vmatpush1.bf16.xpose.msra.mxu0 %v2302
      %2775 = vmatprep.subr.bf16.mxu0 0
      %2776 = vmatpush1.bf16.xpose.msra.mxu0 %v2301
      %2777 = vmatprep.subr.bf16.mxu0 0
      %2778 = vmatpush2.bf16.xpose.msra.mxu0 0
      %2779 = vmatprep.subr.bf16.mxu0 0
      %2780 = vmatpush2.bf16.xpose.msra.mxu0 0
      %2781 = vmatprep.subr.bf16.mxu0 0
      %2782 = vmatpush2.bf16.xpose.msra.mxu0 0
      %2783 = vmatprep.subr.bf16.mxu0 0
      %2784 = vmatpush2.bf16.xpose.msra.mxu0 0
      %2785 = vmatprep.subr.bf16.mxu0 0
      %2786 = vmatpush2.bf16.xpose.msra.mxu0 0
      %2787 = vmatprep.subr.bf16.mxu0 0
      %2788 = vmatpush2.bf16.xpose.msra.mxu0 0
      %2789 = vmatprep.subr.bf16.mxu0 0
      %2790 = vmatpush2.bf16.xpose.msra.mxu0 0
      %2791 = vmatprep.subr.bf16.mxu0 0
      %2792 = vmatpush2.bf16.xpose.msra.mxu0 0
      %2793 = vmatprep.mubr.bf16.mxu0 0
      %2794 = vmatmul.mubr.bf16.gmra.mxu0 %v2759
      %v2795 = vpop.f32.mrf.mxu0
      %v2796 = vadd.f32 %v438, %v2795
      %v2797 = vpop.f32.mrf.mxu0
      %v2798 = vpop.f32.mrf.mxu0
      %v2799 = vadd.f32 %v438, %v2798
      %v2800 = vpop.f32.mrf.mxu0
      %2801 = vmatprep.mubr.bf16.mxu0 0
      %2802 = vmatmul.mubr.bf16.gmra.mxu0 %v2760
      %v2803 = vpop.f32.mrf.mxu0
      %v2804 = vadd.f32 %v438, %v2803
      %v2805 = vpop.f32.mrf.mxu0
      %v2806 = vpop.f32.mrf.mxu0
      %v2807 = vpop.f32.mrf.mxu0
      %2808 = vdwg.mxu0
      %v2809 = vsel %vm929, %v2796, -inf
      %2810 = vmax.xlane.f32.xlu0 %v2809
      %v2811 = vpop.xlane.xlu0 %2810
      %v2812 = vsel %vm929, %v2799, -inf
      %2813 = vmax.xlane.f32.xlu0 %v2812
      %v2814 = vpop.xlane.xlu0 %2813
      %v2815 = vsel %vm929, %v2804, -inf
      %2816 = vmax.xlane.f32.xlu0 %v2815
      %v2817 = vpop.xlane.xlu0 %2816
      %v2818 = vsub.f32 %v2796, %v2811
      %v2819 = vsub.f32 %v2799, %v2814
      %v2820 = vsub.f32 %v2804, %v2817
      %v2821 = vmul.f32 %v2818, 1.442695
      %v2822 = vpow.pop %v2821
      %v2823 = vmul.f32 %v2819, 1.442695
      %v2824 = vpow.pop %v2823
      %v2825 = vmul.f32 %v2820, 1.442695
      %v2826 = vpow.pop %v2825
      %v2827 = vsel %vm929, %v2822, 0.0
      %2828 = vadd.xlane.f32.xlu0 %v2827
      %v2829 = vpop.xlane.xlu0 %2828
      %v2830 = vsel %vm929, %v2824, 0.0
      %2831 = vadd.xlane.f32.xlu0 %v2830
      %v2832 = vpop.xlane.xlu0 %2831
      %v2833 = vsel %vm929, %v2826, 0.0
      %2834 = vadd.xlane.f32.xlu0 %v2833
      %v2835 = vpop.xlane.xlu0 %2834
      %v2836 = vrcp.pop %v2829
      %v2837 = vrcp.pop %v2832
      %v2838 = vrcp.pop %v2835
      %v2839 = vmul.f32 %v2822, %v2836
      %v2840 = vmul.f32 %v2824, %v2837
      %v2841 = vmul.f32 %v2826, %v2838
      %v2842 = vmul.f32 %v2288, %v436
      %v2843 = vmul.f32 %v2291, %v436
      %v2844 = vmul.f32 %v2296, %v436
      %v2845 = vpack.c.bf16 %v2843, %v2842
      %v2846 = vpack.c.bf16 %v2844, %v2844
      %v2847 = vpack.c.bf16 %v2840, %v2839
      %v2848 = vpack.c.bf16 %v2841, %v2841
      %v2850 = vsel %vm929, %v2847, 0
      %v2853 = vsel %vm929, %v2848, 0
      %v2856 = vsel %vm1069, %v2846, 0
      %2858 = vmatprep.subr.bf16.mxu0 0
      %2859 = vmatpush1.bf16.msra.mxu0 0
      %2860 = vmatprep.subr.bf16.mxu0 0
      %2861 = vmatpush1.bf16.msra.mxu0 0
      %2862 = vmatprep.subr.bf16.mxu0 0
      %2863 = vmatpush1.bf16.msra.mxu0 0
      %2864 = vmatprep.subr.bf16.mxu0 0
      %2865 = vmatpush1.bf16.msra.mxu0 0
      %2866 = vmatprep.subr.bf16.mxu0 0
      %2867 = vmatpush1.bf16.msra.mxu0 0
      %2868 = vmatprep.subr.bf16.mxu0 0
      %2869 = vmatpush1.bf16.msra.mxu0 0
      %2870 = vmatprep.subr.bf16.mxu0 0
      %2871 = vmatpush1.bf16.msra.mxu0 %v2856
      %2872 = vmatprep.subr.bf16.mxu0 0
      %2873 = vmatpush1.bf16.msra.mxu0 %v2845
      %2874 = vmatprep.subr.bf16.mxu0 0
      %2875 = vmatpush2.bf16.msra.mxu0 0
      %2876 = vmatprep.subr.bf16.mxu0 0
      %2877 = vmatpush2.bf16.msra.mxu0 0
      %2878 = vmatprep.subr.bf16.mxu0 0
      %2879 = vmatpush2.bf16.msra.mxu0 0
      %2880 = vmatprep.subr.bf16.mxu0 0
      %2881 = vmatpush2.bf16.msra.mxu0 0
      %2882 = vmatprep.subr.bf16.mxu0 0
      %2883 = vmatpush2.bf16.msra.mxu0 0
      %2884 = vmatprep.subr.bf16.mxu0 0
      %2885 = vmatpush2.bf16.msra.mxu0 0
      %2886 = vmatprep.subr.bf16.mxu0 0
      %2887 = vmatpush2.bf16.msra.mxu0 0
      %2888 = vmatprep.subr.bf16.mxu0 0
      %2889 = vmatpush2.bf16.msra.mxu0 0
      %2890 = vmatprep.mubr.bf16.mxu0 0
      %2891 = vmatmul.mubr.bf16.gmra.mxu0 %v2850
      %v2892 = vpop.f32.mrf.mxu0
      %v2893 = vadd.f32 0.0, %v2892
      %v2894 = vpop.f32.mrf.mxu0
      %v2895 = vpop.f32.mrf.mxu0
      %v2896 = vadd.f32 0.0, %v2895
      %v2897 = vpop.f32.mrf.mxu0
      %2898 = vmatprep.mubr.bf16.mxu0 0
      %2899 = vmatmul.mubr.bf16.gmra.mxu0 %v2853
      %v2900 = vpop.f32.mrf.mxu0
      %v2901 = vadd.f32 0.0, %v2900
      %v2902 = vpop.f32.mrf.mxu0
      %v2903 = vpop.f32.mrf.mxu0
      %v2904 = vpop.f32.mrf.mxu0
      %2905 = vdwg.mxu0
      %v2906 = vadd.f32 %v2753, %v2893
      %v2907 = vadd.f32 %v2754, %v2896
      %v2908 = vadd.f32 %v2755, %v2901
      %v2909 = vpack.c.bf16 %v2907, %v2906
      %v2910 = vpack.c.bf16 %v2908, %v2908
      %s2911 = scalar_lea.vmem %s6, 64
      %v2912 = vld [vmem:[%s2911] sm:$0xf]
      %v2913 = vld [vmem:[%s2911 + $0x4] sm:$0xf]
      %v2914 = vld [vmem:[%s2911 + $0x8] sm:$0xf]
      %v2915 = vld [vmem:[%s2911 + $0xc] sm:$0xf]
      %v2916 = vld [vmem:[%s2911 + $0x10] sm:$0xf]
      %v2917 = vld [vmem:[%s2911 + $0x14] sm:$0xf]
      %v2918 = vld [vmem:[%s2911 + $0x18] sm:$0xf]
      %v2919 = vld [vmem:[%s2911 + $0x1c] sm:$0xf]
      %v2920 = vld [vmem:[%s2911 + $0x20] sm:$0xf]
      %v2921 = vld [vmem:[%s2911 + $0x24] sm:$0xf]
      %v2922 = vld [vmem:[%s2911 + $0x28] sm:$0xf]
      %v2923 = vld [vmem:[%s2911 + $0x2c] sm:$0xf]
      %v2924 = vld [vmem:[%s2911 + $0x30] sm:$0xf]
      %v2925 = vld [vmem:[%s2911 + $0x34] sm:$0xf]
      %v2926 = vld [vmem:[%s2911 + $0x38] sm:$0xf]
      %v2927 = vld [vmem:[%s2911 + $0x3c] sm:$0xf]
      %v2944 = vunpack.c.l.b16 %v2912
      %v2945 = vunpack.c.l.b16 %v2913
      %v2946 = vunpack.c.l.b16 %v2914
      %v2947 = vunpack.c.l.b16 %v2915
      %v2948 = vunpack.c.l.b16 %v2916
      %v2949 = vunpack.c.l.b16 %v2917
      %v2950 = vunpack.c.l.b16 %v2918
      %v2951 = vunpack.c.l.b16 %v2919
      %v2952 = vunpack.c.l.b16 %v2920
      %v2953 = vunpack.c.l.b16 %v2921
      %v2954 = vunpack.c.l.b16 %v2922
      %v2955 = vunpack.c.l.b16 %v2923
      %v2956 = vunpack.c.l.b16 %v2924
      %v2957 = vunpack.c.l.b16 %v2925
      %v2958 = vunpack.c.l.b16 %v2926
      %v2959 = vunpack.c.l.b16 %v2927
      %v2960 = vpack.c.b16 %v2945, %v2944
      %v2961 = vpack.c.b16 %v2947, %v2946
      %v2962 = vpack.c.b16 %v2949, %v2948
      %v2963 = vpack.c.b16 %v2951, %v2950
      %v2964 = vpack.c.b16 %v2953, %v2952
      %v2965 = vpack.c.b16 %v2955, %v2954
      %v2966 = vpack.c.b16 %v2957, %v2956
      %v2967 = vpack.c.b16 %v2959, %v2958
      %2976 = vmatprep.subr.bf16.mxu0 0
      %2977 = vmatpush1.bf16.msra.mxu0 %v2967
      %2978 = vmatprep.subr.bf16.mxu0 0
      %2979 = vmatpush1.bf16.msra.mxu0 %v2966
      %2980 = vmatprep.subr.bf16.mxu0 0
      %2981 = vmatpush1.bf16.msra.mxu0 %v2965
      %2982 = vmatprep.subr.bf16.mxu0 0
      %2983 = vmatpush1.bf16.msra.mxu0 %v2964
      %2984 = vmatprep.subr.bf16.mxu0 0
      %2985 = vmatpush1.bf16.msra.mxu0 %v2963
      %2986 = vmatprep.subr.bf16.mxu0 0
      %2987 = vmatpush1.bf16.msra.mxu0 %v2962
      %2988 = vmatprep.subr.bf16.mxu0 0
      %2989 = vmatpush1.bf16.msra.mxu0 %v2961
      %2990 = vmatprep.subr.bf16.mxu0 0
      %2991 = vmatpush1.bf16.msra.mxu0 %v2960
      %2992 = vmatprep.subr.bf16.mxu0 0
      %2993 = vmatpush2.bf16.msra.mxu0 0
      %2994 = vmatprep.subr.bf16.mxu0 0
      %2995 = vmatpush2.bf16.msra.mxu0 0
      %2996 = vmatprep.subr.bf16.mxu0 0
      %2997 = vmatpush2.bf16.msra.mxu0 0
      %2998 = vmatprep.subr.bf16.mxu0 0
      %2999 = vmatpush2.bf16.msra.mxu0 0
      %3000 = vmatprep.subr.bf16.mxu0 0
      %3001 = vmatpush2.bf16.msra.mxu0 0
      %3002 = vmatprep.subr.bf16.mxu0 0
      %3003 = vmatpush2.bf16.msra.mxu0 0
      %3004 = vmatprep.subr.bf16.mxu0 0
      %3005 = vmatpush2.bf16.msra.mxu0 0
      %3006 = vmatprep.subr.bf16.mxu0 0
      %3007 = vmatpush2.bf16.msra.mxu0 0
      %3008 = vmatprep.mubr.bf16.mxu0 0
      %3009 = vmatmul.mubr.bf16.gmra.mxu0 %v2909
      %v3010 = vpop.f32.mrf.mxu0
      %v3011 = vadd.f32 0.0, %v3010
      %v3012 = vpop.f32.mrf.mxu0
      %v3013 = vpop.f32.mrf.mxu0
      %v3014 = vadd.f32 0.0, %v3013
      %v3015 = vpop.f32.mrf.mxu0
      %3016 = vmatprep.mubr.bf16.mxu0 0
      %3017 = vmatmul.mubr.bf16.gmra.mxu0 %v2910
      %v3018 = vpop.f32.mrf.mxu0
      %v3019 = vadd.f32 0.0, %v3018
      %v3020 = vpop.f32.mrf.mxu0
      %v3021 = vpop.f32.mrf.mxu0
      %v3022 = vpop.f32.mrf.mxu0
      %3023 = vdwg.mxu0
      %v3024 = vadd.f32 %v1981, %v3011
      %v3025 = vadd.f32 %v1982, %v3014
      %v3026 = vadd.f32 %v1983, %v3019
      %v3027 = vlaneseq
      %v3028 = vshrl.u32 %v3027, 7
      %v3029 = vsub.s32 2, %v3028
      %v3030 = vrot.slane %v1985, %v3029
      %v3031 = vadd.f32 %v3024, %v3030
      %v3032 = vadd.f32 %v3025, %v3030
      %v3033 = vadd.f32 %v3026, %v3030
      %v3034 = vmul.f32 %v3031, %v417
      %v3035 = vmul.f32 %v3032, %v417
      %v3036 = vmul.f32 %v3033, %v417
      %3037 = vadd.xlane.f32.xlu0 %v3034
      %v3038 = vpop.xlane.xlu0 %3037
      %3039 = vadd.xlane.f32.xlu0 %v3035
      %v3040 = vpop.xlane.xlu0 %3039
      %3041 = vadd.xlane.f32.xlu0 %v3036
      %v3042 = vpop.xlane.xlu0 %3041
      %v3043 = vmul.f32 %v3038, 0.03125
      %v3044 = vmul.f32 %v3040, 0.03125
      %v3045 = vmul.f32 %v3042, 0.03125
      %v3046 = vsub.f32 %v3031, %v3043
      %v3047 = vsub.f32 %v3032, %v3044
      %v3048 = vsub.f32 %v3033, %v3045
      %v3049 = vmul.f32 %v3046, %v417
      %v3050 = vmul.f32 %v3047, %v417
      %v3051 = vmul.f32 %v3048, %v417
      %v3052 = vmul.f32 %v3049, %v3049
      %v3053 = vmul.f32 %v3050, %v3050
      %v3054 = vmul.f32 %v3051, %v3051
      %3055 = vadd.xlane.f32.xlu0 %v3052
      %v3056 = vpop.xlane.xlu0 %3055
      %3057 = vadd.xlane.f32.xlu0 %v3053
      %v3058 = vpop.xlane.xlu0 %3057
      %3059 = vadd.xlane.f32.xlu0 %v3054
      %v3060 = vpop.xlane.xlu0 %3059
      %v3061 = vmul.f32 %v3056, 0.03125
      %v3062 = vmul.f32 %v3058, 0.03125
      %v3063 = vmul.f32 %v3060, 0.03125
      %v3064 = vadd.f32 %v3061, 1e-05
      %v3065 = vadd.f32 %v3062, 1e-05
      %v3066 = vadd.f32 %v3063, 1e-05
      %v3067 = vrsqrt.pop %v3064
      %v3068 = vrsqrt.pop %v3065
      %v3069 = vrsqrt.pop %v3066
      %v3070 = vmul.f32 %v3049, %v3067
      %v3071 = vmul.f32 %v3050, %v3068
      %v3072 = vmul.f32 %v3051, %v3069
      %v3073 = vlaneseq
      %v3074 = vshrl.u32 %v3073, 7
      %v3075 = vsub.s32 3, %v3074
      %v3076 = vrot.slane %v1985, %v3075
      %v3077 = vmul.f32 %v3070, %v3076
      %v3078 = vmul.f32 %v3071, %v3076
      %v3079 = vmul.f32 %v3072, %v3076
      %v3080 = vlaneseq
      %v3081 = vshrl.u32 %v3080, 7
      %v3082 = vsub.s32 4, %v3081
      %v3083 = vrot.slane %v1985, %v3082
      %v3084 = vadd.f32 %v3077, %v3083
      %v3085 = vadd.f32 %v3078, %v3083
      %v3086 = vadd.f32 %v3079, %v3083
      %v3087 = vpack.c.bf16 %v3085, %v3084
      %v3088 = vpack.c.bf16 %v3086, %v3086
      %s3089 = scalar_lea.vmem %s7, 64
      %v3090 = vld [vmem:[%s3089] sm:$0xf]
      %v3091 = vld [vmem:[%s3089 + $0x4] sm:$0xf]
      %v3092 = vld [vmem:[%s3089 + $0x8] sm:$0xf]
      %v3093 = vld [vmem:[%s3089 + $0xc] sm:$0xf]
      %v3094 = vld [vmem:[%s3089 + $0x10] sm:$0xf]
      %v3095 = vld [vmem:[%s3089 + $0x14] sm:$0xf]
      %v3096 = vld [vmem:[%s3089 + $0x18] sm:$0xf]
      %v3097 = vld [vmem:[%s3089 + $0x1c] sm:$0xf]
      %v3098 = vld [vmem:[%s3089 + $0x20] sm:$0xf]
      %v3099 = vld [vmem:[%s3089 + $0x24] sm:$0xf]
      %v3100 = vld [vmem:[%s3089 + $0x28] sm:$0xf]
      %v3101 = vld [vmem:[%s3089 + $0x2c] sm:$0xf]
      %v3102 = vld [vmem:[%s3089 + $0x30] sm:$0xf]
      %v3103 = vld [vmem:[%s3089 + $0x34] sm:$0xf]
      %v3104 = vld [vmem:[%s3089 + $0x38] sm:$0xf]
      %v3105 = vld [vmem:[%s3089 + $0x3c] sm:$0xf]
      %s3106 = scalar_lea.vmem %s4, 1
      %v3107 = vld [vmem:[%s3106] sm:$0x1]
      %v3109 = vlaneseq
      %v3110 = vshrl.u32 %v3109, 7
      %v3111 = vsub.s32 0, %v3110
      %v3112 = vrot.slane %v3107, %v3111
      %v3130 = vunpack.c.l.b16 %v3090
      %v3131 = vunpack.c.l.b16 %v3091
      %v3132 = vunpack.c.l.b16 %v3092
      %v3133 = vunpack.c.l.b16 %v3093
      %v3134 = vunpack.c.l.b16 %v3094
      %v3135 = vunpack.c.l.b16 %v3095
      %v3136 = vunpack.c.l.b16 %v3096
      %v3137 = vunpack.c.l.b16 %v3097
      %v3138 = vunpack.c.l.b16 %v3098
      %v3139 = vunpack.c.l.b16 %v3099
      %v3140 = vunpack.c.l.b16 %v3100
      %v3141 = vunpack.c.l.b16 %v3101
      %v3142 = vunpack.c.l.b16 %v3102
      %v3143 = vunpack.c.l.b16 %v3103
      %v3144 = vunpack.c.l.b16 %v3104
      %v3145 = vunpack.c.l.b16 %v3105
      %v3146 = vpack.c.b16 %v3131, %v3130
      %v3147 = vpack.c.b16 %v3133, %v3132
      %v3148 = vpack.c.b16 %v3135, %v3134
      %v3149 = vpack.c.b16 %v3137, %v3136
      %v3150 = vpack.c.b16 %v3139, %v3138
      %v3151 = vpack.c.b16 %v3141, %v3140
      %v3152 = vpack.c.b16 %v3143, %v3142
      %v3153 = vpack.c.b16 %v3145, %v3144
      %3162 = vmatprep.subr.bf16.mxu0 0
      %3163 = vmatpush1.bf16.msra.mxu0 %v3153
      %3164 = vmatprep.subr.bf16.mxu0 0
      %3165 = vmatpush1.bf16.msra.mxu0 %v3152
      %3166 = vmatprep.subr.bf16.mxu0 0
      %3167 = vmatpush1.bf16.msra.mxu0 %v3151
      %3168 = vmatprep.subr.bf16.mxu0 0
      %3169 = vmatpush1.bf16.msra.mxu0 %v3150
      %3170 = vmatprep.subr.bf16.mxu0 0
      %3171 = vmatpush1.bf16.msra.mxu0 %v3149
      %3172 = vmatprep.subr.bf16.mxu0 0
      %3173 = vmatpush1.bf16.msra.mxu0 %v3148
      %3174 = vmatprep.subr.bf16.mxu0 0
      %3175 = vmatpush1.bf16.msra.mxu0 %v3147
      %3176 = vmatprep.subr.bf16.mxu0 0
      %3177 = vmatpush1.bf16.msra.mxu0 %v3146
      %3178 = vmatprep.subr.bf16.mxu0 0
      %3179 = vmatpush2.bf16.msra.mxu0 0
      %3180 = vmatprep.subr.bf16.mxu0 0
      %3181 = vmatpush2.bf16.msra.mxu0 0
      %3182 = vmatprep.subr.bf16.mxu0 0
      %3183 = vmatpush2.bf16.msra.mxu0 0
      %3184 = vmatprep.subr.bf16.mxu0 0
      %3185 = vmatpush2.bf16.msra.mxu0 0
      %3186 = vmatprep.subr.bf16.mxu0 0
      %3187 = vmatpush2.bf16.msra.mxu0 0
      %3188 = vmatprep.subr.bf16.mxu0 0
      %3189 = vmatpush2.bf16.msra.mxu0 0
      %3190 = vmatprep.subr.bf16.mxu0 0
      %3191 = vmatpush2.bf16.msra.mxu0 0
      %3192 = vmatprep.subr.bf16.mxu0 0
      %3193 = vmatpush2.bf16.msra.mxu0 0
      %3194 = vmatprep.mubr.bf16.mxu0 0
      %3195 = vmatmul.mubr.bf16.gmra.mxu0 %v3087
      %v3196 = vpop.f32.mrf.mxu0
      %v3197 = vadd.f32 %v3112, %v3196
      %v3198 = vpop.f32.mrf.mxu0
      %v3199 = vpop.f32.mrf.mxu0
      %v3200 = vadd.f32 %v3112, %v3199
      %v3201 = vpop.f32.mrf.mxu0
      %3202 = vmatprep.mubr.bf16.mxu0 0
      %3203 = vmatmul.mubr.bf16.gmra.mxu0 %v3088
      %v3204 = vpop.f32.mrf.mxu0
      %v3205 = vadd.f32 %v3112, %v3204
      %v3206 = vpop.f32.mrf.mxu0
      %v3207 = vpop.f32.mrf.mxu0
      %v3208 = vpop.f32.mrf.mxu0
      %3209 = vdwg.mxu0
      %v3210 = vmul.f32 %v3197, 0.70710677
      %v3211 = vmul.f32 %v3200, 0.70710677
      %v3212 = vmul.f32 %v3205, 0.70710677
      %v3213 = vand.u32 2147483647, %v3210
      %v3214 = vand.u32 2147483647, %v3211
      %v3215 = vand.u32 2147483647, %v3212
      %v3216 = vmul.f32 %v3213, 0.3275911
      %v3217 = vmul.f32 %v3214, 0.3275911
      %v3218 = vmul.f32 %v3215, 0.3275911
      %v3219 = vadd.f32 %v3216, 1.0
      %v3220 = vadd.f32 %v3217, 1.0
      %v3221 = vadd.f32 %v3218, 1.0
      %v3222 = vrcp.pop %v3219
      %v3223 = vrcp.pop %v3220
      %v3224 = vrcp.pop %v3221
      %v3225 = vmul.f32 %v3222, 1.0614054
      %v3226 = vmul.f32 %v3223, 1.0614054
      %v3227 = vmul.f32 %v3224, 1.0614054
      %v3228 = vadd.f32 %v3225, -1.4531521
      %v3229 = vadd.f32 %v3226, -1.4531521
      %v3230 = vadd.f32 %v3227, -1.4531521
      %v3231 = vmul.f32 %v3228, %v3222
      %v3232 = vmul.f32 %v3229, %v3223
      %v3233 = vmul.f32 %v3230, %v3224
      %v3234 = vadd.f32 %v3231, 1.4214138
      %v3235 = vadd.f32 %v3232, 1.4214138
      %v3236 = vadd.f32 %v3233, 1.4214138
      %v3237 = vmul.f32 %v3234, %v3222
      %v3238 = vmul.f32 %v3235, %v3223
      %v3239 = vmul.f32 %v3236, %v3224
      %v3240 = vadd.f32 %v3237, -0.28449672
      %v3241 = vadd.f32 %v3238, -0.28449672
      %v3242 = vadd.f32 %v3239, -0.28449672
      %v3243 = vmul.f32 %v3240, %v3222
      %v3244 = vmul.f32 %v3241, %v3223
      %v3245 = vmul.f32 %v3242, %v3224
      %v3246 = vadd.f32 %v3243, 0.2548296
      %v3247 = vadd.f32 %v3244, 0.2548296
      %v3248 = vadd.f32 %v3245, 0.2548296
      %v3249 = vmul.f32 %v3246, %v3222
      %v3250 = vmul.f32 %v3247, %v3223
      %v3251 = vmul.f32 %v3248, %v3224
      %v3252 = vsub.f32 0.0, %v3213
      %v3253 = vsub.f32 0.0, %v3214
      %v3254 = vsub.f32 0.0, %v3215
      %v3255 = vmul.f32 %v3252, %v3213
      %v3256 = vmul.f32 %v3253, %v3214
      %v3257 = vmul.f32 %v3254, %v3215
      %v3258 = vmul.f32 %v3255, 1.442695
      %v3259 = vpow.pop %v3258
      %v3260 = vmul.f32 %v3256, 1.442695
      %v3261 = vpow.pop %v3260
      %v3262 = vmul.f32 %v3257, 1.442695
      %v3263 = vpow.pop %v3262
      %v3264 = vmul.f32 %v3249, %v3259
      %v3265 = vmul.f32 %v3250, %v3261
      %v3266 = vmul.f32 %v3251, %v3263
      %v3267 = vsub.f32 1.0, %v3264
      %v3268 = vsub.f32 1.0, %v3265
      %v3269 = vsub.f32 1.0, %v3266
      %vm3270 = vcmp.ge.f32.partialorder %v3210, 0.0
      %vm3271 = vcmp.ge.f32.partialorder %v3211, 0.0
      %vm3272 = vcmp.ge.f32.partialorder %v3212, 0.0
      %v3273 = vsub.f32 0.0, %v3267
      %v3274 = vsub.f32 0.0, %v3268
      %v3275 = vsub.f32 0.0, %v3269
      %v3276 = vsel %vm3270, %v3267, %v3273
      %v3277 = vsel %vm3271, %v3268, %v3274
      %v3278 = vsel %vm3272, %v3269, %v3275
      %v3279 = vmul.f32 %v3197, 0.5
      %v3280 = vmul.f32 %v3200, 0.5
      %v3281 = vmul.f32 %v3205, 0.5
      %v3282 = vadd.f32 %v3276, 1.0
      %v3283 = vadd.f32 %v3277, 1.0
      %v3284 = vadd.f32 %v3278, 1.0
      %v3285 = vmul.f32 %v3279, %v3282
      %v3286 = vmul.f32 %v3280, %v3283
      %v3287 = vmul.f32 %v3281, %v3284
      %v3288 = vpack.c.bf16 %v3286, %v3285
      %v3289 = vpack.c.bf16 %v3287, %v3287
      %s3290 = scalar_lea.vmem %s8, 64
      %v3291 = vld [vmem:[%s3290] sm:$0xf]
      %v3292 = vld [vmem:[%s3290 + $0x4] sm:$0xf]
      %v3293 = vld [vmem:[%s3290 + $0x8] sm:$0xf]
      %v3294 = vld [vmem:[%s3290 + $0xc] sm:$0xf]
      %v3295 = vld [vmem:[%s3290 + $0x10] sm:$0xf]
      %v3296 = vld [vmem:[%s3290 + $0x14] sm:$0xf]
      %v3297 = vld [vmem:[%s3290 + $0x18] sm:$0xf]
      %v3298 = vld [vmem:[%s3290 + $0x1c] sm:$0xf]
      %v3299 = vld [vmem:[%s3290 + $0x20] sm:$0xf]
      %v3300 = vld [vmem:[%s3290 + $0x24] sm:$0xf]
      %v3301 = vld [vmem:[%s3290 + $0x28] sm:$0xf]
      %v3302 = vld [vmem:[%s3290 + $0x2c] sm:$0xf]
      %v3303 = vld [vmem:[%s3290 + $0x30] sm:$0xf]
      %v3304 = vld [vmem:[%s3290 + $0x34] sm:$0xf]
      %v3305 = vld [vmem:[%s3290 + $0x38] sm:$0xf]
      %v3306 = vld [vmem:[%s3290 + $0x3c] sm:$0xf]
      %v3323 = vunpack.c.l.b16 %v3291
      %v3324 = vunpack.c.l.b16 %v3292
      %v3325 = vunpack.c.l.b16 %v3293
      %v3326 = vunpack.c.l.b16 %v3294
      %v3327 = vunpack.c.l.b16 %v3295
      %v3328 = vunpack.c.l.b16 %v3296
      %v3329 = vunpack.c.l.b16 %v3297
      %v3330 = vunpack.c.l.b16 %v3298
      %v3331 = vunpack.c.l.b16 %v3299
      %v3332 = vunpack.c.l.b16 %v3300
      %v3333 = vunpack.c.l.b16 %v3301
      %v3334 = vunpack.c.l.b16 %v3302
      %v3335 = vunpack.c.l.b16 %v3303
      %v3336 = vunpack.c.l.b16 %v3304
      %v3337 = vunpack.c.l.b16 %v3305
      %v3338 = vunpack.c.l.b16 %v3306
      %v3339 = vpack.c.b16 %v3324, %v3323
      %v3340 = vpack.c.b16 %v3326, %v3325
      %v3341 = vpack.c.b16 %v3328, %v3327
      %v3342 = vpack.c.b16 %v3330, %v3329
      %v3343 = vpack.c.b16 %v3332, %v3331
      %v3344 = vpack.c.b16 %v3334, %v3333
      %v3345 = vpack.c.b16 %v3336, %v3335
      %v3346 = vpack.c.b16 %v3338, %v3337
      %3355 = vmatprep.subr.bf16.mxu0 0
      %3356 = vmatpush1.bf16.msra.mxu0 %v3346
      %3357 = vmatprep.subr.bf16.mxu0 0
      %3358 = vmatpush1.bf16.msra.mxu0 %v3345
      %3359 = vmatprep.subr.bf16.mxu0 0
      %3360 = vmatpush1.bf16.msra.mxu0 %v3344
      %3361 = vmatprep.subr.bf16.mxu0 0
      %3362 = vmatpush1.bf16.msra.mxu0 %v3343
      %3363 = vmatprep.subr.bf16.mxu0 0
      %3364 = vmatpush1.bf16.msra.mxu0 %v3342
      %3365 = vmatprep.subr.bf16.mxu0 0
      %3366 = vmatpush1.bf16.msra.mxu0 %v3341
      %3367 = vmatprep.subr.bf16.mxu0 0
      %3368 = vmatpush1.bf16.msra.mxu0 %v3340
      %3369 = vmatprep.subr.bf16.mxu0 0
      %3370 = vmatpush1.bf16.msra.mxu0 %v3339
      %3371 = vmatprep.subr.bf16.mxu0 0
      %3372 = vmatpush2.bf16.msra.mxu0 0
      %3373 = vmatprep.subr.bf16.mxu0 0
      %3374 = vmatpush2.bf16.msra.mxu0 0
      %3375 = vmatprep.subr.bf16.mxu0 0
      %3376 = vmatpush2.bf16.msra.mxu0 0
      %3377 = vmatprep.subr.bf16.mxu0 0
      %3378 = vmatpush2.bf16.msra.mxu0 0
      %3379 = vmatprep.subr.bf16.mxu0 0
      %3380 = vmatpush2.bf16.msra.mxu0 0
      %3381 = vmatprep.subr.bf16.mxu0 0
      %3382 = vmatpush2.bf16.msra.mxu0 0
      %3383 = vmatprep.subr.bf16.mxu0 0
      %3384 = vmatpush2.bf16.msra.mxu0 0
      %3385 = vmatprep.subr.bf16.mxu0 0
      %3386 = vmatpush2.bf16.msra.mxu0 0
      %3387 = vmatprep.mubr.bf16.mxu0 0
      %3388 = vmatmul.mubr.bf16.gmra.mxu0 %v3288
      %v3389 = vpop.f32.mrf.mxu0
      %v3390 = vadd.f32 0.0, %v3389
      %v3391 = vpop.f32.mrf.mxu0
      %v3392 = vpop.f32.mrf.mxu0
      %v3393 = vpop.f32.mrf.mxu0
      %3394 = vmatprep.mubr.bf16.mxu0 0
      %3395 = vmatmul.mubr.bf16.gmra.mxu0 %v3289
      %v3396 = vpop.f32.mrf.mxu0
      %v3397 = vpop.f32.mrf.mxu0
      %v3398 = vpop.f32.mrf.mxu0
      %v3399 = vpop.f32.mrf.mxu0
      %3400 = vdwg.mxu0
      %v3401 = vadd.f32 %v3031, %v3390
      %v3402 = vlaneseq
      %v3403 = vshrl.u32 %v3402, 7
      %v3404 = vsub.s32 5, %v3403
      %v3405 = vrot.slane %v1985, %v3404
      %v3406 = vadd.f32 %v3401, %v3405
      %v3407 = vld [vmem:[%s9] sm:$0x1]
      %v3408 = vld [vmem:[%s9 + $0x1] sm:$0x1]
      %v3409 = vmul.f32 %v3406, %v417
      %3410 = vadd.xlane.f32.xlu0 %v3409
      %v3411 = vpop.xlane.xlu0 %3410
      %v3412 = vmul.f32 %v3411, 0.03125
      %v3413 = vsub.f32 %v3406, %v3412
      %v3414 = vmul.f32 %v3413, %v417
      %v3415 = vmul.f32 %v3414, %v3414
      %3416 = vadd.xlane.f32.xlu0 %v3415
      %v3417 = vpop.xlane.xlu0 %3416
      %v3418 = vmul.f32 %v3417, 0.03125
      %v3419 = vadd.f32 %v3418, 1e-05
      %v3420 = vrsqrt.pop %v3419
      %v3421 = vmul.f32 %v3414, %v3420
      %v3422 = vlaneseq
      %v3423 = vshrl.u32 %v3422, 7
      %v3424 = vsub.s32 0, %v3423
      %v3425 = vrot.slane %v3407, %v3424
      %v3426 = vmul.f32 %v3421, %v3425
      %v3427 = vlaneseq
      %v3428 = vshrl.u32 %v3427, 7
      %v3429 = vsub.s32 0, %v3428
      %v3430 = vrot.slane %v3408, %v3429
      %v3431 = vadd.f32 %v3426, %v3430
      %v3432 = vpack.c.bf16 %v3431, %v3431
      %v3433 = vld [vmem:[%s10] sm:$0xf]
      %v3434 = vld [vmem:[%s10 + $0x4] sm:$0xf]
      %v3435 = vld [vmem:[%s10 + $0x8] sm:$0xf]
      %v3436 = vld [vmem:[%s10 + $0xc] sm:$0xf]
      %v3437 = vld [vmem:[%s10 + $0x10] sm:$0xf]
      %v3438 = vld [vmem:[%s10 + $0x14] sm:$0xf]
      %v3439 = vld [vmem:[%s10 + $0x18] sm:$0xf]
      %v3440 = vld [vmem:[%s10 + $0x1c] sm:$0xf]
      %v3441 = vld [vmem:[%s10 + $0x20] sm:$0xf]
      %v3442 = vld [vmem:[%s10 + $0x24] sm:$0xf]
      %v3443 = vld [vmem:[%s10 + $0x28] sm:$0xf]
      %v3444 = vld [vmem:[%s10 + $0x2c] sm:$0xf]
      %v3445 = vld [vmem:[%s10 + $0x30] sm:$0xf]
      %v3446 = vld [vmem:[%s10 + $0x34] sm:$0xf]
      %v3447 = vld [vmem:[%s10 + $0x38] sm:$0xf]
      %v3448 = vld [vmem:[%s10 + $0x3c] sm:$0xf]
      %v3449 = vld [vmem:[%s11] sm:$0x1]
      %v3451 = vlaneseq
      %v3452 = vshrl.u32 %v3451, 7
      %v3453 = vsub.s32 0, %v3452
      %v3454 = vrot.slane %v3449, %v3453
      %v3472 = vunpack.c.l.b16 %v3433
      %v3473 = vunpack.c.l.b16 %v3434
      %v3474 = vunpack.c.l.b16 %v3435
      %v3475 = vunpack.c.l.b16 %v3436
      %v3476 = vunpack.c.l.b16 %v3437
      %v3477 = vunpack.c.l.b16 %v3438
      %v3478 = vunpack.c.l.b16 %v3439
      %v3479 = vunpack.c.l.b16 %v3440
      %v3480 = vunpack.c.l.b16 %v3441
      %v3481 = vunpack.c.l.b16 %v3442
      %v3482 = vunpack.c.l.b16 %v3443
      %v3483 = vunpack.c.l.b16 %v3444
      %v3484 = vunpack.c.l.b16 %v3445
      %v3485 = vunpack.c.l.b16 %v3446
      %v3486 = vunpack.c.l.b16 %v3447
      %v3487 = vunpack.c.l.b16 %v3448
      %v3488 = vpack.c.b16 %v3473, %v3472
      %v3489 = vpack.c.b16 %v3475, %v3474
      %v3490 = vpack.c.b16 %v3477, %v3476
      %v3491 = vpack.c.b16 %v3479, %v3478
      %v3492 = vpack.c.b16 %v3481, %v3480
      %v3493 = vpack.c.b16 %v3483, %v3482
      %v3494 = vpack.c.b16 %v3485, %v3484
      %v3495 = vpack.c.b16 %v3487, %v3486
      %3504 = vmatprep.subr.bf16.mxu0 0
      %3505 = vmatpush1.bf16.msra.mxu0 %v3495
      %3506 = vmatprep.subr.bf16.mxu0 0
      %3507 = vmatpush1.bf16.msra.mxu0 %v3494
      %3508 = vmatprep.subr.bf16.mxu0 0
      %3509 = vmatpush1.bf16.msra.mxu0 %v3493
      %3510 = vmatprep.subr.bf16.mxu0 0
      %3511 = vmatpush1.bf16.msra.mxu0 %v3492
      %3512 = vmatprep.subr.bf16.mxu0 0
      %3513 = vmatpush1.bf16.msra.mxu0 %v3491
      %3514 = vmatprep.subr.bf16.mxu0 0
      %3515 = vmatpush1.bf16.msra.mxu0 %v3490
      %3516 = vmatprep.subr.bf16.mxu0 0
      %3517 = vmatpush1.bf16.msra.mxu0 %v3489
      %3518 = vmatprep.subr.bf16.mxu0 0
      %3519 = vmatpush1.bf16.msra.mxu0 %v3488
      %3520 = vmatprep.subr.bf16.mxu0 0
      %3521 = vmatpush2.bf16.msra.mxu0 0
      %3522 = vmatprep.subr.bf16.mxu0 0
      %3523 = vmatpush2.bf16.msra.mxu0 0
      %3524 = vmatprep.subr.bf16.mxu0 0
      %3525 = vmatpush2.bf16.msra.mxu0 0
      %3526 = vmatprep.subr.bf16.mxu0 0
      %3527 = vmatpush2.bf16.msra.mxu0 0
      %3528 = vmatprep.subr.bf16.mxu0 0
      %3529 = vmatpush2.bf16.msra.mxu0 0
      %3530 = vmatprep.subr.bf16.mxu0 0
      %3531 = vmatpush2.bf16.msra.mxu0 0
      %3532 = vmatprep.subr.bf16.mxu0 0
      %3533 = vmatpush2.bf16.msra.mxu0 0
      %3534 = vmatprep.subr.bf16.mxu0 0
      %3535 = vmatpush2.bf16.msra.mxu0 0
      %3536 = vmatprep.mubr.bf16.mxu0 0
      %3537 = vmatmul.mubr.bf16.gmra.mxu0 %v3432
      %v3538 = vpop.f32.mrf.mxu0
      %v3539 = vadd.f32 %v3454, %v3538
      %v3540 = vpop.f32.mrf.mxu0
      %v3541 = vpop.f32.mrf.mxu0
      %v3542 = vpop.f32.mrf.mxu0
      %3543 = vdwg.mxu0
      %3544 = vst [vmem:[%s411] sm:$0xff] %v3539
      %p3545 = scmp.lt.s32.totalorder %s23, 1
      %s3546 = scalar_select %p3545, %s23, 1
      %s3547 = smul.addr %s3546, 8
      %s3548 = scalar_lea.vmem %s12, %s3547
      // Predicated region
      $region69: #{_lambda_.1} parent=67 // pred_check
        %p3549 = pneg %p298
      $region70: #{_lambda_.1} parent=67 // pred_check_branch
        %3551 = sbr.rel (%p3549) target = $region72
      $region71: #{_lambda_.1} parent=67 // pred_region
        _
      $region72: #{_lambda_.1} parent=67 // pred_fallthru
        _
    $region68: #{_lambda_.1} parent=5 // pred_fallthru
      _
    %p3552 = scmp.le.s32.totalorder 2, %s18
    // Predicated region
    $region73: #{_lambda_.1} parent=5 // pred_check
      %p3553 = pneg %p3552
    $region74: #{_lambda_.1} parent=5 // pred_check_branch
      %3555 = sbr.rel (%p3553) target = $region76
    $region75: #{_lambda_.1} parent=5 // pred_region
      %s3556 = ssub.s32 %s18, 2
      // Predicated region
      $region77: #{_lambda_.1} parent=75 // pred_check
        %p3557 = pneg %p304
      $region78: #{_lambda_.1} parent=75 // pred_check_branch
        %3559 = sbr.rel (%p3557) target = $region80
      $region79: #{_lambda_.1} parent=75 // pred_region
        %p3560 = scmp.lt.s32.totalorder %s24, 1
        %s3561 = scalar_select %p3560, %s24, 1
        %s3562 = smul.addr %s3561, 8
        %s3563 = scalar_lea.vmem %s12, %s3562
      $region80: #{_lambda_.1} parent=75 // pred_fallthru
        _
    $region76: #{_lambda_.1} parent=5 // pred_fallthru
      _
  $region6: #{_lambda_.1} parent=0 // loop_footer
    %s22 = sadd.s32 1, %s18
  $region7: #{_lambda_.1} parent=0 // loop_footer_branch
    %17 = sbr.rel target = $region3
  $region8: #{_lambda_.1} parent=0 // loop_exit
    _

</llo_original>
